<compile_context>
chip_gen: v7x
topology: tpu7x:2x2x1
jax: 0.10.0
libtpu: 0.0.40
codegen_flags: <defaults>
</compile_context>

<pallas_src>
import jax
import jax.numpy as jnp
from jax import lax
from jax.experimental import pallas as pl
from jax.experimental.pallas import tpu as pltpu

BN_EPS = 1e-5


def _features_head_kernel(x_ref, w1_ref, b1_ref, gamma_ref, beta_ref,
                          w2_ref, b2_ref, out_ref, xp_ref, acc_ref):
    """Grid axis 0 tiles the hidden dim Hd (exact for BatchNorm: stats are per-feature
    over the batch rows N, which is never tiled).

    x_ref:          [H, N, C]   f32   feature map, pool axis H leading, lane axis = C
    w1_ref:         [C, tHd]    bf16  Linear1 weight tile
    b1/gamma/beta:  [1, tHd]    f32
    w2_ref:         [tHd, P]    bf16  Linear2 weight tile
    b2_ref:         [1, P]      f32
    out_ref:        [N, P]      f32   lane-dense (P = 128)
    xp_ref:         [N, C]      bf16  scratch: pooled + casted input (computed once)
    acc_ref:        [N, P]      f32   scratch: Linear2 partial sums across Hd tiles
    """
    j = pl.program_id(0)

    @pl.when(j == 0)
    def _():
        # AdaptiveAvgPool2d((None, 1)): mean over H.  H is the leading axis so the
        # pool is a short unrolled chain of [N, C] VPU adds in f32 (matches PyTorch
        # pool numerics), then one cast to the MXU dtype.
        H = x_ref.shape[0]
        pooled = x_ref[0]
        for hh in range(1, H):
            pooled = pooled + x_ref[hh]
        xp_ref[...] = (pooled * (1.0 / H)).astype(xp_ref.dtype)
        acc_ref[...] = jnp.zeros_like(acc_ref)

    # Linear 1 (this Hd tile): bf16 MXU operands, f32 accumulation.
    h = jnp.dot(xp_ref[...], w1_ref[...],
                preferred_element_type=jnp.float32) + b1_ref[...]

    # BatchNorm1d (training mode): biased per-feature stats over the N batch rows.
    # Exact under Hd tiling (stats are per-feature).  Two-pass centered form kept
    # deliberately (see header).
    mean = jnp.mean(h, axis=0, keepdims=True)
    centered = h - mean
    var = jnp.mean(centered * centered, axis=0, keepdims=True)
    h = centered * lax.rsqrt(var + BN_EPS) * gamma_ref[...] + beta_ref[...]

    # ReLU (f32 on the VPU).
    h = jnp.maximum(h, 0.0)

    # Linear 2 partial sum over this Hd tile (bf16 MXU operands, f32 accumulation).
    acc_ref[...] += jnp.dot(h.astype(w2_ref.dtype), w2_ref[...],
                            preferred_element_type=jnp.float32)

    @pl.when(j == pl.num_programs(0) - 1)
    def _():
        out_ref[...] = (acc_ref[...] + b2_ref[...]).astype(out_ref.dtype)


def _vmem_bytes_estimate(N, C, H, hd_tile, P, wbytes):
    """Rough per-step VMEM footprint: double-buffered inputs/outputs + scratch +
    the [N, hd_tile] f32 intermediates (h / centered / temporaries)."""
    in_bytes = (H * N * C * 4 + C * hd_tile * wbytes + 3 * hd_tile * 4
                + hd_tile * P * wbytes + P * 4)
    out_bytes = N * P * 4
    scratch = N * P * 4 + N * C * wbytes
    interm = 3 * N * hd_tile * 4
    return 2 * (in_bytes + out_bytes) + scratch + interm


def prepare_params(params, mxu_dtype=jnp.bfloat16):
    """One-time weight preparation: persist MXU-dtype (bf16) copies of w1/w2 so the
    per-call path pays no cast / weight re-materialization.  Biases and BN affine
    parameters stay f32 (all VPU-side math is f32)."""
    out = dict(params)
    out["w1"] = params["w1"].astype(mxu_dtype)
    out["w2"] = params["w2"].astype(mxu_dtype)
    return out


def features_model_forward(feat_nchw, params, *, vmem_budget_bytes=20 * 1024 * 1024):
    """FeaturesModel.forward (Trans='None', Seq='None', FinalLayer=True, is_train=True).

    feat_nchw: [B, C, H, W] feature map (output of FeatureExtraction), NCHW, f32.
    params:    from prepare_params() -- w1/w2 already in the MXU dtype.
    Returns:   [B*W, projection_size]  (same row ordering as torch .view(-1, C)).
    """
    w1, b1, gamma, beta, w2, b2 = (params[k] for k in
                                   ("w1", "b1", "gamma", "beta", "w2", "b2"))
    B, C, H, W = feat_nchw.shape
    Hd = w1.shape[1]
    P = w2.shape[1]
    N = B * W
    wbytes = jnp.dtype(w1.dtype).itemsize

    # torch: permute(0,3,1,2) -> [B, W, C, H]; pool over H; squeeze; .view(-1, C).
    # Present the map as [H, N, C] (pool axis leading); the pool itself happens
    # in-kernel in f32, so w1 stays at its original [C, Hd] size (no repeat(., H)).
    x = jnp.transpose(feat_nchw, (2, 0, 3, 1)).reshape(H, N, C)

    # Hd tiling: exact for BN; only grows beyond 1 tile when weights + the [N, Hd]
    # f32 intermediates would not fit comfortably in VMEM (v7x: 64 MiB physical,
    # 32 MiB scoped default).  The batch axis N is never tiled (BN exactness).
    hd_tiles = 1
    for t in (1, 2, 4, 8, 16, 32):
        if Hd % t == 0 and (Hd // t) % 128 == 0:
            hd_tiles = t
            if _vmem_bytes_estimate(N, C, H, Hd // t, P, wbytes) <= vmem_budget_bytes:
                break
    hd_tile = Hd // hd_tiles

    flops = 2 * N * C * Hd + 2 * N * Hd * P + 8 * N * Hd
    bytes_accessed = (H * N * C * 4 + C * Hd * wbytes + Hd * P * wbytes
                      + 3 * Hd * 4 + P * 4 + N * P * 4)

    grid_spec = pltpu.PrefetchScalarGridSpec(
        num_scalar_prefetch=0,
        grid=(hd_tiles,),
        in_specs=[
            pl.BlockSpec((H, N, C), lambda j: (0, 0, 0)),    # x (same block every step)
            pl.BlockSpec((C, hd_tile), lambda j: (0, j)),    # w1
            pl.BlockSpec((1, hd_tile), lambda j: (0, j)),    # b1
            pl.BlockSpec((1, hd_tile), lambda j: (0, j)),    # gamma
            pl.BlockSpec((1, hd_tile), lambda j: (0, j)),    # beta
            pl.BlockSpec((hd_tile, P), lambda j: (j, 0)),    # w2
            pl.BlockSpec((1, P), lambda j: (0, 0)),          # b2
        ],
        out_specs=pl.BlockSpec((N, P), lambda j: (0, 0)),
        scratch_shapes=[
            pltpu.VMEM((N, C), w1.dtype),       # pooled + casted x
            pltpu.VMEM((N, P), jnp.float32),    # Linear2 partial-sum accumulator
        ],
    )

    return pl.pallas_call(
        _features_head_kernel,
        out_shape=jax.ShapeDtypeStruct((N, P), jnp.float32),
        grid_spec=grid_spec,
        compiler_params=pltpu.CompilerParams(
            dimension_semantics=("arbitrary",),
            vmem_limit_bytes=32 * 1024 * 1024,
        ),
        # Advisory: lets XLA overlap this (weight-DMA-bound) head with preceding work.
        cost_estimate=pl.CostEstimate(flops=flops, transcendentals=Hd,
                                      bytes_accessed=bytes_accessed),
    )(x, w1, b1, gamma, beta, w2, b2)


def features_model_reference_matched(feat_nchw, prepared_params):
    """Pure-JAX reference with the SAME numerics as the kernel (f32 pool, bf16 MXU
    operands, f32 accumulation / BN)."""
    w1, b1, gamma, beta, w2, b2 = (prepared_params[k] for k in
                                   ("w1", "b1", "gamma", "beta", "w2", "b2"))
    B, C, H, W = feat_nchw.shape
    v = jnp.mean(jnp.transpose(feat_nchw, (0, 3, 1, 2)), axis=-1)   # f32 pool over H
    v = v.reshape(-1, C)
    h = jnp.dot(v.astype(w1.dtype), w1, preferred_element_type=jnp.float32) + b1
    mean = jnp.mean(h, axis=0, keepdims=True)
    var = jnp.mean((h - mean) ** 2, axis=0, keepdims=True)
    h = (h - mean) * lax.rsqrt(var + BN_EPS) * gamma + beta
    h = jnp.maximum(h, 0.0)
    return jnp.dot(h.astype(w2.dtype), w2, preferred_element_type=jnp.float32) + b2


def features_model_reference_f32(feat_nchw, params_f32):
    """Pure-f32 JAX reference mirroring the PyTorch forward literally."""
    w1, b1, gamma, beta, w2, b2 = (params_f32[k] for k in
                                   ("w1", "b1", "gamma", "beta", "w2", "b2"))
    B, C, H, W = feat_nchw.shape
    v = jnp.transpose(feat_nchw, (0, 3, 1, 2))        # permute(0,3,1,2) -> [B, W, C, H]
    v = jnp.mean(v, axis=-1)                          # AdaptiveAvgPool2d((None,1)) + squeeze(3)
    v = v.reshape(-1, C)                              # .view(-1, shape[2])
    h = v @ w1 + b1
    mean = jnp.mean(h, axis=0, keepdims=True)
    var = jnp.mean((h - mean) ** 2, axis=0, keepdims=True)
    h = (h - mean) / jnp.sqrt(var + BN_EPS) * gamma + beta
    h = jnp.maximum(h, 0.0)
    return h @ w2 + b2


def init_params(key, dim, projection_size, hidden_size=4096):
    """Deterministic parameter init for MLP(dim, projection_size, hidden_size=4096)."""
    k1, k2, k3, k4 = jax.random.split(key, 4)
    return {
        "w1": jax.random.normal(k1, (dim, hidden_size), jnp.float32) * 0.02,
        "b1": jax.random.normal(k2, (1, hidden_size), jnp.float32) * 0.01,
        "gamma": jnp.ones((1, hidden_size), jnp.float32),    # BatchNorm1d default init
        "beta": jnp.zeros((1, hidden_size), jnp.float32),
        "w2": jax.random.normal(k3, (hidden_size, projection_size), jnp.float32) * 0.02,
        "b2": jax.random.normal(k4, (1, projection_size), jnp.float32) * 0.01,
    }


if __name__ == "__main__":
    # Small shapes consistent with the module:
    #   batch B=2, output_channel C=32, feature-map H=4, W=16 (W is the "sequence" axis)
    #   MLP: dim=32 -> hidden 4096 (module default) -> final_feature=128
    B, C, H, W = 2, 32, 4, 16
    HIDDEN = 4096
    FINAL_FEATURE = 128

    key = jax.random.PRNGKey(0)
    k_x, k_p = jax.random.split(key)
    feat_nchw = jax.random.normal(k_x, (B, C, H, W), jnp.float32)     # NCHW feature map
    params_f32 = init_params(k_p, dim=C, projection_size=FINAL_FEATURE,
                             hidden_size=HIDDEN)

    # One-time weight preparation (bf16 copies persist across calls; no per-call cast).
    params = prepare_params(params_f32)

    fwd = jax.jit(features_model_forward)
    out = jax.block_until_ready(fwd(feat_nchw, params))

    ref_matched = features_model_reference_matched(feat_nchw, params)
    ref_f32 = features_model_reference_f32(feat_nchw, params_f32)

    assert out.shape == (B * W, FINAL_FEATURE)
    assert jnp.allclose(out, ref_matched, atol=2e-2, rtol=2e-2), \
        "mismatch vs numerics-matched reference"
    assert jnp.allclose(out, ref_f32, atol=5e-2, rtol=5e-2), \
        "mismatch vs f32 PyTorch-semantics reference"

    print("KERNEL_OK")
</pallas_src>

<mosaic_0001>
module attributes {stable_mosaic.version = 11 : i64} {
  func.func @_features_head_kernel(%arg0: i32, %arg1: memref<4x32x32xf32, #tpu.memory_space<vmem>>, %arg2: memref<32x4096xbf16, #tpu.memory_space<vmem>>, %arg3: memref<1x4096xf32, #tpu.memory_space<vmem>>, %arg4: memref<1x4096xf32, #tpu.memory_space<vmem>>, %arg5: memref<1x4096xf32, #tpu.memory_space<vmem>>, %arg6: memref<4096x128xbf16, #tpu.memory_space<vmem>>, %arg7: memref<1x128xf32, #tpu.memory_space<vmem>>, %arg8: memref<32x128xf32, #tpu.memory_space<vmem>>, %arg9: memref<32x32xbf16, #tpu.memory_space<vmem>>, %arg10: memref<32x128xf32, #tpu.memory_space<vmem>>) attributes {dimension_semantics = [#tpu.dimension_semantics<arbitrary>], iteration_bounds = array<i64: 1>, scalar_prefetch = 0 : i64, scratch_operands = 2 : i64, tpu.core_type = #tpu.core_type<tc>, window_params = [{pipeline_mode = #tpu.pipeline_mode<synchronous>, transform_indices = @transform_0, window_bounds = array<i64: 4, 32, 32>}, {transform_indices = @transform_1, window_bounds = array<i64: 32, 4096>}, {transform_indices = @transform_2, window_bounds = array<i64: 1, 4096>}, {transform_indices = @transform_3, window_bounds = array<i64: 1, 4096>}, {transform_indices = @transform_4, window_bounds = array<i64: 1, 4096>}, {transform_indices = @transform_5, window_bounds = array<i64: 4096, 128>}, {pipeline_mode = #tpu.pipeline_mode<synchronous>, transform_indices = @transform_6, window_bounds = array<i64: 1, 128>}, {pipeline_mode = #tpu.pipeline_mode<synchronous>, transform_indices = @transform_7, window_bounds = array<i64: 32, 128>}]} {
    %c0_i32 = arith.constant 0 : i32
    %0 = arith.cmpi eq, %arg0, %c0_i32 : i32
    %1 = arith.extui %0 : i1 to i32
    %c0_i32_0 = arith.constant 0 : i32
    %2 = arith.cmpi ne, %1, %c0_i32_0 : i32
    scf.if %2 {
      %c0_25 = arith.constant 0 : index
      %c0_26 = arith.constant 0 : index
      %c0_27 = arith.constant 0 : index
      %42 = vector.load %arg1[%c0_25, %c0_26, %c0_27] : memref<4x32x32xf32, #tpu.memory_space<vmem>>, vector<1x32x32xf32>
      %43 = vector.shape_cast %42 : vector<1x32x32xf32> to vector<32x32xf32>
      %c1 = arith.constant 1 : index
      %c0_28 = arith.constant 0 : index
      %c0_29 = arith.constant 0 : index
      %44 = vector.load %arg1[%c1, %c0_28, %c0_29] : memref<4x32x32xf32, #tpu.memory_space<vmem>>, vector<1x32x32xf32>
      %45 = vector.shape_cast %44 : vector<1x32x32xf32> to vector<32x32xf32>
      %46 = arith.addf %43, %45 : vector<32x32xf32>
      %c2 = arith.constant 2 : index
      %c0_30 = arith.constant 0 : index
      %c0_31 = arith.constant 0 : index
      %47 = vector.load %arg1[%c2, %c0_30, %c0_31] : memref<4x32x32xf32, #tpu.memory_space<vmem>>, vector<1x32x32xf32>
      %48 = vector.shape_cast %47 : vector<1x32x32xf32> to vector<32x32xf32>
      %49 = arith.addf %46, %48 : vector<32x32xf32>
      %c3 = arith.constant 3 : index
      %c0_32 = arith.constant 0 : index
      %c0_33 = arith.constant 0 : index
      %50 = vector.load %arg1[%c3, %c0_32, %c0_33] : memref<4x32x32xf32, #tpu.memory_space<vmem>>, vector<1x32x32xf32>
      %51 = vector.shape_cast %50 : vector<1x32x32xf32> to vector<32x32xf32>
      %52 = arith.addf %49, %51 : vector<32x32xf32>
      %cst_34 = arith.constant 2.500000e-01 : f32
      %53 = vector.broadcast %cst_34 : f32 to vector<32x32xf32>
      %54 = arith.mulf %52, %53 : vector<32x32xf32>
      %55 = arith.truncf %54 : vector<32x32xf32> to vector<32x32xbf16>
      %c0_35 = arith.constant 0 : index
      %c0_36 = arith.constant 0 : index
      %56 = vector.load %arg9[%c0_35, %c0_36] : memref<32x32xbf16, #tpu.memory_space<vmem>>, vector<32x32xbf16>
      tpu.vector_store %arg9[%c0_35, %c0_36], %55 {strides = array<i32>} : memref<32x32xbf16, #tpu.memory_space<vmem>>, vector<32x32xbf16>,
      %cst_37 = arith.constant 0.000000e+00 : f32
      %57 = vector.broadcast %cst_37 : f32 to vector<32x128xf32>
      %c0_38 = arith.constant 0 : index
      %c0_39 = arith.constant 0 : index
      %58 = vector.load %arg10[%c0_38, %c0_39] : memref<32x128xf32, #tpu.memory_space<vmem>>, vector<32x128xf32>
      tpu.vector_store %arg10[%c0_38, %c0_39], %57 {strides = array<i32>} : memref<32x128xf32, #tpu.memory_space<vmem>>, vector<32x128xf32>,
    } else {
    }
    %c0 = arith.constant 0 : index
    %c0_1 = arith.constant 0 : index
    %3 = vector.load %arg9[%c0, %c0_1] : memref<32x32xbf16, #tpu.memory_space<vmem>>, vector<32x32xbf16>
    %c0_2 = arith.constant 0 : index
    %c0_3 = arith.constant 0 : index
    %4 = vector.load %arg2[%c0_2, %c0_3] : memref<32x4096xbf16, #tpu.memory_space<vmem>>, vector<32x4096xbf16>
    %cst = arith.constant dense<0.000000e+00> : vector<32x4096xf32>
    %5 = tpu.matmul %3, %4, %cst {dimension_numbers = #tpu.dot_dimension_numbers<[1], [0], [0], [1], [0, 0, 1, 1], [], []>} : vector<32x32xbf16>, vector<32x4096xbf16>, vector<32x4096xf32> -> vector<32x4096xf32>
    %c0_4 = arith.constant 0 : index
    %c0_5 = arith.constant 0 : index
    %6 = vector.load %arg3[%c0_4, %c0_5] : memref<1x4096xf32, #tpu.memory_space<vmem>>, vector<1x4096xf32>
    %7 = vector.broadcast %6 : vector<1x4096xf32> to vector<32x4096xf32>
    %8 = arith.addf %5, %7 : vector<32x4096xf32>
    %cst_6 = arith.constant dense<0.000000e+00> : vector<4096xf32>
    %9 = vector.multi_reduction <add>, %8, %cst_6 [0] : vector<32x4096xf32> to vector<4096xf32>
    %10 = vector.shape_cast %9 : vector<4096xf32> to vector<1x4096xf32>
    %cst_7 = arith.constant 3.200000e+01 : f32
    %11 = vector.broadcast %cst_7 : f32 to vector<1x4096xf32>
    %12 = arith.divf %10, %11 : vector<1x4096xf32>
    %13 = vector.broadcast %12 : vector<1x4096xf32> to vector<32x4096xf32>
    %14 = arith.subf %8, %13 : vector<32x4096xf32>
    %15 = arith.mulf %14, %14 : vector<32x4096xf32>
    %cst_8 = arith.constant dense<0.000000e+00> : vector<4096xf32>
    %16 = vector.multi_reduction <add>, %15, %cst_8 [0] : vector<32x4096xf32> to vector<4096xf32>
    %17 = vector.shape_cast %16 : vector<4096xf32> to vector<1x4096xf32>
    %cst_9 = arith.constant 3.200000e+01 : f32
    %18 = vector.broadcast %cst_9 : f32 to vector<1x4096xf32>
    %19 = arith.divf %17, %18 : vector<1x4096xf32>
    %cst_10 = arith.constant 9.99999974E-6 : f32
    %20 = vector.broadcast %cst_10 : f32 to vector<1x4096xf32>
    %21 = arith.addf %19, %20 : vector<1x4096xf32>
    %22 = math.rsqrt %21 : vector<1x4096xf32>
    %23 = vector.broadcast %22 : vector<1x4096xf32> to vector<32x4096xf32>
    %24 = arith.mulf %14, %23 : vector<32x4096xf32>
    %c0_11 = arith.constant 0 : index
    %c0_12 = arith.constant 0 : index
    %25 = vector.load %arg4[%c0_11, %c0_12] : memref<1x4096xf32, #tpu.memory_space<vmem>>, vector<1x4096xf32>
    %26 = vector.broadcast %25 : vector<1x4096xf32> to vector<32x4096xf32>
    %27 = arith.mulf %24, %26 : vector<32x4096xf32>
    %c0_13 = arith.constant 0 : index
    %c0_14 = arith.constant 0 : index
    %28 = vector.load %arg5[%c0_13, %c0_14] : memref<1x4096xf32, #tpu.memory_space<vmem>>, vector<1x4096xf32>
    %29 = vector.broadcast %28 : vector<1x4096xf32> to vector<32x4096xf32>
    %30 = arith.addf %27, %29 : vector<32x4096xf32>
    %cst_15 = arith.constant 0.000000e+00 : f32
    %31 = vector.broadcast %cst_15 : f32 to vector<32x4096xf32>
    %32 = arith.maximumf %30, %31 : vector<32x4096xf32>
    %c0_16 = arith.constant 0 : index
    %c0_17 = arith.constant 0 : index
    %33 = vector.load %arg10[%c0_16, %c0_17] : memref<32x128xf32, #tpu.memory_space<vmem>>, vector<32x128xf32>
    %34 = arith.truncf %32 : vector<32x4096xf32> to vector<32x4096xbf16>
    %c0_18 = arith.constant 0 : index
    %c0_19 = arith.constant 0 : index
    %35 = vector.load %arg6[%c0_18, %c0_19] : memref<4096x128xbf16, #tpu.memory_space<vmem>>, vector<4096x128xbf16>
    %cst_20 = arith.constant dense<0.000000e+00> : vector<32x128xf32>
    %36 = tpu.matmul %34, %35, %cst_20 {dimension_numbers = #tpu.dot_dimension_numbers<[1], [0], [0], [1], [0, 0, 1, 1], [], []>} : vector<32x4096xbf16>, vector<4096x128xbf16>, vector<32x128xf32> -> vector<32x128xf32>
    %37 = arith.addf %33, %36 : vector<32x128xf32>
    %c0_21 = arith.constant 0 : index
    %c0_22 = arith.constant 0 : index
    %38 = vector.load %arg10[%c0_21, %c0_22] : memref<32x128xf32, #tpu.memory_space<vmem>>, vector<32x128xf32>
    tpu.vector_store %arg10[%c0_21, %c0_22], %37 {strides = array<i32>} : memref<32x128xf32, #tpu.memory_space<vmem>>, vector<32x128xf32>,
    %c0_i32_23 = arith.constant 0 : i32
    %39 = arith.cmpi eq, %arg0, %c0_i32_23 : i32
    %40 = arith.extui %39 : i1 to i32
    %c0_i32_24 = arith.constant 0 : i32
    %41 = arith.cmpi ne, %40, %c0_i32_24 : i32
    scf.if %41 {
      %c0_25 = arith.constant 0 : index
      %c0_26 = arith.constant 0 : index
      %42 = vector.load %arg10[%c0_25, %c0_26] : memref<32x128xf32, #tpu.memory_space<vmem>>, vector<32x128xf32>
      %c0_27 = arith.constant 0 : index
      %c0_28 = arith.constant 0 : index
      %43 = vector.load %arg7[%c0_27, %c0_28] : memref<1x128xf32, #tpu.memory_space<vmem>>, vector<1x128xf32>
      %44 = vector.broadcast %43 : vector<1x128xf32> to vector<32x128xf32>
      %45 = arith.addf %42, %44 : vector<32x128xf32>
      %c0_29 = arith.constant 0 : index
      %c0_30 = arith.constant 0 : index
      %46 = vector.load %arg8[%c0_29, %c0_30] : memref<32x128xf32, #tpu.memory_space<vmem>>, vector<32x128xf32>
      tpu.vector_store %arg8[%c0_29, %c0_30], %45 {strides = array<i32>} : memref<32x128xf32, #tpu.memory_space<vmem>>, vector<32x128xf32>,
    } else {
    }
    return
  }
  func.func @transform_0(%arg0: i32) -> (i32, i32, i32) {
    %c0_i32 = arith.constant 0 : i32
    %c0_i32_0 = arith.constant 0 : i32
    %c0_i32_1 = arith.constant 0 : i32
    %c0_i32_2 = arith.constant 0 : i32
    return %c0_i32, %c0_i32_0, %c0_i32_1 : i32, i32, i32
  }
  func.func @transform_1(%arg0: i32) -> (i32, i32) {
    %c0_i32 = arith.constant 0 : i32
    %c0_i32_0 = arith.constant 0 : i32
    return %c0_i32, %arg0 : i32, i32
  }
  func.func @transform_2(%arg0: i32) -> (i32, i32) {
    %c0_i32 = arith.constant 0 : i32
    %c0_i32_0 = arith.constant 0 : i32
    return %c0_i32, %arg0 : i32, i32
  }
  func.func @transform_3(%arg0: i32) -> (i32, i32) {
    %c0_i32 = arith.constant 0 : i32
    %c0_i32_0 = arith.constant 0 : i32
    return %c0_i32, %arg0 : i32, i32
  }
  func.func @transform_4(%arg0: i32) -> (i32, i32) {
    %c0_i32 = arith.constant 0 : i32
    %c0_i32_0 = arith.constant 0 : i32
    return %c0_i32, %arg0 : i32, i32
  }
  func.func @transform_5(%arg0: i32) -> (i32, i32) {
    %c0_i32 = arith.constant 0 : i32
    %c0_i32_0 = arith.constant 0 : i32
    return %arg0, %c0_i32 : i32, i32
  }
  func.func @transform_6(%arg0: i32) -> (i32, i32) {
    %c0_i32 = arith.constant 0 : i32
    %c0_i32_0 = arith.constant 0 : i32
    %c0_i32_1 = arith.constant 0 : i32
    return %c0_i32, %c0_i32_0 : i32, i32
  }
  func.func @transform_7(%arg0: i32) -> (i32, i32) {
    %c0_i32 = arith.constant 0 : i32
    %c0_i32_0 = arith.constant 0 : i32
    %c0_i32_1 = arith.constant 0 : i32
    return %c0_i32, %c0_i32_0 : i32, i32
  }
}

</mosaic_0001>

<llo_original>
// kernel: features_model_forward.1
$region0: #{features_model_forward.1}
  #allocation0 [shape = 'u32[]', space=smem, size = 0x4, offset = 0x4, fixed_abs, tag = 'smem constant byte address 0x4 - core index']
  #allocation1 [shape = 'u32[144,128]{1,0:T(1,128)}', space=vmem, size = 0x12000, scoped, tag = 'internal scratch']
  #allocation2 [shape = 'bf16[32,32]{1,0:T(16,128)(2,1)}', space=vmem, size = 0x2000, scoped, tag = 'scratch operand']
  #allocation3 [shape = 'f32[32,128]{1,0:T(8,128)}', space=vmem, size = 0x4000, scoped, tag = 'scratch operand']
  %s0 = inlined_call_operand.vmem [shape: f32[4,32,32], index: 0, kind: input, shape index: {}]
  %s1 = inlined_call_operand.hbm [shape: bf16[32,4096], index: 1, kind: input, shape index: {}]
  %s2 = inlined_call_operand.vmem [shape: f32[1,4096], index: 2, kind: input, shape index: {}]
  %s3 = inlined_call_operand.vmem [shape: f32[1,4096], index: 3, kind: input, shape index: {}]
  %s4 = inlined_call_operand.vmem [shape: f32[1,4096], index: 4, kind: input, shape index: {}]
  %s5 = inlined_call_operand.hbm [shape: bf16[4096,128], index: 5, kind: input, shape index: {}]
  %s6 = inlined_call_operand.vmem [shape: f32[1,128], index: 6, kind: input, shape index: {}]
  %s7 = inlined_call_operand.hbm [shape: f32[32,128], index: 7, kind: output, shape index: {}]
  %s8 = sld [smem:[#allocation0]]
  $region54: #{features_model_forward.1} parent=0
    _
  %s10 = ssub.s32 1, %s8
  %s11 = scalar_select 0, %s10, %s8
  $region1: #{features_model_forward.1} parent=0
    #allocation4 [shape = 'u8[262144]{0}', space=vmem, size = 0x40000, scoped, tag = 'input window, operand 1, single buffered']
    #allocation5 [shape = 's32[1]{0}', space=sflag, size = 0x4, scoped, tag = 'scoped memory for features_model_forward.1']
    #allocation6 [shape = 's32[1]{0}', space=sflag, size = 0x4, scoped, tag = 'scoped memory for features_model_forward.1']
    #allocation7 [shape = 'u8[1048576]{0}', space=vmem, size = 0x100000, scoped, tag = 'input window, operand 5, single buffered']
    #allocation8 [shape = 's32[1]{0}', space=sflag, size = 0x4, scoped, tag = 'scoped memory for features_model_forward.1']
    #allocation9 [shape = 'u8[16384]{0}', space=vmem, size = 0x4000, scoped, tag = 'output window, operand 0, single buffered']
    %12 = vsyncpa [#allocation5], 0
    %13 = vsyncpa [#allocation8], 0
    %14 = vsyncpa [#allocation6], 0
    // Predicated region
    $region2: #{features_model_forward.1} parent=1 // pred_check
      _
    $region3: #{features_model_forward.1} parent=1 // pred_check_branch
      %16 = sbr.rel (0) target = $region5
    $region4: #{features_model_forward.1} parent=1 // pred_region
      _
    $region5: #{features_model_forward.1} parent=1 // pred_fallthru
      _
    // Predicated region
    $region6: #{features_model_forward.1} parent=1 // pred_check
      _
    $region7: #{features_model_forward.1} parent=1 // pred_check_branch
      %18 = sbr.rel (0) target = $region9
    $region8: #{features_model_forward.1} parent=1 // pred_region
      %s20 = ssub.s32 8192, 8192
      %21 = vsyncadd [#allocation5], %s20
      %s22 = sshll.u32 [#allocation4], 4
      %s23 = int_to_ptr.vmem [resolvable:$true] %s22
      %28 = dma.hbm_to_vmem [thread:$0]  %s1, 8192, %s23, [#allocation5], 2048, 2048, 128
    $region9: #{features_model_forward.1} parent=1 // pred_fallthru
      _
    // Predicated region
    $region10: #{features_model_forward.1} parent=1 // pred_check
      _
    $region11: #{features_model_forward.1} parent=1 // pred_check_branch
      %30 = sbr.rel (0) target = $region13
    $region12: #{features_model_forward.1} parent=1 // pred_region
      _
    $region13: #{features_model_forward.1} parent=1 // pred_fallthru
      _
    // Predicated region
    $region14: #{features_model_forward.1} parent=1 // pred_check
      _
    $region15: #{features_model_forward.1} parent=1 // pred_check_branch
      %32 = sbr.rel (0) target = $region17
    $region16: #{features_model_forward.1} parent=1 // pred_region
      _
    $region17: #{features_model_forward.1} parent=1 // pred_fallthru
      _
    // Predicated region
    $region18: #{features_model_forward.1} parent=1 // pred_check
      _
    $region19: #{features_model_forward.1} parent=1 // pred_check_branch
      %34 = sbr.rel (0) target = $region21
    $region20: #{features_model_forward.1} parent=1 // pred_region
      _
    $region21: #{features_model_forward.1} parent=1 // pred_fallthru
      _
    // Predicated region
    $region22: #{features_model_forward.1} parent=1 // pred_check
      _
    $region23: #{features_model_forward.1} parent=1 // pred_check_branch
      %36 = sbr.rel (0) target = $region25
    $region24: #{features_model_forward.1} parent=1 // pred_region
      %s38 = ssub.s32 32768, 32768
      %39 = vsyncadd [#allocation8], %s38
      %s40 = sshll.u32 [#allocation7], 4
      %s41 = int_to_ptr.vmem [resolvable:$true] %s40
      %46 = dma.hbm_to_vmem [thread:$0]  %s5, 32768, %s41, [#allocation8], 64, 64, 4
    $region25: #{features_model_forward.1} parent=1 // pred_fallthru
      _
    // Predicated region
    $region26: #{features_model_forward.1} parent=1 // pred_check
      _
    $region27: #{features_model_forward.1} parent=1 // pred_check_branch
      %48 = sbr.rel (0) target = $region29
    $region28: #{features_model_forward.1} parent=1 // pred_region
      _
    $region29: #{features_model_forward.1} parent=1 // pred_fallthru
      _
    // Predicated region
    $region30: #{features_model_forward.1} parent=1 // pred_check
      _
    $region31: #{features_model_forward.1} parent=1 // pred_check_branch
      %50 = sbr.rel (0) target = $region33
    $region32: #{features_model_forward.1} parent=1 // pred_region
      %51 = dma.done [#allocation5], 8192
    $region33: #{features_model_forward.1} parent=1 // pred_fallthru
      _
    // Predicated region
    $region34: #{features_model_forward.1} parent=1 // pred_check
      _
    $region35: #{features_model_forward.1} parent=1 // pred_check_branch
      %53 = sbr.rel (0) target = $region37
    $region36: #{features_model_forward.1} parent=1 // pred_region
      %54 = dma.done [#allocation8], 32768
    $region37: #{features_model_forward.1} parent=1 // pred_fallthru
      _
    %p56 = scmp.eq.s32.totalorder 0, 0
    // Predicated region
    $region38: #{features_model_forward.1} parent=1 // pred_check
      %p57 = pneg %p56
    $region39: #{features_model_forward.1} parent=1 // pred_check_branch
      %59 = sbr.rel (%p57) target = $region41
    $region40: #{features_model_forward.1} parent=1 // pred_region
      %v60 = vld [vmem:[%s0] sm:$0xff]
      %v61 = vld [vmem:[%s0 + $0x8] sm:$0xff]
      %v62 = vld [vmem:[%s0 + $0x10] sm:$0xff]
      %v63 = vld [vmem:[%s0 + $0x18] sm:$0xff]
      %s64 = scalar_lea.vmem %s0, 32
      %v65 = vld [vmem:[%s64] sm:$0xff]
      %v66 = vld [vmem:[%s64 + $0x8] sm:$0xff]
      %v67 = vld [vmem:[%s64 + $0x10] sm:$0xff]
      %v68 = vld [vmem:[%s64 + $0x18] sm:$0xff]
      %v69 = vadd.f32 %v60, %v65
      %v70 = vadd.f32 %v61, %v66
      %v71 = vadd.f32 %v62, %v67
      %v72 = vadd.f32 %v63, %v68
      %s73 = scalar_lea.vmem %s0, 64
      %v74 = vld [vmem:[%s73] sm:$0xff]
      %v75 = vld [vmem:[%s73 + $0x8] sm:$0xff]
      %v76 = vld [vmem:[%s73 + $0x10] sm:$0xff]
      %v77 = vld [vmem:[%s73 + $0x18] sm:$0xff]
      %v78 = vadd.f32 %v69, %v74
      %v79 = vadd.f32 %v70, %v75
      %v80 = vadd.f32 %v71, %v76
      %v81 = vadd.f32 %v72, %v77
      %s82 = scalar_lea.vmem %s0, 96
      %v83 = vld [vmem:[%s82] sm:$0xff]
      %v84 = vld [vmem:[%s82 + $0x8] sm:$0xff]
      %v85 = vld [vmem:[%s82 + $0x10] sm:$0xff]
      %v86 = vld [vmem:[%s82 + $0x18] sm:$0xff]
      %v87 = vadd.f32 %v78, %v83
      %v88 = vadd.f32 %v79, %v84
      %v89 = vadd.f32 %v80, %v85
      %v90 = vadd.f32 %v81, %v86
      %v91 = vmul.f32 %v87, 0.25
      %v92 = vmul.f32 %v88, 0.25
      %v93 = vmul.f32 %v89, 0.25
      %v94 = vmul.f32 %v90, 0.25
      %v95 = vpack.c.bf16 %v92, %v91
      %v96 = vpack.c.bf16 %v94, %v93
      %vm97 = vcmask 261120
      %98 = vst.msk [vmem:[#allocation2] sm:$0xff] %vm97, %v95
      %99 = vst.msk [vmem:[#allocation2 + $0x8] sm:$0xff] %vm97, %v96
      %100 = vst [vmem:[#allocation3] sm:$0xff] 0.0
      %101 = vst [vmem:[#allocation3 + $0x8] sm:$0xff] 0.0
      %102 = vst [vmem:[#allocation3 + $0x10] sm:$0xff] 0.0
      %103 = vst [vmem:[#allocation3 + $0x18] sm:$0xff] 0.0
    $region41: #{features_model_forward.1} parent=1 // pred_fallthru
      _
    %v104 = vld [vmem:[#allocation2] sm:$0xff]
    %v105 = vld [vmem:[#allocation2 + $0x8] sm:$0xff]
    %v106 = vld [vmem:[#allocation4] sm:$0xff]
    %v107 = vld [vmem:[#allocation4 + $0x8] sm:$0xff]
    %v108 = vld [vmem:[#allocation4 + $0x10] sm:$0xff]
    %v109 = vld [vmem:[#allocation4 + $0x18] sm:$0xff]
    %v110 = vld [vmem:[#allocation4 + $0x20] sm:$0xff]
    %v111 = vld [vmem:[#allocation4 + $0x28] sm:$0xff]
    %v112 = vld [vmem:[#allocation4 + $0x30] sm:$0xff]
    %v113 = vld [vmem:[#allocation4 + $0x38] sm:$0xff]
    %v114 = vld [vmem:[#allocation4 + $0x40] sm:$0xff]
    %v115 = vld [vmem:[#allocation4 + $0x48] sm:$0xff]
    %v116 = vld [vmem:[#allocation4 + $0x50] sm:$0xff]
    %v117 = vld [vmem:[#allocation4 + $0x58] sm:$0xff]
    %v118 = vld [vmem:[#allocation4 + $0x60] sm:$0xff]
    %v119 = vld [vmem:[#allocation4 + $0x68] sm:$0xff]
    %v120 = vld [vmem:[#allocation4 + $0x70] sm:$0xff]
    %v121 = vld [vmem:[#allocation4 + $0x78] sm:$0xff]
    %v122 = vld [vmem:[#allocation4 + $0x80] sm:$0xff]
    %v123 = vld [vmem:[#allocation4 + $0x88] sm:$0xff]
    %v124 = vld [vmem:[#allocation4 + $0x90] sm:$0xff]
    %v125 = vld [vmem:[#allocation4 + $0x98] sm:$0xff]
    %v126 = vld [vmem:[#allocation4 + $0xa0] sm:$0xff]
    %v127 = vld [vmem:[#allocation4 + $0xa8] sm:$0xff]
    %v128 = vld [vmem:[#allocation4 + $0xb0] sm:$0xff]
    %v129 = vld [vmem:[#allocation4 + $0xb8] sm:$0xff]
    %v130 = vld [vmem:[#allocation4 + $0xc0] sm:$0xff]
    %v131 = vld [vmem:[#allocation4 + $0xc8] sm:$0xff]
    %v132 = vld [vmem:[#allocation4 + $0xd0] sm:$0xff]
    %v133 = vld [vmem:[#allocation4 + $0xd8] sm:$0xff]
    %v134 = vld [vmem:[#allocation4 + $0xe0] sm:$0xff]
    %v135 = vld [vmem:[#allocation4 + $0xe8] sm:$0xff]
    %v136 = vld [vmem:[#allocation4 + $0xf0] sm:$0xff]
    %v137 = vld [vmem:[#allocation4 + $0xf8] sm:$0xff]
    %v138 = vld [vmem:[#allocation4 + $0x100] sm:$0xff]
    %v139 = vld [vmem:[#allocation4 + $0x108] sm:$0xff]
    %v140 = vld [vmem:[#allocation4 + $0x110] sm:$0xff]
    %v141 = vld [vmem:[#allocation4 + $0x118] sm:$0xff]
    %v142 = vld [vmem:[#allocation4 + $0x120] sm:$0xff]
    %v143 = vld [vmem:[#allocation4 + $0x128] sm:$0xff]
    %v144 = vld [vmem:[#allocation4 + $0x130] sm:$0xff]
    %v145 = vld [vmem:[#allocation4 + $0x138] sm:$0xff]
    %v146 = vld [vmem:[#allocation4 + $0x140] sm:$0xff]
    %v147 = vld [vmem:[#allocation4 + $0x148] sm:$0xff]
    %v148 = vld [vmem:[#allocation4 + $0x150] sm:$0xff]
    %v149 = vld [vmem:[#allocation4 + $0x158] sm:$0xff]
    %v150 = vld [vmem:[#allocation4 + $0x160] sm:$0xff]
    %v151 = vld [vmem:[#allocation4 + $0x168] sm:$0xff]
    %v152 = vld [vmem:[#allocation4 + $0x170] sm:$0xff]
    %v153 = vld [vmem:[#allocation4 + $0x178] sm:$0xff]
    %v154 = vld [vmem:[#allocation4 + $0x180] sm:$0xff]
    %v155 = vld [vmem:[#allocation4 + $0x188] sm:$0xff]
    %v156 = vld [vmem:[#allocation4 + $0x190] sm:$0xff]
    %v157 = vld [vmem:[#allocation4 + $0x198] sm:$0xff]
    %v158 = vld [vmem:[#allocation4 + $0x1a0] sm:$0xff]
    %v159 = vld [vmem:[#allocation4 + $0x1a8] sm:$0xff]
    %v160 = vld [vmem:[#allocation4 + $0x1b0] sm:$0xff]
    %v161 = vld [vmem:[#allocation4 + $0x1b8] sm:$0xff]
    %v162 = vld [vmem:[#allocation4 + $0x1c0] sm:$0xff]
    %v163 = vld [vmem:[#allocation4 + $0x1c8] sm:$0xff]
    %v164 = vld [vmem:[#allocation4 + $0x1d0] sm:$0xff]
    %v165 = vld [vmem:[#allocation4 + $0x1d8] sm:$0xff]
    %v166 = vld [vmem:[#allocation4 + $0x1e0] sm:$0xff]
    %v167 = vld [vmem:[#allocation4 + $0x1e8] sm:$0xff]
    %v168 = vld [vmem:[#allocation4 + $0x1f0] sm:$0xff]
    %v169 = vld [vmem:[#allocation4 + $0x1f8] sm:$0xff]
    %v170 = vld [vmem:[%s2] sm:$0xff]
    %v171 = vld [vmem:[%s2 + $0x8] sm:$0xff]
    %v172 = vld [vmem:[%s2 + $0x10] sm:$0xff]
    %v173 = vld [vmem:[%s2 + $0x18] sm:$0xff]
    %v178 = vlaneseq
    %v179 = vshrl.u32 %v178, 7
    %v180 = vsub.s32 0, %v179
    %v181 = vrot.slane %v170, %v180
    %v182 = vlaneseq
    %v183 = vshrl.u32 %v182, 7
    %v184 = vsub.s32 1, %v183
    %v185 = vrot.slane %v170, %v184
    %v186 = vlaneseq
    %v187 = vshrl.u32 %v186, 7
    %v188 = vsub.s32 2, %v187
    %v189 = vrot.slane %v170, %v188
    %v190 = vlaneseq
    %v191 = vshrl.u32 %v190, 7
    %v192 = vsub.s32 3, %v191
    %v193 = vrot.slane %v170, %v192
    %v194 = vlaneseq
    %v195 = vshrl.u32 %v194, 7
    %v196 = vsub.s32 4, %v195
    %v197 = vrot.slane %v170, %v196
    %v198 = vlaneseq
    %v199 = vshrl.u32 %v198, 7
    %v200 = vsub.s32 5, %v199
    %v201 = vrot.slane %v170, %v200
    %v202 = vlaneseq
    %v203 = vshrl.u32 %v202, 7
    %v204 = vsub.s32 6, %v203
    %v205 = vrot.slane %v170, %v204
    %v206 = vlaneseq
    %v207 = vshrl.u32 %v206, 7
    %v208 = vsub.s32 7, %v207
    %v209 = vrot.slane %v170, %v208
    %v210 = vlaneseq
    %v211 = vshrl.u32 %v210, 7
    %v212 = vsub.s32 0, %v211
    %v213 = vrot.slane %v171, %v212
    %v214 = vlaneseq
    %v215 = vshrl.u32 %v214, 7
    %v216 = vsub.s32 1, %v215
    %v217 = vrot.slane %v171, %v216
    %v218 = vlaneseq
    %v219 = vshrl.u32 %v218, 7
    %v220 = vsub.s32 2, %v219
    %v221 = vrot.slane %v171, %v220
    %v222 = vlaneseq
    %v223 = vshrl.u32 %v222, 7
    %v224 = vsub.s32 3, %v223
    %v225 = vrot.slane %v171, %v224
    %v226 = vlaneseq
    %v227 = vshrl.u32 %v226, 7
    %v228 = vsub.s32 4, %v227
    %v229 = vrot.slane %v171, %v228
    %v230 = vlaneseq
    %v231 = vshrl.u32 %v230, 7
    %v232 = vsub.s32 5, %v231
    %v233 = vrot.slane %v171, %v232
    %v234 = vlaneseq
    %v235 = vshrl.u32 %v234, 7
    %v236 = vsub.s32 6, %v235
    %v237 = vrot.slane %v171, %v236
    %v238 = vlaneseq
    %v239 = vshrl.u32 %v238, 7
    %v240 = vsub.s32 7, %v239
    %v241 = vrot.slane %v171, %v240
    %v242 = vlaneseq
    %v243 = vshrl.u32 %v242, 7
    %v244 = vsub.s32 0, %v243
    %v245 = vrot.slane %v172, %v244
    %v246 = vlaneseq
    %v247 = vshrl.u32 %v246, 7
    %v248 = vsub.s32 1, %v247
    %v249 = vrot.slane %v172, %v248
    %v250 = vlaneseq
    %v251 = vshrl.u32 %v250, 7
    %v252 = vsub.s32 2, %v251
    %v253 = vrot.slane %v172, %v252
    %v254 = vlaneseq
    %v255 = vshrl.u32 %v254, 7
    %v256 = vsub.s32 3, %v255
    %v257 = vrot.slane %v172, %v256
    %v258 = vlaneseq
    %v259 = vshrl.u32 %v258, 7
    %v260 = vsub.s32 4, %v259
    %v261 = vrot.slane %v172, %v260
    %v262 = vlaneseq
    %v263 = vshrl.u32 %v262, 7
    %v264 = vsub.s32 5, %v263
    %v265 = vrot.slane %v172, %v264
    %v266 = vlaneseq
    %v267 = vshrl.u32 %v266, 7
    %v268 = vsub.s32 6, %v267
    %v269 = vrot.slane %v172, %v268
    %v270 = vlaneseq
    %v271 = vshrl.u32 %v270, 7
    %v272 = vsub.s32 7, %v271
    %v273 = vrot.slane %v172, %v272
    %v274 = vlaneseq
    %v275 = vshrl.u32 %v274, 7
    %v276 = vsub.s32 0, %v275
    %v277 = vrot.slane %v173, %v276
    %v278 = vlaneseq
    %v279 = vshrl.u32 %v278, 7
    %v280 = vsub.s32 1, %v279
    %v281 = vrot.slane %v173, %v280
    %v282 = vlaneseq
    %v283 = vshrl.u32 %v282, 7
    %v284 = vsub.s32 2, %v283
    %v285 = vrot.slane %v173, %v284
    %v286 = vlaneseq
    %v287 = vshrl.u32 %v286, 7
    %v288 = vsub.s32 3, %v287
    %v289 = vrot.slane %v173, %v288
    %v290 = vlaneseq
    %v291 = vshrl.u32 %v290, 7
    %v292 = vsub.s32 4, %v291
    %v293 = vrot.slane %v173, %v292
    %v294 = vlaneseq
    %v295 = vshrl.u32 %v294, 7
    %v296 = vsub.s32 5, %v295
    %v297 = vrot.slane %v173, %v296
    %v298 = vlaneseq
    %v299 = vshrl.u32 %v298, 7
    %v300 = vsub.s32 6, %v299
    %v301 = vrot.slane %v173, %v300
    %v302 = vlaneseq
    %v303 = vshrl.u32 %v302, 7
    %v304 = vsub.s32 7, %v303
    %v305 = vrot.slane %v173, %v304
    %v402 = vunpack.c.l.b16 %v106
    %v403 = vunpack.c.h.b16 %v106
    %v404 = vunpack.c.l.b16 %v107
    %v405 = vunpack.c.h.b16 %v107
    %v406 = vunpack.c.l.b16 %v108
    %v407 = vunpack.c.h.b16 %v108
    %v408 = vunpack.c.l.b16 %v109
    %v409 = vunpack.c.h.b16 %v109
    %v410 = vunpack.c.l.b16 %v110
    %v411 = vunpack.c.h.b16 %v110
    %v412 = vunpack.c.l.b16 %v111
    %v413 = vunpack.c.h.b16 %v111
    %v414 = vunpack.c.l.b16 %v112
    %v415 = vunpack.c.h.b16 %v112
    %v416 = vunpack.c.l.b16 %v113
    %v417 = vunpack.c.h.b16 %v113
    %v418 = vunpack.c.l.b16 %v114
    %v419 = vunpack.c.h.b16 %v114
    %v420 = vunpack.c.l.b16 %v115
    %v421 = vunpack.c.h.b16 %v115
    %v422 = vunpack.c.l.b16 %v116
    %v423 = vunpack.c.h.b16 %v116
    %v424 = vunpack.c.l.b16 %v117
    %v425 = vunpack.c.h.b16 %v117
    %v426 = vunpack.c.l.b16 %v118
    %v427 = vunpack.c.h.b16 %v118
    %v428 = vunpack.c.l.b16 %v119
    %v429 = vunpack.c.h.b16 %v119
    %v430 = vunpack.c.l.b16 %v120
    %v431 = vunpack.c.h.b16 %v120
    %v432 = vunpack.c.l.b16 %v121
    %v433 = vunpack.c.h.b16 %v121
    %v434 = vunpack.c.l.b16 %v122
    %v435 = vunpack.c.h.b16 %v122
    %v436 = vunpack.c.l.b16 %v123
    %v437 = vunpack.c.h.b16 %v123
    %v438 = vunpack.c.l.b16 %v124
    %v439 = vunpack.c.h.b16 %v124
    %v440 = vunpack.c.l.b16 %v125
    %v441 = vunpack.c.h.b16 %v125
    %v442 = vunpack.c.l.b16 %v126
    %v443 = vunpack.c.h.b16 %v126
    %v444 = vunpack.c.l.b16 %v127
    %v445 = vunpack.c.h.b16 %v127
    %v446 = vunpack.c.l.b16 %v128
    %v447 = vunpack.c.h.b16 %v128
    %v448 = vunpack.c.l.b16 %v129
    %v449 = vunpack.c.h.b16 %v129
    %v450 = vunpack.c.l.b16 %v130
    %v451 = vunpack.c.h.b16 %v130
    %v452 = vunpack.c.l.b16 %v131
    %v453 = vunpack.c.h.b16 %v131
    %v454 = vunpack.c.l.b16 %v132
    %v455 = vunpack.c.h.b16 %v132
    %v456 = vunpack.c.l.b16 %v133
    %v457 = vunpack.c.h.b16 %v133
    %v458 = vunpack.c.l.b16 %v134
    %v459 = vunpack.c.h.b16 %v134
    %v460 = vunpack.c.l.b16 %v135
    %v461 = vunpack.c.h.b16 %v135
    %v462 = vunpack.c.l.b16 %v136
    %v463 = vunpack.c.h.b16 %v136
    %v464 = vunpack.c.l.b16 %v137
    %v465 = vunpack.c.h.b16 %v137
    %v466 = vunpack.c.l.b16 %v138
    %v467 = vunpack.c.h.b16 %v138
    %v468 = vunpack.c.l.b16 %v139
    %v469 = vunpack.c.h.b16 %v139
    %v470 = vunpack.c.l.b16 %v140
    %v471 = vunpack.c.h.b16 %v140
    %v472 = vunpack.c.l.b16 %v141
    %v473 = vunpack.c.h.b16 %v141
    %v474 = vunpack.c.l.b16 %v142
    %v475 = vunpack.c.h.b16 %v142
    %v476 = vunpack.c.l.b16 %v143
    %v477 = vunpack.c.h.b16 %v143
    %v478 = vunpack.c.l.b16 %v144
    %v479 = vunpack.c.h.b16 %v144
    %v480 = vunpack.c.l.b16 %v145
    %v481 = vunpack.c.h.b16 %v145
    %v482 = vunpack.c.l.b16 %v146
    %v483 = vunpack.c.h.b16 %v146
    %v484 = vunpack.c.l.b16 %v147
    %v485 = vunpack.c.h.b16 %v147
    %v486 = vunpack.c.l.b16 %v148
    %v487 = vunpack.c.h.b16 %v148
    %v488 = vunpack.c.l.b16 %v149
    %v489 = vunpack.c.h.b16 %v149
    %v490 = vunpack.c.l.b16 %v150
    %v491 = vunpack.c.h.b16 %v150
    %v492 = vunpack.c.l.b16 %v151
    %v493 = vunpack.c.h.b16 %v151
    %v494 = vunpack.c.l.b16 %v152
    %v495 = vunpack.c.h.b16 %v152
    %v496 = vunpack.c.l.b16 %v153
    %v497 = vunpack.c.h.b16 %v153
    %v498 = vunpack.c.l.b16 %v154
    %v499 = vunpack.c.h.b16 %v154
    %v500 = vunpack.c.l.b16 %v155
    %v501 = vunpack.c.h.b16 %v155
    %v502 = vunpack.c.l.b16 %v156
    %v503 = vunpack.c.h.b16 %v156
    %v504 = vunpack.c.l.b16 %v157
    %v505 = vunpack.c.h.b16 %v157
    %v506 = vunpack.c.l.b16 %v158
    %v507 = vunpack.c.h.b16 %v158
    %v508 = vunpack.c.l.b16 %v159
    %v509 = vunpack.c.h.b16 %v159
    %v510 = vunpack.c.l.b16 %v160
    %v511 = vunpack.c.h.b16 %v160
    %v512 = vunpack.c.l.b16 %v161
    %v513 = vunpack.c.h.b16 %v161
    %v514 = vunpack.c.l.b16 %v162
    %v515 = vunpack.c.h.b16 %v162
    %v516 = vunpack.c.l.b16 %v163
    %v517 = vunpack.c.h.b16 %v163
    %v518 = vunpack.c.l.b16 %v164
    %v519 = vunpack.c.h.b16 %v164
    %v520 = vunpack.c.l.b16 %v165
    %v521 = vunpack.c.h.b16 %v165
    %v522 = vunpack.c.l.b16 %v166
    %v523 = vunpack.c.h.b16 %v166
    %v524 = vunpack.c.l.b16 %v167
    %v525 = vunpack.c.h.b16 %v167
    %v526 = vunpack.c.l.b16 %v168
    %v527 = vunpack.c.h.b16 %v168
    %v528 = vunpack.c.l.b16 %v169
    %v529 = vunpack.c.h.b16 %v169
    %v530 = vpack.c.b16 %v434, %v402
    %v531 = vpack.c.b16 %v435, %v403
    %v532 = vpack.c.b16 %v436, %v404
    %v533 = vpack.c.b16 %v437, %v405
    %v534 = vpack.c.b16 %v438, %v406
    %v535 = vpack.c.b16 %v439, %v407
    %v536 = vpack.c.b16 %v440, %v408
    %v537 = vpack.c.b16 %v441, %v409
    %v538 = vpack.c.b16 %v442, %v410
    %v539 = vpack.c.b16 %v443, %v411
    %v540 = vpack.c.b16 %v444, %v412
    %v541 = vpack.c.b16 %v445, %v413
    %v542 = vpack.c.b16 %v446, %v414
    %v543 = vpack.c.b16 %v447, %v415
    %v544 = vpack.c.b16 %v448, %v416
    %v545 = vpack.c.b16 %v449, %v417
    %v546 = vpack.c.b16 %v450, %v418
    %v547 = vpack.c.b16 %v451, %v419
    %v548 = vpack.c.b16 %v452, %v420
    %v549 = vpack.c.b16 %v453, %v421
    %v550 = vpack.c.b16 %v454, %v422
    %v551 = vpack.c.b16 %v455, %v423
    %v552 = vpack.c.b16 %v456, %v424
    %v553 = vpack.c.b16 %v457, %v425
    %v554 = vpack.c.b16 %v458, %v426
    %v555 = vpack.c.b16 %v459, %v427
    %v556 = vpack.c.b16 %v460, %v428
    %v557 = vpack.c.b16 %v461, %v429
    %v558 = vpack.c.b16 %v462, %v430
    %v559 = vpack.c.b16 %v463, %v431
    %v560 = vpack.c.b16 %v464, %v432
    %v561 = vpack.c.b16 %v465, %v433
    %v562 = vpack.c.b16 %v498, %v466
    %v563 = vpack.c.b16 %v499, %v467
    %v564 = vpack.c.b16 %v500, %v468
    %v565 = vpack.c.b16 %v501, %v469
    %v566 = vpack.c.b16 %v502, %v470
    %v567 = vpack.c.b16 %v503, %v471
    %v568 = vpack.c.b16 %v504, %v472
    %v569 = vpack.c.b16 %v505, %v473
    %v570 = vpack.c.b16 %v506, %v474
    %v571 = vpack.c.b16 %v507, %v475
    %v572 = vpack.c.b16 %v508, %v476
    %v573 = vpack.c.b16 %v509, %v477
    %v574 = vpack.c.b16 %v510, %v478
    %v575 = vpack.c.b16 %v511, %v479
    %v576 = vpack.c.b16 %v512, %v480
    %v577 = vpack.c.b16 %v513, %v481
    %v578 = vpack.c.b16 %v514, %v482
    %v579 = vpack.c.b16 %v515, %v483
    %v580 = vpack.c.b16 %v516, %v484
    %v581 = vpack.c.b16 %v517, %v485
    %v582 = vpack.c.b16 %v518, %v486
    %v583 = vpack.c.b16 %v519, %v487
    %v584 = vpack.c.b16 %v520, %v488
    %v585 = vpack.c.b16 %v521, %v489
    %v586 = vpack.c.b16 %v522, %v490
    %v587 = vpack.c.b16 %v523, %v491
    %v588 = vpack.c.b16 %v524, %v492
    %v589 = vpack.c.b16 %v525, %v493
    %v590 = vpack.c.b16 %v526, %v494
    %v591 = vpack.c.b16 %v527, %v495
    %v592 = vpack.c.b16 %v528, %v496
    %v593 = vpack.c.b16 %v529, %v497
    %vm658 = vcmask 261120
    %v660 = vsel %vm658, %v104, 0
    %v663 = vsel %vm658, %v105, 0
    %665 = vmatprep.subr.bf16.mxu0 %v531
    %666 = vmatpush1.bf16.msra.mxu0 %v530
    %667 = vmatprep.subr.bf16.mxu0 %v563
    %668 = vmatpush1.bf16.msra.mxu0 %v562
    %669 = vmatprep.subr.bf16.mxu0 0
    %670 = vmatpush1.bf16.msra.mxu0 0
    %671 = vmatprep.subr.bf16.mxu0 0
    %672 = vmatpush1.bf16.msra.mxu0 0
    %673 = vmatprep.subr.bf16.mxu0 0
    %674 = vmatpush1.bf16.msra.mxu0 0
    %675 = vmatprep.subr.bf16.mxu0 0
    %676 = vmatpush1.bf16.msra.mxu0 0
    %677 = vmatprep.subr.bf16.mxu0 0
    %678 = vmatpush1.bf16.msra.mxu0 0
    %679 = vmatprep.subr.bf16.mxu0 0
    %680 = vmatpush1.bf16.msra.mxu0 0
    %681 = vmatprep.subr.bf16.mxu0 0
    %682 = vmatpush1.bf16.msra.mxu0 0
    %683 = vmatprep.subr.bf16.mxu0 0
    %684 = vmatpush1.bf16.msra.mxu0 0
    %685 = vmatprep.subr.bf16.mxu0 0
    %686 = vmatpush1.bf16.msra.mxu0 0
    %687 = vmatprep.subr.bf16.mxu0 0
    %688 = vmatpush1.bf16.msra.mxu0 0
    %689 = vmatprep.subr.bf16.mxu0 0
    %690 = vmatpush1.bf16.msra.mxu0 0
    %691 = vmatprep.subr.bf16.mxu0 0
    %692 = vmatpush1.bf16.msra.mxu0 0
    %693 = vmatprep.subr.bf16.mxu0 0
    %694 = vmatpush1.bf16.msra.mxu0 0
    %695 = vmatprep.subr.bf16.mxu0 0
    %696 = vmatpush1.bf16.msra.mxu0 0
    %697 = vmatprep.mubr.bf16.mxu0 0
    %698 = vmatmul.mubr.bf16.gmra.mrb[0].mxu0 %v660
    %v699 = vpop.f32.mrb[0].mxu0
    %v700 = vadd.f32 %v181, %v699
    %v701 = vpop.f32.mrb[0].mxu0
    %v702 = vadd.f32 %v185, %v701
    %v703 = vpop.f32.mrb[0].mxu0
    %v704 = vadd.f32 %v181, %v703
    %v705 = vpop.f32.mrb[0].mxu0
    %v706 = vadd.f32 %v185, %v705
    %707 = vmatprep.mubr.bf16.mxu0 0
    %708 = vmatmul.mubr.bf16.gmra.mrb[0].mxu0 %v663
    %v709 = vpop.f32.mrb[0].mxu0
    %v710 = vadd.f32 %v181, %v709
    %v711 = vpop.f32.mrb[0].mxu0
    %v712 = vadd.f32 %v185, %v711
    %v713 = vpop.f32.mrb[0].mxu0
    %v714 = vadd.f32 %v181, %v713
    %v715 = vpop.f32.mrb[0].mxu0
    %v716 = vadd.f32 %v185, %v715
    %717 = vdwg.mxu0
    %718 = vmatprep.subr.bf16.mxu0 %v533
    %719 = vmatpush1.bf16.msra.mxu0 %v532
    %720 = vmatprep.subr.bf16.mxu0 %v565
    %721 = vmatpush1.bf16.msra.mxu0 %v564
    %722 = vmatprep.subr.bf16.mxu0 0
    %723 = vmatpush1.bf16.msra.mxu0 0
    %724 = vmatprep.subr.bf16.mxu0 0
    %725 = vmatpush1.bf16.msra.mxu0 0
    %726 = vmatprep.subr.bf16.mxu0 0
    %727 = vmatpush1.bf16.msra.mxu0 0
    %728 = vmatprep.subr.bf16.mxu0 0
    %729 = vmatpush1.bf16.msra.mxu0 0
    %730 = vmatprep.subr.bf16.mxu0 0
    %731 = vmatpush1.bf16.msra.mxu0 0
    %732 = vmatprep.subr.bf16.mxu0 0
    %733 = vmatpush1.bf16.msra.mxu0 0
    %734 = vmatprep.subr.bf16.mxu0 0
    %735 = vmatpush1.bf16.msra.mxu0 0
    %736 = vmatprep.subr.bf16.mxu0 0
    %737 = vmatpush1.bf16.msra.mxu0 0
    %738 = vmatprep.subr.bf16.mxu0 0
    %739 = vmatpush1.bf16.msra.mxu0 0
    %740 = vmatprep.subr.bf16.mxu0 0
    %741 = vmatpush1.bf16.msra.mxu0 0
    %742 = vmatprep.subr.bf16.mxu0 0
    %743 = vmatpush1.bf16.msra.mxu0 0
    %744 = vmatprep.subr.bf16.mxu0 0
    %745 = vmatpush1.bf16.msra.mxu0 0
    %746 = vmatprep.subr.bf16.mxu0 0
    %747 = vmatpush1.bf16.msra.mxu0 0
    %748 = vmatprep.subr.bf16.mxu0 0
    %749 = vmatpush1.bf16.msra.mxu0 0
    %750 = vmatprep.mubr.bf16.mxu0 0
    %751 = vmatmul.mubr.bf16.gmra.mrb[0].mxu0 %v660
    %v752 = vpop.f32.mrb[0].mxu0
    %v753 = vadd.f32 %v189, %v752
    %v754 = vpop.f32.mrb[0].mxu0
    %v755 = vadd.f32 %v193, %v754
    %v756 = vpop.f32.mrb[0].mxu0
    %v757 = vadd.f32 %v189, %v756
    %v758 = vpop.f32.mrb[0].mxu0
    %v759 = vadd.f32 %v193, %v758
    %760 = vmatprep.mubr.bf16.mxu0 0
    %761 = vmatmul.mubr.bf16.gmra.mrb[0].mxu0 %v663
    %v762 = vpop.f32.mrb[0].mxu0
    %v763 = vadd.f32 %v189, %v762
    %v764 = vpop.f32.mrb[0].mxu0
    %v765 = vadd.f32 %v193, %v764
    %v766 = vpop.f32.mrb[0].mxu0
    %v767 = vadd.f32 %v189, %v766
    %v768 = vpop.f32.mrb[0].mxu0
    %v769 = vadd.f32 %v193, %v768
    %770 = vdwg.mxu0
    %771 = vmatprep.subr.bf16.mxu0 %v535
    %772 = vmatpush1.bf16.msra.mxu0 %v534
    %773 = vmatprep.subr.bf16.mxu0 %v567
    %774 = vmatpush1.bf16.msra.mxu0 %v566
    %775 = vmatprep.subr.bf16.mxu0 0
    %776 = vmatpush1.bf16.msra.mxu0 0
    %777 = vmatprep.subr.bf16.mxu0 0
    %778 = vmatpush1.bf16.msra.mxu0 0
    %779 = vmatprep.subr.bf16.mxu0 0
    %780 = vmatpush1.bf16.msra.mxu0 0
    %781 = vmatprep.subr.bf16.mxu0 0
    %782 = vmatpush1.bf16.msra.mxu0 0
    %783 = vmatprep.subr.bf16.mxu0 0
    %784 = vmatpush1.bf16.msra.mxu0 0
    %785 = vmatprep.subr.bf16.mxu0 0
    %786 = vmatpush1.bf16.msra.mxu0 0
    %787 = vmatprep.subr.bf16.mxu0 0
    %788 = vmatpush1.bf16.msra.mxu0 0
    %789 = vmatprep.subr.bf16.mxu0 0
    %790 = vmatpush1.bf16.msra.mxu0 0
    %791 = vmatprep.subr.bf16.mxu0 0
    %792 = vmatpush1.bf16.msra.mxu0 0
    %793 = vmatprep.subr.bf16.mxu0 0
    %794 = vmatpush1.bf16.msra.mxu0 0
    %795 = vmatprep.subr.bf16.mxu0 0
    %796 = vmatpush1.bf16.msra.mxu0 0
    %797 = vmatprep.subr.bf16.mxu0 0
    %798 = vmatpush1.bf16.msra.mxu0 0
    %799 = vmatprep.subr.bf16.mxu0 0
    %800 = vmatpush1.bf16.msra.mxu0 0
    %801 = vmatprep.subr.bf16.mxu0 0
    %802 = vmatpush1.bf16.msra.mxu0 0
    %803 = vmatprep.mubr.bf16.mxu0 0
    %804 = vmatmul.mubr.bf16.gmra.mrb[0].mxu0 %v660
    %v805 = vpop.f32.mrb[0].mxu0
    %v806 = vadd.f32 %v197, %v805
    %v807 = vpop.f32.mrb[0].mxu0
    %v808 = vadd.f32 %v201, %v807
    %v809 = vpop.f32.mrb[0].mxu0
    %v810 = vadd.f32 %v197, %v809
    %v811 = vpop.f32.mrb[0].mxu0
    %v812 = vadd.f32 %v201, %v811
    %813 = vmatprep.mubr.bf16.mxu0 0
    %814 = vmatmul.mubr.bf16.gmra.mrb[0].mxu0 %v663
    %v815 = vpop.f32.mrb[0].mxu0
    %v816 = vadd.f32 %v197, %v815
    %v817 = vpop.f32.mrb[0].mxu0
    %v818 = vadd.f32 %v201, %v817
    %v819 = vpop.f32.mrb[0].mxu0
    %v820 = vadd.f32 %v197, %v819
    %v821 = vpop.f32.mrb[0].mxu0
    %v822 = vadd.f32 %v201, %v821
    %823 = vdwg.mxu0
    %824 = vmatprep.subr.bf16.mxu0 %v537
    %825 = vmatpush1.bf16.msra.mxu0 %v536
    %826 = vmatprep.subr.bf16.mxu0 %v569
    %827 = vmatpush1.bf16.msra.mxu0 %v568
    %828 = vmatprep.subr.bf16.mxu0 0
    %829 = vmatpush1.bf16.msra.mxu0 0
    %830 = vmatprep.subr.bf16.mxu0 0
    %831 = vmatpush1.bf16.msra.mxu0 0
    %832 = vmatprep.subr.bf16.mxu0 0
    %833 = vmatpush1.bf16.msra.mxu0 0
    %834 = vmatprep.subr.bf16.mxu0 0
    %835 = vmatpush1.bf16.msra.mxu0 0
    %836 = vmatprep.subr.bf16.mxu0 0
    %837 = vmatpush1.bf16.msra.mxu0 0
    %838 = vmatprep.subr.bf16.mxu0 0
    %839 = vmatpush1.bf16.msra.mxu0 0
    %840 = vmatprep.subr.bf16.mxu0 0
    %841 = vmatpush1.bf16.msra.mxu0 0
    %842 = vmatprep.subr.bf16.mxu0 0
    %843 = vmatpush1.bf16.msra.mxu0 0
    %844 = vmatprep.subr.bf16.mxu0 0
    %845 = vmatpush1.bf16.msra.mxu0 0
    %846 = vmatprep.subr.bf16.mxu0 0
    %847 = vmatpush1.bf16.msra.mxu0 0
    %848 = vmatprep.subr.bf16.mxu0 0
    %849 = vmatpush1.bf16.msra.mxu0 0
    %850 = vmatprep.subr.bf16.mxu0 0
    %851 = vmatpush1.bf16.msra.mxu0 0
    %852 = vmatprep.subr.bf16.mxu0 0
    %853 = vmatpush1.bf16.msra.mxu0 0
    %854 = vmatprep.subr.bf16.mxu0 0
    %855 = vmatpush1.bf16.msra.mxu0 0
    %856 = vmatprep.mubr.bf16.mxu0 0
    %857 = vmatmul.mubr.bf16.gmra.mrb[0].mxu0 %v660
    %v858 = vpop.f32.mrb[0].mxu0
    %v859 = vadd.f32 %v205, %v858
    %v860 = vpop.f32.mrb[0].mxu0
    %v861 = vadd.f32 %v209, %v860
    %v862 = vpop.f32.mrb[0].mxu0
    %v863 = vadd.f32 %v205, %v862
    %v864 = vpop.f32.mrb[0].mxu0
    %v865 = vadd.f32 %v209, %v864
    %866 = vmatprep.mubr.bf16.mxu0 0
    %867 = vmatmul.mubr.bf16.gmra.mrb[0].mxu0 %v663
    %v868 = vpop.f32.mrb[0].mxu0
    %v869 = vadd.f32 %v205, %v868
    %v870 = vpop.f32.mrb[0].mxu0
    %v871 = vadd.f32 %v209, %v870
    %v872 = vpop.f32.mrb[0].mxu0
    %v873 = vadd.f32 %v205, %v872
    %v874 = vpop.f32.mrb[0].mxu0
    %v875 = vadd.f32 %v209, %v874
    %876 = vdwg.mxu0
    %877 = vmatprep.subr.bf16.mxu0 %v539
    %878 = vmatpush1.bf16.msra.mxu0 %v538
    %879 = vmatprep.subr.bf16.mxu0 %v571
    %880 = vmatpush1.bf16.msra.mxu0 %v570
    %881 = vmatprep.subr.bf16.mxu0 0
    %882 = vmatpush1.bf16.msra.mxu0 0
    %883 = vmatprep.subr.bf16.mxu0 0
    %884 = vmatpush1.bf16.msra.mxu0 0
    %885 = vmatprep.subr.bf16.mxu0 0
    %886 = vmatpush1.bf16.msra.mxu0 0
    %887 = vmatprep.subr.bf16.mxu0 0
    %888 = vmatpush1.bf16.msra.mxu0 0
    %889 = vmatprep.subr.bf16.mxu0 0
    %890 = vmatpush1.bf16.msra.mxu0 0
    %891 = vmatprep.subr.bf16.mxu0 0
    %892 = vmatpush1.bf16.msra.mxu0 0
    %893 = vmatprep.subr.bf16.mxu0 0
    %894 = vmatpush1.bf16.msra.mxu0 0
    %895 = vmatprep.subr.bf16.mxu0 0
    %896 = vmatpush1.bf16.msra.mxu0 0
    %897 = vmatprep.subr.bf16.mxu0 0
    %898 = vmatpush1.bf16.msra.mxu0 0
    %899 = vmatprep.subr.bf16.mxu0 0
    %900 = vmatpush1.bf16.msra.mxu0 0
    %901 = vmatprep.subr.bf16.mxu0 0
    %902 = vmatpush1.bf16.msra.mxu0 0
    %903 = vmatprep.subr.bf16.mxu0 0
    %904 = vmatpush1.bf16.msra.mxu0 0
    %905 = vmatprep.subr.bf16.mxu0 0
    %906 = vmatpush1.bf16.msra.mxu0 0
    %907 = vmatprep.subr.bf16.mxu0 0
    %908 = vmatpush1.bf16.msra.mxu0 0
    %909 = vmatprep.mubr.bf16.mxu0 0
    %910 = vmatmul.mubr.bf16.gmra.mrb[0].mxu0 %v660
    %v911 = vpop.f32.mrb[0].mxu0
    %v912 = vadd.f32 %v213, %v911
    %v913 = vpop.f32.mrb[0].mxu0
    %v914 = vadd.f32 %v217, %v913
    %v915 = vpop.f32.mrb[0].mxu0
    %v916 = vadd.f32 %v213, %v915
    %v917 = vpop.f32.mrb[0].mxu0
    %v918 = vadd.f32 %v217, %v917
    %919 = vmatprep.mubr.bf16.mxu0 0
    %920 = vmatmul.mubr.bf16.gmra.mrb[0].mxu0 %v663
    %v921 = vpop.f32.mrb[0].mxu0
    %v922 = vadd.f32 %v213, %v921
    %v923 = vpop.f32.mrb[0].mxu0
    %v924 = vadd.f32 %v217, %v923
    %v925 = vpop.f32.mrb[0].mxu0
    %v926 = vadd.f32 %v213, %v925
    %v927 = vpop.f32.mrb[0].mxu0
    %v928 = vadd.f32 %v217, %v927
    %929 = vdwg.mxu0
    %930 = vmatprep.subr.bf16.mxu0 %v541
    %931 = vmatpush1.bf16.msra.mxu0 %v540
    %932 = vmatprep.subr.bf16.mxu0 %v573
    %933 = vmatpush1.bf16.msra.mxu0 %v572
    %934 = vmatprep.subr.bf16.mxu0 0
    %935 = vmatpush1.bf16.msra.mxu0 0
    %936 = vmatprep.subr.bf16.mxu0 0
    %937 = vmatpush1.bf16.msra.mxu0 0
    %938 = vmatprep.subr.bf16.mxu0 0
    %939 = vmatpush1.bf16.msra.mxu0 0
    %940 = vmatprep.subr.bf16.mxu0 0
    %941 = vmatpush1.bf16.msra.mxu0 0
    %942 = vmatprep.subr.bf16.mxu0 0
    %943 = vmatpush1.bf16.msra.mxu0 0
    %944 = vmatprep.subr.bf16.mxu0 0
    %945 = vmatpush1.bf16.msra.mxu0 0
    %946 = vmatprep.subr.bf16.mxu0 0
    %947 = vmatpush1.bf16.msra.mxu0 0
    %948 = vmatprep.subr.bf16.mxu0 0
    %949 = vmatpush1.bf16.msra.mxu0 0
    %950 = vmatprep.subr.bf16.mxu0 0
    %951 = vmatpush1.bf16.msra.mxu0 0
    %952 = vmatprep.subr.bf16.mxu0 0
    %953 = vmatpush1.bf16.msra.mxu0 0
    %954 = vmatprep.subr.bf16.mxu0 0
    %955 = vmatpush1.bf16.msra.mxu0 0
    %956 = vmatprep.subr.bf16.mxu0 0
    %957 = vmatpush1.bf16.msra.mxu0 0
    %958 = vmatprep.subr.bf16.mxu0 0
    %959 = vmatpush1.bf16.msra.mxu0 0
    %960 = vmatprep.subr.bf16.mxu0 0
    %961 = vmatpush1.bf16.msra.mxu0 0
    %962 = vmatprep.mubr.bf16.mxu0 0
    %963 = vmatmul.mubr.bf16.gmra.mrb[0].mxu0 %v660
    %v964 = vpop.f32.mrb[0].mxu0
    %v965 = vadd.f32 %v221, %v964
    %v966 = vpop.f32.mrb[0].mxu0
    %v967 = vadd.f32 %v225, %v966
    %v968 = vpop.f32.mrb[0].mxu0
    %v969 = vadd.f32 %v221, %v968
    %v970 = vpop.f32.mrb[0].mxu0
    %v971 = vadd.f32 %v225, %v970
    %972 = vmatprep.mubr.bf16.mxu0 0
    %973 = vmatmul.mubr.bf16.gmra.mrb[0].mxu0 %v663
    %v974 = vpop.f32.mrb[0].mxu0
    %v975 = vadd.f32 %v221, %v974
    %v976 = vpop.f32.mrb[0].mxu0
    %v977 = vadd.f32 %v225, %v976
    %v978 = vpop.f32.mrb[0].mxu0
    %v979 = vadd.f32 %v221, %v978
    %v980 = vpop.f32.mrb[0].mxu0
    %v981 = vadd.f32 %v225, %v980
    %982 = vdwg.mxu0
    %983 = vmatprep.subr.bf16.mxu0 %v543
    %984 = vmatpush1.bf16.msra.mxu0 %v542
    %985 = vmatprep.subr.bf16.mxu0 %v575
    %986 = vmatpush1.bf16.msra.mxu0 %v574
    %987 = vmatprep.subr.bf16.mxu0 0
    %988 = vmatpush1.bf16.msra.mxu0 0
    %989 = vmatprep.subr.bf16.mxu0 0
    %990 = vmatpush1.bf16.msra.mxu0 0
    %991 = vmatprep.subr.bf16.mxu0 0
    %992 = vmatpush1.bf16.msra.mxu0 0
    %993 = vmatprep.subr.bf16.mxu0 0
    %994 = vmatpush1.bf16.msra.mxu0 0
    %995 = vmatprep.subr.bf16.mxu0 0
    %996 = vmatpush1.bf16.msra.mxu0 0
    %997 = vmatprep.subr.bf16.mxu0 0
    %998 = vmatpush1.bf16.msra.mxu0 0
    %999 = vmatprep.subr.bf16.mxu0 0
    %1000 = vmatpush1.bf16.msra.mxu0 0
    %1001 = vmatprep.subr.bf16.mxu0 0
    %1002 = vmatpush1.bf16.msra.mxu0 0
    %1003 = vmatprep.subr.bf16.mxu0 0
    %1004 = vmatpush1.bf16.msra.mxu0 0
    %1005 = vmatprep.subr.bf16.mxu0 0
    %1006 = vmatpush1.bf16.msra.mxu0 0
    %1007 = vmatprep.subr.bf16.mxu0 0
    %1008 = vmatpush1.bf16.msra.mxu0 0
    %1009 = vmatprep.subr.bf16.mxu0 0
    %1010 = vmatpush1.bf16.msra.mxu0 0
    %1011 = vmatprep.subr.bf16.mxu0 0
    %1012 = vmatpush1.bf16.msra.mxu0 0
    %1013 = vmatprep.subr.bf16.mxu0 0
    %1014 = vmatpush1.bf16.msra.mxu0 0
    %1015 = vmatprep.mubr.bf16.mxu0 0
    %1016 = vmatmul.mubr.bf16.gmra.mrb[0].mxu0 %v660
    %v1017 = vpop.f32.mrb[0].mxu0
    %v1018 = vadd.f32 %v229, %v1017
    %v1019 = vpop.f32.mrb[0].mxu0
    %v1020 = vadd.f32 %v233, %v1019
    %v1021 = vpop.f32.mrb[0].mxu0
    %v1022 = vadd.f32 %v229, %v1021
    %v1023 = vpop.f32.mrb[0].mxu0
    %v1024 = vadd.f32 %v233, %v1023
    %1025 = vmatprep.mubr.bf16.mxu0 0
    %1026 = vmatmul.mubr.bf16.gmra.mrb[0].mxu0 %v663
    %v1027 = vpop.f32.mrb[0].mxu0
    %v1028 = vadd.f32 %v229, %v1027
    %v1029 = vpop.f32.mrb[0].mxu0
    %v1030 = vadd.f32 %v233, %v1029
    %v1031 = vpop.f32.mrb[0].mxu0
    %v1032 = vadd.f32 %v229, %v1031
    %v1033 = vpop.f32.mrb[0].mxu0
    %v1034 = vadd.f32 %v233, %v1033
    %1035 = vdwg.mxu0
    %1036 = vmatprep.subr.bf16.mxu0 %v545
    %1037 = vmatpush1.bf16.msra.mxu0 %v544
    %1038 = vmatprep.subr.bf16.mxu0 %v577
    %1039 = vmatpush1.bf16.msra.mxu0 %v576
    %1040 = vmatprep.subr.bf16.mxu0 0
    %1041 = vmatpush1.bf16.msra.mxu0 0
    %1042 = vmatprep.subr.bf16.mxu0 0
    %1043 = vmatpush1.bf16.msra.mxu0 0
    %1044 = vmatprep.subr.bf16.mxu0 0
    %1045 = vmatpush1.bf16.msra.mxu0 0
    %1046 = vmatprep.subr.bf16.mxu0 0
    %1047 = vmatpush1.bf16.msra.mxu0 0
    %1048 = vmatprep.subr.bf16.mxu0 0
    %1049 = vmatpush1.bf16.msra.mxu0 0
    %1050 = vmatprep.subr.bf16.mxu0 0
    %1051 = vmatpush1.bf16.msra.mxu0 0
    %1052 = vmatprep.subr.bf16.mxu0 0
    %1053 = vmatpush1.bf16.msra.mxu0 0
    %1054 = vmatprep.subr.bf16.mxu0 0
    %1055 = vmatpush1.bf16.msra.mxu0 0
    %1056 = vmatprep.subr.bf16.mxu0 0
    %1057 = vmatpush1.bf16.msra.mxu0 0
    %1058 = vmatprep.subr.bf16.mxu0 0
    %1059 = vmatpush1.bf16.msra.mxu0 0
    %1060 = vmatprep.subr.bf16.mxu0 0
    %1061 = vmatpush1.bf16.msra.mxu0 0
    %1062 = vmatprep.subr.bf16.mxu0 0
    %1063 = vmatpush1.bf16.msra.mxu0 0
    %1064 = vmatprep.subr.bf16.mxu0 0
    %1065 = vmatpush1.bf16.msra.mxu0 0
    %1066 = vmatprep.subr.bf16.mxu0 0
    %1067 = vmatpush1.bf16.msra.mxu0 0
    %1068 = vmatprep.mubr.bf16.mxu0 0
    %1069 = vmatmul.mubr.bf16.gmra.mrb[0].mxu0 %v660
    %v1070 = vpop.f32.mrb[0].mxu0
    %v1071 = vadd.f32 %v237, %v1070
    %v1072 = vpop.f32.mrb[0].mxu0
    %v1073 = vadd.f32 %v241, %v1072
    %v1074 = vpop.f32.mrb[0].mxu0
    %v1075 = vadd.f32 %v237, %v1074
    %v1076 = vpop.f32.mrb[0].mxu0
    %v1077 = vadd.f32 %v241, %v1076
    %1078 = vmatprep.mubr.bf16.mxu0 0
    %1079 = vmatmul.mubr.bf16.gmra.mrb[0].mxu0 %v663
    %v1080 = vpop.f32.mrb[0].mxu0
    %v1081 = vadd.f32 %v237, %v1080
    %v1082 = vpop.f32.mrb[0].mxu0
    %v1083 = vadd.f32 %v241, %v1082
    %v1084 = vpop.f32.mrb[0].mxu0
    %v1085 = vadd.f32 %v237, %v1084
    %v1086 = vpop.f32.mrb[0].mxu0
    %v1087 = vadd.f32 %v241, %v1086
    %1088 = vdwg.mxu0
    %1089 = vmatprep.subr.bf16.mxu0 %v547
    %1090 = vmatpush1.bf16.msra.mxu0 %v546
    %1091 = vmatprep.subr.bf16.mxu0 %v579
    %1092 = vmatpush1.bf16.msra.mxu0 %v578
    %1093 = vmatprep.subr.bf16.mxu0 0
    %1094 = vmatpush1.bf16.msra.mxu0 0
    %1095 = vmatprep.subr.bf16.mxu0 0
    %1096 = vmatpush1.bf16.msra.mxu0 0
    %1097 = vmatprep.subr.bf16.mxu0 0
    %1098 = vmatpush1.bf16.msra.mxu0 0
    %1099 = vmatprep.subr.bf16.mxu0 0
    %1100 = vmatpush1.bf16.msra.mxu0 0
    %1101 = vmatprep.subr.bf16.mxu0 0
    %1102 = vmatpush1.bf16.msra.mxu0 0
    %1103 = vmatprep.subr.bf16.mxu0 0
    %1104 = vmatpush1.bf16.msra.mxu0 0
    %1105 = vmatprep.subr.bf16.mxu0 0
    %1106 = vmatpush1.bf16.msra.mxu0 0
    %1107 = vmatprep.subr.bf16.mxu0 0
    %1108 = vmatpush1.bf16.msra.mxu0 0
    %1109 = vmatprep.subr.bf16.mxu0 0
    %1110 = vmatpush1.bf16.msra.mxu0 0
    %1111 = vmatprep.subr.bf16.mxu0 0
    %1112 = vmatpush1.bf16.msra.mxu0 0
    %1113 = vmatprep.subr.bf16.mxu0 0
    %1114 = vmatpush1.bf16.msra.mxu0 0
    %1115 = vmatprep.subr.bf16.mxu0 0
    %1116 = vmatpush1.bf16.msra.mxu0 0
    %1117 = vmatprep.subr.bf16.mxu0 0
    %1118 = vmatpush1.bf16.msra.mxu0 0
    %1119 = vmatprep.subr.bf16.mxu0 0
    %1120 = vmatpush1.bf16.msra.mxu0 0
    %1121 = vmatprep.mubr.bf16.mxu0 0
    %1122 = vmatmul.mubr.bf16.gmra.mrb[0].mxu0 %v660
    %v1123 = vpop.f32.mrb[0].mxu0
    %v1124 = vadd.f32 %v245, %v1123
    %v1125 = vpop.f32.mrb[0].mxu0
    %v1126 = vadd.f32 %v249, %v1125
    %v1127 = vpop.f32.mrb[0].mxu0
    %v1128 = vadd.f32 %v245, %v1127
    %v1129 = vpop.f32.mrb[0].mxu0
    %v1130 = vadd.f32 %v249, %v1129
    %1131 = vmatprep.mubr.bf16.mxu0 0
    %1132 = vmatmul.mubr.bf16.gmra.mrb[0].mxu0 %v663
    %v1133 = vpop.f32.mrb[0].mxu0
    %v1134 = vadd.f32 %v245, %v1133
    %v1135 = vpop.f32.mrb[0].mxu0
    %v1136 = vadd.f32 %v249, %v1135
    %v1137 = vpop.f32.mrb[0].mxu0
    %v1138 = vadd.f32 %v245, %v1137
    %v1139 = vpop.f32.mrb[0].mxu0
    %v1140 = vadd.f32 %v249, %v1139
    %1141 = vdwg.mxu0
    %1142 = vmatprep.subr.bf16.mxu0 %v549
    %1143 = vmatpush1.bf16.msra.mxu0 %v548
    %1144 = vmatprep.subr.bf16.mxu0 %v581
    %1145 = vmatpush1.bf16.msra.mxu0 %v580
    %1146 = vmatprep.subr.bf16.mxu0 0
    %1147 = vmatpush1.bf16.msra.mxu0 0
    %1148 = vmatprep.subr.bf16.mxu0 0
    %1149 = vmatpush1.bf16.msra.mxu0 0
    %1150 = vmatprep.subr.bf16.mxu0 0
    %1151 = vmatpush1.bf16.msra.mxu0 0
    %1152 = vmatprep.subr.bf16.mxu0 0
    %1153 = vmatpush1.bf16.msra.mxu0 0
    %1154 = vmatprep.subr.bf16.mxu0 0
    %1155 = vmatpush1.bf16.msra.mxu0 0
    %1156 = vmatprep.subr.bf16.mxu0 0
    %1157 = vmatpush1.bf16.msra.mxu0 0
    %1158 = vmatprep.subr.bf16.mxu0 0
    %1159 = vmatpush1.bf16.msra.mxu0 0
    %1160 = vmatprep.subr.bf16.mxu0 0
    %1161 = vmatpush1.bf16.msra.mxu0 0
    %1162 = vmatprep.subr.bf16.mxu0 0
    %1163 = vmatpush1.bf16.msra.mxu0 0
    %1164 = vmatprep.subr.bf16.mxu0 0
    %1165 = vmatpush1.bf16.msra.mxu0 0
    %1166 = vmatprep.subr.bf16.mxu0 0
    %1167 = vmatpush1.bf16.msra.mxu0 0
    %1168 = vmatprep.subr.bf16.mxu0 0
    %1169 = vmatpush1.bf16.msra.mxu0 0
    %1170 = vmatprep.subr.bf16.mxu0 0
    %1171 = vmatpush1.bf16.msra.mxu0 0
    %1172 = vmatprep.subr.bf16.mxu0 0
    %1173 = vmatpush1.bf16.msra.mxu0 0
    %1174 = vmatprep.mubr.bf16.mxu0 0
    %1175 = vmatmul.mubr.bf16.gmra.mrb[0].mxu0 %v660
    %v1176 = vpop.f32.mrb[0].mxu0
    %v1177 = vadd.f32 %v253, %v1176
    %v1178 = vpop.f32.mrb[0].mxu0
    %v1179 = vadd.f32 %v257, %v1178
    %v1180 = vpop.f32.mrb[0].mxu0
    %v1181 = vadd.f32 %v253, %v1180
    %v1182 = vpop.f32.mrb[0].mxu0
    %v1183 = vadd.f32 %v257, %v1182
    %1184 = vmatprep.mubr.bf16.mxu0 0
    %1185 = vmatmul.mubr.bf16.gmra.mrb[0].mxu0 %v663
    %v1186 = vpop.f32.mrb[0].mxu0
    %v1187 = vadd.f32 %v253, %v1186
    %v1188 = vpop.f32.mrb[0].mxu0
    %v1189 = vadd.f32 %v257, %v1188
    %v1190 = vpop.f32.mrb[0].mxu0
    %v1191 = vadd.f32 %v253, %v1190
    %v1192 = vpop.f32.mrb[0].mxu0
    %v1193 = vadd.f32 %v257, %v1192
    %1194 = vdwg.mxu0
    %1195 = vmatprep.subr.bf16.mxu0 %v551
    %1196 = vmatpush1.bf16.msra.mxu0 %v550
    %1197 = vmatprep.subr.bf16.mxu0 %v583
    %1198 = vmatpush1.bf16.msra.mxu0 %v582
    %1199 = vmatprep.subr.bf16.mxu0 0
    %1200 = vmatpush1.bf16.msra.mxu0 0
    %1201 = vmatprep.subr.bf16.mxu0 0
    %1202 = vmatpush1.bf16.msra.mxu0 0
    %1203 = vmatprep.subr.bf16.mxu0 0
    %1204 = vmatpush1.bf16.msra.mxu0 0
    %1205 = vmatprep.subr.bf16.mxu0 0
    %1206 = vmatpush1.bf16.msra.mxu0 0
    %1207 = vmatprep.subr.bf16.mxu0 0
    %1208 = vmatpush1.bf16.msra.mxu0 0
    %1209 = vmatprep.subr.bf16.mxu0 0
    %1210 = vmatpush1.bf16.msra.mxu0 0
    %1211 = vmatprep.subr.bf16.mxu0 0
    %1212 = vmatpush1.bf16.msra.mxu0 0
    %1213 = vmatprep.subr.bf16.mxu0 0
    %1214 = vmatpush1.bf16.msra.mxu0 0
    %1215 = vmatprep.subr.bf16.mxu0 0
    %1216 = vmatpush1.bf16.msra.mxu0 0
    %1217 = vmatprep.subr.bf16.mxu0 0
    %1218 = vmatpush1.bf16.msra.mxu0 0
    %1219 = vmatprep.subr.bf16.mxu0 0
    %1220 = vmatpush1.bf16.msra.mxu0 0
    %1221 = vmatprep.subr.bf16.mxu0 0
    %1222 = vmatpush1.bf16.msra.mxu0 0
    %1223 = vmatprep.subr.bf16.mxu0 0
    %1224 = vmatpush1.bf16.msra.mxu0 0
    %1225 = vmatprep.subr.bf16.mxu0 0
    %1226 = vmatpush1.bf16.msra.mxu0 0
    %1227 = vmatprep.mubr.bf16.mxu0 0
    %1228 = vmatmul.mubr.bf16.gmra.mrb[0].mxu0 %v660
    %v1229 = vpop.f32.mrb[0].mxu0
    %v1230 = vadd.f32 %v261, %v1229
    %v1231 = vpop.f32.mrb[0].mxu0
    %v1232 = vadd.f32 %v265, %v1231
    %v1233 = vpop.f32.mrb[0].mxu0
    %v1234 = vadd.f32 %v261, %v1233
    %v1235 = vpop.f32.mrb[0].mxu0
    %v1236 = vadd.f32 %v265, %v1235
    %1237 = vmatprep.mubr.bf16.mxu0 0
    %1238 = vmatmul.mubr.bf16.gmra.mrb[0].mxu0 %v663
    %v1239 = vpop.f32.mrb[0].mxu0
    %v1240 = vadd.f32 %v261, %v1239
    %v1241 = vpop.f32.mrb[0].mxu0
    %v1242 = vadd.f32 %v265, %v1241
    %v1243 = vpop.f32.mrb[0].mxu0
    %v1244 = vadd.f32 %v261, %v1243
    %v1245 = vpop.f32.mrb[0].mxu0
    %v1246 = vadd.f32 %v265, %v1245
    %1247 = vdwg.mxu0
    %1248 = vmatprep.subr.bf16.mxu0 %v553
    %1249 = vmatpush1.bf16.msra.mxu0 %v552
    %1250 = vmatprep.subr.bf16.mxu0 %v585
    %1251 = vmatpush1.bf16.msra.mxu0 %v584
    %1252 = vmatprep.subr.bf16.mxu0 0
    %1253 = vmatpush1.bf16.msra.mxu0 0
    %1254 = vmatprep.subr.bf16.mxu0 0
    %1255 = vmatpush1.bf16.msra.mxu0 0
    %1256 = vmatprep.subr.bf16.mxu0 0
    %1257 = vmatpush1.bf16.msra.mxu0 0
    %1258 = vmatprep.subr.bf16.mxu0 0
    %1259 = vmatpush1.bf16.msra.mxu0 0
    %1260 = vmatprep.subr.bf16.mxu0 0
    %1261 = vmatpush1.bf16.msra.mxu0 0
    %1262 = vmatprep.subr.bf16.mxu0 0
    %1263 = vmatpush1.bf16.msra.mxu0 0
    %1264 = vmatprep.subr.bf16.mxu0 0
    %1265 = vmatpush1.bf16.msra.mxu0 0
    %1266 = vmatprep.subr.bf16.mxu0 0
    %1267 = vmatpush1.bf16.msra.mxu0 0
    %1268 = vmatprep.subr.bf16.mxu0 0
    %1269 = vmatpush1.bf16.msra.mxu0 0
    %1270 = vmatprep.subr.bf16.mxu0 0
    %1271 = vmatpush1.bf16.msra.mxu0 0
    %1272 = vmatprep.subr.bf16.mxu0 0
    %1273 = vmatpush1.bf16.msra.mxu0 0
    %1274 = vmatprep.subr.bf16.mxu0 0
    %1275 = vmatpush1.bf16.msra.mxu0 0
    %1276 = vmatprep.subr.bf16.mxu0 0
    %1277 = vmatpush1.bf16.msra.mxu0 0
    %1278 = vmatprep.subr.bf16.mxu0 0
    %1279 = vmatpush1.bf16.msra.mxu0 0
    %1280 = vmatprep.mubr.bf16.mxu0 0
    %1281 = vmatmul.mubr.bf16.gmra.mrb[0].mxu0 %v660
    %v1282 = vpop.f32.mrb[0].mxu0
    %v1283 = vadd.f32 %v269, %v1282
    %v1284 = vpop.f32.mrb[0].mxu0
    %v1285 = vadd.f32 %v273, %v1284
    %v1286 = vpop.f32.mrb[0].mxu0
    %v1287 = vadd.f32 %v269, %v1286
    %v1288 = vpop.f32.mrb[0].mxu0
    %v1289 = vadd.f32 %v273, %v1288
    %1290 = vmatprep.mubr.bf16.mxu0 0
    %1291 = vmatmul.mubr.bf16.gmra.mrb[0].mxu0 %v663
    %v1292 = vpop.f32.mrb[0].mxu0
    %v1293 = vadd.f32 %v269, %v1292
    %v1294 = vpop.f32.mrb[0].mxu0
    %v1295 = vadd.f32 %v273, %v1294
    %v1296 = vpop.f32.mrb[0].mxu0
    %v1297 = vadd.f32 %v269, %v1296
    %v1298 = vpop.f32.mrb[0].mxu0
    %v1299 = vadd.f32 %v273, %v1298
    %1300 = vdwg.mxu0
    %1301 = vmatprep.subr.bf16.mxu0 %v555
    %1302 = vmatpush1.bf16.msra.mxu0 %v554
    %1303 = vmatprep.subr.bf16.mxu0 %v587
    %1304 = vmatpush1.bf16.msra.mxu0 %v586
    %1305 = vmatprep.subr.bf16.mxu0 0
    %1306 = vmatpush1.bf16.msra.mxu0 0
    %1307 = vmatprep.subr.bf16.mxu0 0
    %1308 = vmatpush1.bf16.msra.mxu0 0
    %1309 = vmatprep.subr.bf16.mxu0 0
    %1310 = vmatpush1.bf16.msra.mxu0 0
    %1311 = vmatprep.subr.bf16.mxu0 0
    %1312 = vmatpush1.bf16.msra.mxu0 0
    %1313 = vmatprep.subr.bf16.mxu0 0
    %1314 = vmatpush1.bf16.msra.mxu0 0
    %1315 = vmatprep.subr.bf16.mxu0 0
    %1316 = vmatpush1.bf16.msra.mxu0 0
    %1317 = vmatprep.subr.bf16.mxu0 0
    %1318 = vmatpush1.bf16.msra.mxu0 0
    %1319 = vmatprep.subr.bf16.mxu0 0
    %1320 = vmatpush1.bf16.msra.mxu0 0
    %1321 = vmatprep.subr.bf16.mxu0 0
    %1322 = vmatpush1.bf16.msra.mxu0 0
    %1323 = vmatprep.subr.bf16.mxu0 0
    %1324 = vmatpush1.bf16.msra.mxu0 0
    %1325 = vmatprep.subr.bf16.mxu0 0
    %1326 = vmatpush1.bf16.msra.mxu0 0
    %1327 = vmatprep.subr.bf16.mxu0 0
    %1328 = vmatpush1.bf16.msra.mxu0 0
    %1329 = vmatprep.subr.bf16.mxu0 0
    %1330 = vmatpush1.bf16.msra.mxu0 0
    %1331 = vmatprep.subr.bf16.mxu0 0
    %1332 = vmatpush1.bf16.msra.mxu0 0
    %1333 = vmatprep.mubr.bf16.mxu0 0
    %1334 = vmatmul.mubr.bf16.gmra.mrb[0].mxu0 %v660
    %v1335 = vpop.f32.mrb[0].mxu0
    %v1336 = vadd.f32 %v277, %v1335
    %v1337 = vpop.f32.mrb[0].mxu0
    %v1338 = vadd.f32 %v281, %v1337
    %v1339 = vpop.f32.mrb[0].mxu0
    %v1340 = vadd.f32 %v277, %v1339
    %v1341 = vpop.f32.mrb[0].mxu0
    %v1342 = vadd.f32 %v281, %v1341
    %1343 = vmatprep.mubr.bf16.mxu0 0
    %1344 = vmatmul.mubr.bf16.gmra.mrb[0].mxu0 %v663
    %v1345 = vpop.f32.mrb[0].mxu0
    %v1346 = vadd.f32 %v277, %v1345
    %v1347 = vpop.f32.mrb[0].mxu0
    %v1348 = vadd.f32 %v281, %v1347
    %v1349 = vpop.f32.mrb[0].mxu0
    %v1350 = vadd.f32 %v277, %v1349
    %v1351 = vpop.f32.mrb[0].mxu0
    %v1352 = vadd.f32 %v281, %v1351
    %1353 = vdwg.mxu0
    %1354 = vmatprep.subr.bf16.mxu0 %v557
    %1355 = vmatpush1.bf16.msra.mxu0 %v556
    %1356 = vmatprep.subr.bf16.mxu0 %v589
    %1357 = vmatpush1.bf16.msra.mxu0 %v588
    %1358 = vmatprep.subr.bf16.mxu0 0
    %1359 = vmatpush1.bf16.msra.mxu0 0
    %1360 = vmatprep.subr.bf16.mxu0 0
    %1361 = vmatpush1.bf16.msra.mxu0 0
    %1362 = vmatprep.subr.bf16.mxu0 0
    %1363 = vmatpush1.bf16.msra.mxu0 0
    %1364 = vmatprep.subr.bf16.mxu0 0
    %1365 = vmatpush1.bf16.msra.mxu0 0
    %1366 = vmatprep.subr.bf16.mxu0 0
    %1367 = vmatpush1.bf16.msra.mxu0 0
    %1368 = vmatprep.subr.bf16.mxu0 0
    %1369 = vmatpush1.bf16.msra.mxu0 0
    %1370 = vmatprep.subr.bf16.mxu0 0
    %1371 = vmatpush1.bf16.msra.mxu0 0
    %1372 = vmatprep.subr.bf16.mxu0 0
    %1373 = vmatpush1.bf16.msra.mxu0 0
    %1374 = vmatprep.subr.bf16.mxu0 0
    %1375 = vmatpush1.bf16.msra.mxu0 0
    %1376 = vmatprep.subr.bf16.mxu0 0
    %1377 = vmatpush1.bf16.msra.mxu0 0
    %1378 = vmatprep.subr.bf16.mxu0 0
    %1379 = vmatpush1.bf16.msra.mxu0 0
    %1380 = vmatprep.subr.bf16.mxu0 0
    %1381 = vmatpush1.bf16.msra.mxu0 0
    %1382 = vmatprep.subr.bf16.mxu0 0
    %1383 = vmatpush1.bf16.msra.mxu0 0
    %1384 = vmatprep.subr.bf16.mxu0 0
    %1385 = vmatpush1.bf16.msra.mxu0 0
    %1386 = vmatprep.mubr.bf16.mxu0 0
    %1387 = vmatmul.mubr.bf16.gmra.mrb[0].mxu0 %v660
    %v1388 = vpop.f32.mrb[0].mxu0
    %v1389 = vadd.f32 %v285, %v1388
    %v1390 = vpop.f32.mrb[0].mxu0
    %v1391 = vadd.f32 %v289, %v1390
    %v1392 = vpop.f32.mrb[0].mxu0
    %v1393 = vadd.f32 %v285, %v1392
    %v1394 = vpop.f32.mrb[0].mxu0
    %v1395 = vadd.f32 %v289, %v1394
    %1396 = vmatprep.mubr.bf16.mxu0 0
    %1397 = vmatmul.mubr.bf16.gmra.mrb[0].mxu0 %v663
    %v1398 = vpop.f32.mrb[0].mxu0
    %v1399 = vadd.f32 %v285, %v1398
    %v1400 = vpop.f32.mrb[0].mxu0
    %v1401 = vadd.f32 %v289, %v1400
    %v1402 = vpop.f32.mrb[0].mxu0
    %v1403 = vadd.f32 %v285, %v1402
    %v1404 = vpop.f32.mrb[0].mxu0
    %v1405 = vadd.f32 %v289, %v1404
    %1406 = vdwg.mxu0
    %1407 = vmatprep.subr.bf16.mxu0 %v559
    %1408 = vmatpush1.bf16.msra.mxu0 %v558
    %1409 = vmatprep.subr.bf16.mxu0 %v591
    %1410 = vmatpush1.bf16.msra.mxu0 %v590
    %1411 = vmatprep.subr.bf16.mxu0 0
    %1412 = vmatpush1.bf16.msra.mxu0 0
    %1413 = vmatprep.subr.bf16.mxu0 0
    %1414 = vmatpush1.bf16.msra.mxu0 0
    %1415 = vmatprep.subr.bf16.mxu0 0
    %1416 = vmatpush1.bf16.msra.mxu0 0
    %1417 = vmatprep.subr.bf16.mxu0 0
    %1418 = vmatpush1.bf16.msra.mxu0 0
    %1419 = vmatprep.subr.bf16.mxu0 0
    %1420 = vmatpush1.bf16.msra.mxu0 0
    %1421 = vmatprep.subr.bf16.mxu0 0
    %1422 = vmatpush1.bf16.msra.mxu0 0
    %1423 = vmatprep.subr.bf16.mxu0 0
    %1424 = vmatpush1.bf16.msra.mxu0 0
    %1425 = vmatprep.subr.bf16.mxu0 0
    %1426 = vmatpush1.bf16.msra.mxu0 0
    %1427 = vmatprep.subr.bf16.mxu0 0
    %1428 = vmatpush1.bf16.msra.mxu0 0
    %1429 = vmatprep.subr.bf16.mxu0 0
    %1430 = vmatpush1.bf16.msra.mxu0 0
    %1431 = vmatprep.subr.bf16.mxu0 0
    %1432 = vmatpush1.bf16.msra.mxu0 0
    %1433 = vmatprep.subr.bf16.mxu0 0
    %1434 = vmatpush1.bf16.msra.mxu0 0
    %1435 = vmatprep.subr.bf16.mxu0 0
    %1436 = vmatpush1.bf16.msra.mxu0 0
    %1437 = vmatprep.subr.bf16.mxu0 0
    %1438 = vmatpush1.bf16.msra.mxu0 0
    %1439 = vmatprep.mubr.bf16.mxu0 0
    %1440 = vmatmul.mubr.bf16.gmra.mrb[0].mxu0 %v660
    %v1441 = vpop.f32.mrb[0].mxu0
    %v1442 = vadd.f32 %v293, %v1441
    %v1443 = vpop.f32.mrb[0].mxu0
    %v1444 = vadd.f32 %v297, %v1443
    %v1445 = vpop.f32.mrb[0].mxu0
    %v1446 = vadd.f32 %v293, %v1445
    %v1447 = vpop.f32.mrb[0].mxu0
    %v1448 = vadd.f32 %v297, %v1447
    %1449 = vmatprep.mubr.bf16.mxu0 0
    %1450 = vmatmul.mubr.bf16.gmra.mrb[0].mxu0 %v663
    %v1451 = vpop.f32.mrb[0].mxu0
    %v1452 = vadd.f32 %v293, %v1451
    %v1453 = vpop.f32.mrb[0].mxu0
    %v1454 = vadd.f32 %v297, %v1453
    %v1455 = vpop.f32.mrb[0].mxu0
    %v1456 = vadd.f32 %v293, %v1455
    %v1457 = vpop.f32.mrb[0].mxu0
    %v1458 = vadd.f32 %v297, %v1457
    %1459 = vdwg.mxu0
    %1460 = vmatprep.subr.bf16.mxu0 %v561
    %1461 = vmatpush1.bf16.msra.mxu0 %v560
    %1462 = vmatprep.subr.bf16.mxu0 %v593
    %1463 = vmatpush1.bf16.msra.mxu0 %v592
    %1464 = vmatprep.subr.bf16.mxu0 0
    %1465 = vmatpush1.bf16.msra.mxu0 0
    %1466 = vmatprep.subr.bf16.mxu0 0
    %1467 = vmatpush1.bf16.msra.mxu0 0
    %1468 = vmatprep.subr.bf16.mxu0 0
    %1469 = vmatpush1.bf16.msra.mxu0 0
    %1470 = vmatprep.subr.bf16.mxu0 0
    %1471 = vmatpush1.bf16.msra.mxu0 0
    %1472 = vmatprep.subr.bf16.mxu0 0
    %1473 = vmatpush1.bf16.msra.mxu0 0
    %1474 = vmatprep.subr.bf16.mxu0 0
    %1475 = vmatpush1.bf16.msra.mxu0 0
    %1476 = vmatprep.subr.bf16.mxu0 0
    %1477 = vmatpush1.bf16.msra.mxu0 0
    %1478 = vmatprep.subr.bf16.mxu0 0
    %1479 = vmatpush1.bf16.msra.mxu0 0
    %1480 = vmatprep.subr.bf16.mxu0 0
    %1481 = vmatpush1.bf16.msra.mxu0 0
    %1482 = vmatprep.subr.bf16.mxu0 0
    %1483 = vmatpush1.bf16.msra.mxu0 0
    %1484 = vmatprep.subr.bf16.mxu0 0
    %1485 = vmatpush1.bf16.msra.mxu0 0
    %1486 = vmatprep.subr.bf16.mxu0 0
    %1487 = vmatpush1.bf16.msra.mxu0 0
    %1488 = vmatprep.subr.bf16.mxu0 0
    %1489 = vmatpush1.bf16.msra.mxu0 0
    %1490 = vmatprep.subr.bf16.mxu0 0
    %1491 = vmatpush1.bf16.msra.mxu0 0
    %1492 = vmatprep.mubr.bf16.mxu0 0
    %1493 = vmatmul.mubr.bf16.gmra.mrb[0].mxu0 %v660
    %v1494 = vpop.f32.mrb[0].mxu0
    %v1495 = vadd.f32 %v301, %v1494
    %v1496 = vpop.f32.mrb[0].mxu0
    %v1497 = vadd.f32 %v305, %v1496
    %v1498 = vpop.f32.mrb[0].mxu0
    %v1499 = vadd.f32 %v301, %v1498
    %v1500 = vpop.f32.mrb[0].mxu0
    %v1501 = vadd.f32 %v305, %v1500
    %1502 = vmatprep.mubr.bf16.mxu0 0
    %1503 = vmatmul.mubr.bf16.gmra.mrb[0].mxu0 %v663
    %v1504 = vpop.f32.mrb[0].mxu0
    %v1505 = vadd.f32 %v301, %v1504
    %v1506 = vpop.f32.mrb[0].mxu0
    %v1507 = vadd.f32 %v305, %v1506
    %v1508 = vpop.f32.mrb[0].mxu0
    %v1509 = vadd.f32 %v301, %v1508
    %v1510 = vpop.f32.mrb[0].mxu0
    %v1511 = vadd.f32 %v305, %v1510
    %1512 = vdwg.mxu0
    %v1513 = vadd.f32 %v700, %v704
    %v1514 = vadd.f32 %v1513, %v710
    %v1515 = vadd.f32 %v1514, %v714
    %v1516 = vrot.slane %v1515, 4
    %v1517 = vadd.f32 %v1515, %v1516
    %v1518 = vrot.slane %v1517, 2
    %v1519 = vadd.f32 %v1517, %v1518
    %v1520 = vrot.slane %v1519, 1
    %v1521 = vadd.f32 %v1519, %v1520
    %v1522 = vadd.f32 %v702, %v706
    %v1523 = vadd.f32 %v1522, %v712
    %v1524 = vadd.f32 %v1523, %v716
    %v1525 = vrot.slane %v1524, 4
    %v1526 = vadd.f32 %v1524, %v1525
    %v1527 = vrot.slane %v1526, 2
    %v1528 = vadd.f32 %v1526, %v1527
    %v1529 = vrot.slane %v1528, 1
    %v1530 = vadd.f32 %v1528, %v1529
    %v1531 = vadd.f32 %v753, %v757
    %v1532 = vadd.f32 %v1531, %v763
    %v1533 = vadd.f32 %v1532, %v767
    %v1534 = vrot.slane %v1533, 4
    %v1535 = vadd.f32 %v1533, %v1534
    %v1536 = vrot.slane %v1535, 2
    %v1537 = vadd.f32 %v1535, %v1536
    %v1538 = vrot.slane %v1537, 1
    %v1539 = vadd.f32 %v1537, %v1538
    %v1540 = vadd.f32 %v755, %v759
    %v1541 = vadd.f32 %v1540, %v765
    %v1542 = vadd.f32 %v1541, %v769
    %v1543 = vrot.slane %v1542, 4
    %v1544 = vadd.f32 %v1542, %v1543
    %v1545 = vrot.slane %v1544, 2
    %v1546 = vadd.f32 %v1544, %v1545
    %v1547 = vrot.slane %v1546, 1
    %v1548 = vadd.f32 %v1546, %v1547
    %v1549 = vadd.f32 %v806, %v810
    %v1550 = vadd.f32 %v1549, %v816
    %v1551 = vadd.f32 %v1550, %v820
    %v1552 = vrot.slane %v1551, 4
    %v1553 = vadd.f32 %v1551, %v1552
    %v1554 = vrot.slane %v1553, 2
    %v1555 = vadd.f32 %v1553, %v1554
    %v1556 = vrot.slane %v1555, 1
    %v1557 = vadd.f32 %v1555, %v1556
    %v1558 = vadd.f32 %v808, %v812
    %v1559 = vadd.f32 %v1558, %v818
    %v1560 = vadd.f32 %v1559, %v822
    %v1561 = vrot.slane %v1560, 4
    %v1562 = vadd.f32 %v1560, %v1561
    %v1563 = vrot.slane %v1562, 2
    %v1564 = vadd.f32 %v1562, %v1563
    %v1565 = vrot.slane %v1564, 1
    %v1566 = vadd.f32 %v1564, %v1565
    %v1567 = vadd.f32 %v859, %v863
    %v1568 = vadd.f32 %v1567, %v869
    %v1569 = vadd.f32 %v1568, %v873
    %v1570 = vrot.slane %v1569, 4
    %v1571 = vadd.f32 %v1569, %v1570
    %v1572 = vrot.slane %v1571, 2
    %v1573 = vadd.f32 %v1571, %v1572
    %v1574 = vrot.slane %v1573, 1
    %v1575 = vadd.f32 %v1573, %v1574
    %v1576 = vadd.f32 %v861, %v865
    %v1577 = vadd.f32 %v1576, %v871
    %v1578 = vadd.f32 %v1577, %v875
    %v1579 = vrot.slane %v1578, 4
    %v1580 = vadd.f32 %v1578, %v1579
    %v1581 = vrot.slane %v1580, 2
    %v1582 = vadd.f32 %v1580, %v1581
    %v1583 = vrot.slane %v1582, 1
    %v1584 = vadd.f32 %v1582, %v1583
    %v1585 = vadd.f32 %v912, %v916
    %v1586 = vadd.f32 %v1585, %v922
    %v1587 = vadd.f32 %v1586, %v926
    %v1588 = vrot.slane %v1587, 4
    %v1589 = vadd.f32 %v1587, %v1588
    %v1590 = vrot.slane %v1589, 2
    %v1591 = vadd.f32 %v1589, %v1590
    %v1592 = vrot.slane %v1591, 1
    %v1593 = vadd.f32 %v1591, %v1592
    %v1594 = vadd.f32 %v914, %v918
    %v1595 = vadd.f32 %v1594, %v924
    %v1596 = vadd.f32 %v1595, %v928
    %v1597 = vrot.slane %v1596, 4
    %v1598 = vadd.f32 %v1596, %v1597
    %v1599 = vrot.slane %v1598, 2
    %v1600 = vadd.f32 %v1598, %v1599
    %v1601 = vrot.slane %v1600, 1
    %v1602 = vadd.f32 %v1600, %v1601
    %v1603 = vadd.f32 %v965, %v969
    %v1604 = vadd.f32 %v1603, %v975
    %v1605 = vadd.f32 %v1604, %v979
    %v1606 = vrot.slane %v1605, 4
    %v1607 = vadd.f32 %v1605, %v1606
    %v1608 = vrot.slane %v1607, 2
    %v1609 = vadd.f32 %v1607, %v1608
    %v1610 = vrot.slane %v1609, 1
    %v1611 = vadd.f32 %v1609, %v1610
    %v1612 = vadd.f32 %v967, %v971
    %v1613 = vadd.f32 %v1612, %v977
    %v1614 = vadd.f32 %v1613, %v981
    %v1615 = vrot.slane %v1614, 4
    %v1616 = vadd.f32 %v1614, %v1615
    %v1617 = vrot.slane %v1616, 2
    %v1618 = vadd.f32 %v1616, %v1617
    %v1619 = vrot.slane %v1618, 1
    %v1620 = vadd.f32 %v1618, %v1619
    %v1621 = vadd.f32 %v1018, %v1022
    %v1622 = vadd.f32 %v1621, %v1028
    %v1623 = vadd.f32 %v1622, %v1032
    %v1624 = vrot.slane %v1623, 4
    %v1625 = vadd.f32 %v1623, %v1624
    %v1626 = vrot.slane %v1625, 2
    %v1627 = vadd.f32 %v1625, %v1626
    %v1628 = vrot.slane %v1627, 1
    %v1629 = vadd.f32 %v1627, %v1628
    %v1630 = vadd.f32 %v1020, %v1024
    %v1631 = vadd.f32 %v1630, %v1030
    %v1632 = vadd.f32 %v1631, %v1034
    %v1633 = vrot.slane %v1632, 4
    %v1634 = vadd.f32 %v1632, %v1633
    %v1635 = vrot.slane %v1634, 2
    %v1636 = vadd.f32 %v1634, %v1635
    %v1637 = vrot.slane %v1636, 1
    %v1638 = vadd.f32 %v1636, %v1637
    %v1639 = vadd.f32 %v1071, %v1075
    %v1640 = vadd.f32 %v1639, %v1081
    %v1641 = vadd.f32 %v1640, %v1085
    %v1642 = vrot.slane %v1641, 4
    %v1643 = vadd.f32 %v1641, %v1642
    %v1644 = vrot.slane %v1643, 2
    %v1645 = vadd.f32 %v1643, %v1644
    %v1646 = vrot.slane %v1645, 1
    %v1647 = vadd.f32 %v1645, %v1646
    %v1648 = vadd.f32 %v1073, %v1077
    %v1649 = vadd.f32 %v1648, %v1083
    %v1650 = vadd.f32 %v1649, %v1087
    %v1651 = vrot.slane %v1650, 4
    %v1652 = vadd.f32 %v1650, %v1651
    %v1653 = vrot.slane %v1652, 2
    %v1654 = vadd.f32 %v1652, %v1653
    %v1655 = vrot.slane %v1654, 1
    %v1656 = vadd.f32 %v1654, %v1655
    %v1657 = vadd.f32 %v1124, %v1128
    %v1658 = vadd.f32 %v1657, %v1134
    %v1659 = vadd.f32 %v1658, %v1138
    %v1660 = vrot.slane %v1659, 4
    %v1661 = vadd.f32 %v1659, %v1660
    %v1662 = vrot.slane %v1661, 2
    %v1663 = vadd.f32 %v1661, %v1662
    %v1664 = vrot.slane %v1663, 1
    %v1665 = vadd.f32 %v1663, %v1664
    %v1666 = vadd.f32 %v1126, %v1130
    %v1667 = vadd.f32 %v1666, %v1136
    %v1668 = vadd.f32 %v1667, %v1140
    %v1669 = vrot.slane %v1668, 4
    %v1670 = vadd.f32 %v1668, %v1669
    %v1671 = vrot.slane %v1670, 2
    %v1672 = vadd.f32 %v1670, %v1671
    %v1673 = vrot.slane %v1672, 1
    %v1674 = vadd.f32 %v1672, %v1673
    %v1675 = vadd.f32 %v1177, %v1181
    %v1676 = vadd.f32 %v1675, %v1187
    %v1677 = vadd.f32 %v1676, %v1191
    %v1678 = vrot.slane %v1677, 4
    %v1679 = vadd.f32 %v1677, %v1678
    %v1680 = vrot.slane %v1679, 2
    %v1681 = vadd.f32 %v1679, %v1680
    %v1682 = vrot.slane %v1681, 1
    %v1683 = vadd.f32 %v1681, %v1682
    %v1684 = vadd.f32 %v1179, %v1183
    %v1685 = vadd.f32 %v1684, %v1189
    %v1686 = vadd.f32 %v1685, %v1193
    %v1687 = vrot.slane %v1686, 4
    %v1688 = vadd.f32 %v1686, %v1687
    %v1689 = vrot.slane %v1688, 2
    %v1690 = vadd.f32 %v1688, %v1689
    %v1691 = vrot.slane %v1690, 1
    %v1692 = vadd.f32 %v1690, %v1691
    %v1693 = vadd.f32 %v1230, %v1234
    %v1694 = vadd.f32 %v1693, %v1240
    %v1695 = vadd.f32 %v1694, %v1244
    %v1696 = vrot.slane %v1695, 4
    %v1697 = vadd.f32 %v1695, %v1696
    %v1698 = vrot.slane %v1697, 2
    %v1699 = vadd.f32 %v1697, %v1698
    %v1700 = vrot.slane %v1699, 1
    %v1701 = vadd.f32 %v1699, %v1700
    %v1702 = vadd.f32 %v1232, %v1236
    %v1703 = vadd.f32 %v1702, %v1242
    %v1704 = vadd.f32 %v1703, %v1246
    %v1705 = vrot.slane %v1704, 4
    %v1706 = vadd.f32 %v1704, %v1705
    %v1707 = vrot.slane %v1706, 2
    %v1708 = vadd.f32 %v1706, %v1707
    %v1709 = vrot.slane %v1708, 1
    %v1710 = vadd.f32 %v1708, %v1709
    %v1711 = vadd.f32 %v1283, %v1287
    %v1712 = vadd.f32 %v1711, %v1293
    %v1713 = vadd.f32 %v1712, %v1297
    %v1714 = vrot.slane %v1713, 4
    %v1715 = vadd.f32 %v1713, %v1714
    %v1716 = vrot.slane %v1715, 2
    %v1717 = vadd.f32 %v1715, %v1716
    %v1718 = vrot.slane %v1717, 1
    %v1719 = vadd.f32 %v1717, %v1718
    %v1720 = vadd.f32 %v1285, %v1289
    %v1721 = vadd.f32 %v1720, %v1295
    %v1722 = vadd.f32 %v1721, %v1299
    %v1723 = vrot.slane %v1722, 4
    %v1724 = vadd.f32 %v1722, %v1723
    %v1725 = vrot.slane %v1724, 2
    %v1726 = vadd.f32 %v1724, %v1725
    %v1727 = vrot.slane %v1726, 1
    %v1728 = vadd.f32 %v1726, %v1727
    %v1729 = vadd.f32 %v1336, %v1340
    %v1730 = vadd.f32 %v1729, %v1346
    %v1731 = vadd.f32 %v1730, %v1350
    %v1732 = vrot.slane %v1731, 4
    %v1733 = vadd.f32 %v1731, %v1732
    %v1734 = vrot.slane %v1733, 2
    %v1735 = vadd.f32 %v1733, %v1734
    %v1736 = vrot.slane %v1735, 1
    %v1737 = vadd.f32 %v1735, %v1736
    %v1738 = vadd.f32 %v1338, %v1342
    %v1739 = vadd.f32 %v1738, %v1348
    %v1740 = vadd.f32 %v1739, %v1352
    %v1741 = vrot.slane %v1740, 4
    %v1742 = vadd.f32 %v1740, %v1741
    %v1743 = vrot.slane %v1742, 2
    %v1744 = vadd.f32 %v1742, %v1743
    %v1745 = vrot.slane %v1744, 1
    %v1746 = vadd.f32 %v1744, %v1745
    %v1747 = vadd.f32 %v1389, %v1393
    %v1748 = vadd.f32 %v1747, %v1399
    %v1749 = vadd.f32 %v1748, %v1403
    %v1750 = vrot.slane %v1749, 4
    %v1751 = vadd.f32 %v1749, %v1750
    %v1752 = vrot.slane %v1751, 2
    %v1753 = vadd.f32 %v1751, %v1752
    %v1754 = vrot.slane %v1753, 1
    %v1755 = vadd.f32 %v1753, %v1754
    %v1756 = vadd.f32 %v1391, %v1395
    %v1757 = vadd.f32 %v1756, %v1401
    %v1758 = vadd.f32 %v1757, %v1405
    %v1759 = vrot.slane %v1758, 4
    %v1760 = vadd.f32 %v1758, %v1759
    %v1761 = vrot.slane %v1760, 2
    %v1762 = vadd.f32 %v1760, %v1761
    %v1763 = vrot.slane %v1762, 1
    %v1764 = vadd.f32 %v1762, %v1763
    %v1765 = vadd.f32 %v1442, %v1446
    %v1766 = vadd.f32 %v1765, %v1452
    %v1767 = vadd.f32 %v1766, %v1456
    %v1768 = vrot.slane %v1767, 4
    %v1769 = vadd.f32 %v1767, %v1768
    %v1770 = vrot.slane %v1769, 2
    %v1771 = vadd.f32 %v1769, %v1770
    %v1772 = vrot.slane %v1771, 1
    %v1773 = vadd.f32 %v1771, %v1772
    %v1774 = vadd.f32 %v1444, %v1448
    %v1775 = vadd.f32 %v1774, %v1454
    %v1776 = vadd.f32 %v1775, %v1458
    %v1777 = vrot.slane %v1776, 4
    %v1778 = vadd.f32 %v1776, %v1777
    %v1779 = vrot.slane %v1778, 2
    %v1780 = vadd.f32 %v1778, %v1779
    %v1781 = vrot.slane %v1780, 1
    %v1782 = vadd.f32 %v1780, %v1781
    %v1783 = vadd.f32 %v1495, %v1499
    %v1784 = vadd.f32 %v1783, %v1505
    %v1785 = vadd.f32 %v1784, %v1509
    %v1786 = vrot.slane %v1785, 4
    %v1787 = vadd.f32 %v1785, %v1786
    %v1788 = vrot.slane %v1787, 2
    %v1789 = vadd.f32 %v1787, %v1788
    %v1790 = vrot.slane %v1789, 1
    %v1791 = vadd.f32 %v1789, %v1790
    %v1792 = vadd.f32 %v1497, %v1501
    %v1793 = vadd.f32 %v1792, %v1507
    %v1794 = vadd.f32 %v1793, %v1511
    %v1795 = vrot.slane %v1794, 4
    %v1796 = vadd.f32 %v1794, %v1795
    %v1797 = vrot.slane %v1796, 2
    %v1798 = vadd.f32 %v1796, %v1797
    %v1799 = vrot.slane %v1798, 1
    %v1800 = vadd.f32 %v1798, %v1799
    %v1801 = vrcp.pop 32.0
    %v1802 = vmul.f32 %v1521, %v1801
    %v1803 = vmul.f32 %v1530, %v1801
    %v1804 = vmul.f32 %v1539, %v1801
    %v1805 = vmul.f32 %v1548, %v1801
    %v1806 = vmul.f32 %v1557, %v1801
    %v1807 = vmul.f32 %v1566, %v1801
    %v1808 = vmul.f32 %v1575, %v1801
    %v1809 = vmul.f32 %v1584, %v1801
    %v1810 = vmul.f32 %v1593, %v1801
    %v1811 = vmul.f32 %v1602, %v1801
    %v1812 = vmul.f32 %v1611, %v1801
    %v1813 = vmul.f32 %v1620, %v1801
    %v1814 = vmul.f32 %v1629, %v1801
    %v1815 = vmul.f32 %v1638, %v1801
    %v1816 = vmul.f32 %v1647, %v1801
    %v1817 = vmul.f32 %v1656, %v1801
    %v1818 = vmul.f32 %v1665, %v1801
    %v1819 = vmul.f32 %v1674, %v1801
    %v1820 = vmul.f32 %v1683, %v1801
    %v1821 = vmul.f32 %v1692, %v1801
    %v1822 = vmul.f32 %v1701, %v1801
    %v1823 = vmul.f32 %v1710, %v1801
    %v1824 = vmul.f32 %v1719, %v1801
    %v1825 = vmul.f32 %v1728, %v1801
    %v1826 = vmul.f32 %v1737, %v1801
    %v1827 = vmul.f32 %v1746, %v1801
    %v1828 = vmul.f32 %v1755, %v1801
    %v1829 = vmul.f32 %v1764, %v1801
    %v1830 = vmul.f32 %v1773, %v1801
    %v1831 = vmul.f32 %v1782, %v1801
    %v1832 = vmul.f32 %v1791, %v1801
    %v1833 = vmul.f32 %v1800, %v1801
    %v1834 = vsub.f32 %v700, %v1802
    %v1835 = vsub.f32 %v702, %v1803
    %v1836 = vsub.f32 %v753, %v1804
    %v1837 = vsub.f32 %v755, %v1805
    %v1838 = vsub.f32 %v806, %v1806
    %v1839 = vsub.f32 %v808, %v1807
    %v1840 = vsub.f32 %v859, %v1808
    %v1841 = vsub.f32 %v861, %v1809
    %v1842 = vsub.f32 %v912, %v1810
    %v1843 = vsub.f32 %v914, %v1811
    %v1844 = vsub.f32 %v965, %v1812
    %v1845 = vsub.f32 %v967, %v1813
    %v1846 = vsub.f32 %v1018, %v1814
    %v1847 = vsub.f32 %v1020, %v1815
    %v1848 = vsub.f32 %v1071, %v1816
    %v1849 = vsub.f32 %v1073, %v1817
    %v1850 = vsub.f32 %v1124, %v1818
    %v1851 = vsub.f32 %v1126, %v1819
    %v1852 = vsub.f32 %v1177, %v1820
    %v1853 = vsub.f32 %v1179, %v1821
    %v1854 = vsub.f32 %v1230, %v1822
    %v1855 = vsub.f32 %v1232, %v1823
    %v1856 = vsub.f32 %v1283, %v1824
    %v1857 = vsub.f32 %v1285, %v1825
    %v1858 = vsub.f32 %v1336, %v1826
    %v1859 = vsub.f32 %v1338, %v1827
    %v1860 = vsub.f32 %v1389, %v1828
    %v1861 = vsub.f32 %v1391, %v1829
    %v1862 = vsub.f32 %v1442, %v1830
    %v1863 = vsub.f32 %v1444, %v1831
    %v1864 = vsub.f32 %v1495, %v1832
    %v1865 = vsub.f32 %v1497, %v1833
    %v1866 = vsub.f32 %v704, %v1802
    %v1867 = vsub.f32 %v706, %v1803
    %v1868 = vsub.f32 %v757, %v1804
    %v1869 = vsub.f32 %v759, %v1805
    %v1870 = vsub.f32 %v810, %v1806
    %v1871 = vsub.f32 %v812, %v1807
    %v1872 = vsub.f32 %v863, %v1808
    %v1873 = vsub.f32 %v865, %v1809
    %v1874 = vsub.f32 %v916, %v1810
    %v1875 = vsub.f32 %v918, %v1811
    %v1876 = vsub.f32 %v969, %v1812
    %v1877 = vsub.f32 %v971, %v1813
    %v1878 = vsub.f32 %v1022, %v1814
    %v1879 = vsub.f32 %v1024, %v1815
    %v1880 = vsub.f32 %v1075, %v1816
    %v1881 = vsub.f32 %v1077, %v1817
    %v1882 = vsub.f32 %v1128, %v1818
    %v1883 = vsub.f32 %v1130, %v1819
    %v1884 = vsub.f32 %v1181, %v1820
    %v1885 = vsub.f32 %v1183, %v1821
    %v1886 = vsub.f32 %v1234, %v1822
    %v1887 = vsub.f32 %v1236, %v1823
    %v1888 = vsub.f32 %v1287, %v1824
    %v1889 = vsub.f32 %v1289, %v1825
    %v1890 = vsub.f32 %v1340, %v1826
    %v1891 = vsub.f32 %v1342, %v1827
    %v1892 = vsub.f32 %v1393, %v1828
    %v1893 = vsub.f32 %v1395, %v1829
    %v1894 = vsub.f32 %v1446, %v1830
    %v1895 = vsub.f32 %v1448, %v1831
    %v1896 = vsub.f32 %v1499, %v1832
    %v1897 = vsub.f32 %v1501, %v1833
    %v1898 = vsub.f32 %v710, %v1802
    %v1899 = vsub.f32 %v712, %v1803
    %v1900 = vsub.f32 %v763, %v1804
    %v1901 = vsub.f32 %v765, %v1805
    %v1902 = vsub.f32 %v816, %v1806
    %v1903 = vsub.f32 %v818, %v1807
    %v1904 = vsub.f32 %v869, %v1808
    %v1905 = vsub.f32 %v871, %v1809
    %v1906 = vsub.f32 %v922, %v1810
    %v1907 = vsub.f32 %v924, %v1811
    %v1908 = vsub.f32 %v975, %v1812
    %v1909 = vsub.f32 %v977, %v1813
    %v1910 = vsub.f32 %v1028, %v1814
    %v1911 = vsub.f32 %v1030, %v1815
    %v1912 = vsub.f32 %v1081, %v1816
    %v1913 = vsub.f32 %v1083, %v1817
    %v1914 = vsub.f32 %v1134, %v1818
    %v1915 = vsub.f32 %v1136, %v1819
    %v1916 = vsub.f32 %v1187, %v1820
    %v1917 = vsub.f32 %v1189, %v1821
    %v1918 = vsub.f32 %v1240, %v1822
    %v1919 = vsub.f32 %v1242, %v1823
    %v1920 = vsub.f32 %v1293, %v1824
    %v1921 = vsub.f32 %v1295, %v1825
    %v1922 = vsub.f32 %v1346, %v1826
    %v1923 = vsub.f32 %v1348, %v1827
    %v1924 = vsub.f32 %v1399, %v1828
    %v1925 = vsub.f32 %v1401, %v1829
    %v1926 = vsub.f32 %v1452, %v1830
    %v1927 = vsub.f32 %v1454, %v1831
    %v1928 = vsub.f32 %v1505, %v1832
    %v1929 = vsub.f32 %v1507, %v1833
    %v1930 = vsub.f32 %v714, %v1802
    %v1931 = vsub.f32 %v716, %v1803
    %v1932 = vsub.f32 %v767, %v1804
    %v1933 = vsub.f32 %v769, %v1805
    %v1934 = vsub.f32 %v820, %v1806
    %v1935 = vsub.f32 %v822, %v1807
    %v1936 = vsub.f32 %v873, %v1808
    %v1937 = vsub.f32 %v875, %v1809
    %v1938 = vsub.f32 %v926, %v1810
    %v1939 = vsub.f32 %v928, %v1811
    %v1940 = vsub.f32 %v979, %v1812
    %v1941 = vsub.f32 %v981, %v1813
    %v1942 = vsub.f32 %v1032, %v1814
    %v1943 = vsub.f32 %v1034, %v1815
    %v1944 = vsub.f32 %v1085, %v1816
    %v1945 = vsub.f32 %v1087, %v1817
    %v1946 = vsub.f32 %v1138, %v1818
    %v1947 = vsub.f32 %v1140, %v1819
    %v1948 = vsub.f32 %v1191, %v1820
    %v1949 = vsub.f32 %v1193, %v1821
    %v1950 = vsub.f32 %v1244, %v1822
    %v1951 = vsub.f32 %v1246, %v1823
    %v1952 = vsub.f32 %v1297, %v1824
    %v1953 = vsub.f32 %v1299, %v1825
    %v1954 = vsub.f32 %v1350, %v1826
    %v1955 = vsub.f32 %v1352, %v1827
    %v1956 = vsub.f32 %v1403, %v1828
    %v1957 = vsub.f32 %v1405, %v1829
    %v1958 = vsub.f32 %v1456, %v1830
    %v1959 = vsub.f32 %v1458, %v1831
    %v1960 = vsub.f32 %v1509, %v1832
    %v1961 = vsub.f32 %v1511, %v1833
    %v1962 = vmul.f32 %v1834, %v1834
    %v1963 = vmul.f32 %v1835, %v1835
    %v1964 = vmul.f32 %v1836, %v1836
    %v1965 = vmul.f32 %v1837, %v1837
    %v1966 = vmul.f32 %v1838, %v1838
    %v1967 = vmul.f32 %v1839, %v1839
    %v1968 = vmul.f32 %v1840, %v1840
    %v1969 = vmul.f32 %v1841, %v1841
    %v1970 = vmul.f32 %v1842, %v1842
    %v1971 = vmul.f32 %v1843, %v1843
    %v1972 = vmul.f32 %v1844, %v1844
    %v1973 = vmul.f32 %v1845, %v1845
    %v1974 = vmul.f32 %v1846, %v1846
    %v1975 = vmul.f32 %v1847, %v1847
    %v1976 = vmul.f32 %v1848, %v1848
    %v1977 = vmul.f32 %v1849, %v1849
    %v1978 = vmul.f32 %v1850, %v1850
    %v1979 = vmul.f32 %v1851, %v1851
    %v1980 = vmul.f32 %v1852, %v1852
    %v1981 = vmul.f32 %v1853, %v1853
    %v1982 = vmul.f32 %v1854, %v1854
    %v1983 = vmul.f32 %v1855, %v1855
    %v1984 = vmul.f32 %v1856, %v1856
    %v1985 = vmul.f32 %v1857, %v1857
    %v1986 = vmul.f32 %v1858, %v1858
    %v1987 = vmul.f32 %v1859, %v1859
    %v1988 = vmul.f32 %v1860, %v1860
    %v1989 = vmul.f32 %v1861, %v1861
    %v1990 = vmul.f32 %v1862, %v1862
    %v1991 = vmul.f32 %v1863, %v1863
    %v1992 = vmul.f32 %v1864, %v1864
    %v1993 = vmul.f32 %v1865, %v1865
    %v1994 = vmul.f32 %v1866, %v1866
    %v1995 = vmul.f32 %v1867, %v1867
    %v1996 = vmul.f32 %v1868, %v1868
    %v1997 = vmul.f32 %v1869, %v1869
    %v1998 = vmul.f32 %v1870, %v1870
    %v1999 = vmul.f32 %v1871, %v1871
    %v2000 = vmul.f32 %v1872, %v1872
    %v2001 = vmul.f32 %v1873, %v1873
    %v2002 = vmul.f32 %v1874, %v1874
    %v2003 = vmul.f32 %v1875, %v1875
    %v2004 = vmul.f32 %v1876, %v1876
    %v2005 = vmul.f32 %v1877, %v1877
    %v2006 = vmul.f32 %v1878, %v1878
    %v2007 = vmul.f32 %v1879, %v1879
    %v2008 = vmul.f32 %v1880, %v1880
    %v2009 = vmul.f32 %v1881, %v1881
    %v2010 = vmul.f32 %v1882, %v1882
    %v2011 = vmul.f32 %v1883, %v1883
    %v2012 = vmul.f32 %v1884, %v1884
    %v2013 = vmul.f32 %v1885, %v1885
    %v2014 = vmul.f32 %v1886, %v1886
    %v2015 = vmul.f32 %v1887, %v1887
    %v2016 = vmul.f32 %v1888, %v1888
    %v2017 = vmul.f32 %v1889, %v1889
    %v2018 = vmul.f32 %v1890, %v1890
    %v2019 = vmul.f32 %v1891, %v1891
    %v2020 = vmul.f32 %v1892, %v1892
    %v2021 = vmul.f32 %v1893, %v1893
    %v2022 = vmul.f32 %v1894, %v1894
    %v2023 = vmul.f32 %v1895, %v1895
    %v2024 = vmul.f32 %v1896, %v1896
    %v2025 = vmul.f32 %v1897, %v1897
    %v2026 = vmul.f32 %v1898, %v1898
    %v2027 = vmul.f32 %v1899, %v1899
    %v2028 = vmul.f32 %v1900, %v1900
    %v2029 = vmul.f32 %v1901, %v1901
    %v2030 = vmul.f32 %v1902, %v1902
    %v2031 = vmul.f32 %v1903, %v1903
    %v2032 = vmul.f32 %v1904, %v1904
    %v2033 = vmul.f32 %v1905, %v1905
    %v2034 = vmul.f32 %v1906, %v1906
    %v2035 = vmul.f32 %v1907, %v1907
    %v2036 = vmul.f32 %v1908, %v1908
    %v2037 = vmul.f32 %v1909, %v1909
    %v2038 = vmul.f32 %v1910, %v1910
    %v2039 = vmul.f32 %v1911, %v1911
    %v2040 = vmul.f32 %v1912, %v1912
    %v2041 = vmul.f32 %v1913, %v1913
    %v2042 = vmul.f32 %v1914, %v1914
    %v2043 = vmul.f32 %v1915, %v1915
    %v2044 = vmul.f32 %v1916, %v1916
    %v2045 = vmul.f32 %v1917, %v1917
    %v2046 = vmul.f32 %v1918, %v1918
    %v2047 = vmul.f32 %v1919, %v1919
    %v2048 = vmul.f32 %v1920, %v1920
    %v2049 = vmul.f32 %v1921, %v1921
    %v2050 = vmul.f32 %v1922, %v1922
    %v2051 = vmul.f32 %v1923, %v1923
    %v2052 = vmul.f32 %v1924, %v1924
    %v2053 = vmul.f32 %v1925, %v1925
    %v2054 = vmul.f32 %v1926, %v1926
    %v2055 = vmul.f32 %v1927, %v1927
    %v2056 = vmul.f32 %v1928, %v1928
    %v2057 = vmul.f32 %v1929, %v1929
    %v2058 = vmul.f32 %v1930, %v1930
    %v2059 = vmul.f32 %v1931, %v1931
    %v2060 = vmul.f32 %v1932, %v1932
    %v2061 = vmul.f32 %v1933, %v1933
    %v2062 = vmul.f32 %v1934, %v1934
    %v2063 = vmul.f32 %v1935, %v1935
    %v2064 = vmul.f32 %v1936, %v1936
    %v2065 = vmul.f32 %v1937, %v1937
    %v2066 = vmul.f32 %v1938, %v1938
    %v2067 = vmul.f32 %v1939, %v1939
    %v2068 = vmul.f32 %v1940, %v1940
    %v2069 = vmul.f32 %v1941, %v1941
    %v2070 = vmul.f32 %v1942, %v1942
    %v2071 = vmul.f32 %v1943, %v1943
    %v2072 = vmul.f32 %v1944, %v1944
    %v2073 = vmul.f32 %v1945, %v1945
    %v2074 = vmul.f32 %v1946, %v1946
    %v2075 = vmul.f32 %v1947, %v1947
    %v2076 = vmul.f32 %v1948, %v1948
    %v2077 = vmul.f32 %v1949, %v1949
    %v2078 = vmul.f32 %v1950, %v1950
    %v2079 = vmul.f32 %v1951, %v1951
    %v2080 = vmul.f32 %v1952, %v1952
    %v2081 = vmul.f32 %v1953, %v1953
    %v2082 = vmul.f32 %v1954, %v1954
    %v2083 = vmul.f32 %v1955, %v1955
    %v2084 = vmul.f32 %v1956, %v1956
    %v2085 = vmul.f32 %v1957, %v1957
    %v2086 = vmul.f32 %v1958, %v1958
    %v2087 = vmul.f32 %v1959, %v1959
    %v2088 = vmul.f32 %v1960, %v1960
    %v2089 = vmul.f32 %v1961, %v1961
    %v2090 = vadd.f32 %v1962, %v1994
    %v2091 = vadd.f32 %v2090, %v2026
    %v2092 = vadd.f32 %v2091, %v2058
    %v2093 = vrot.slane %v2092, 4
    %v2094 = vadd.f32 %v2092, %v2093
    %v2095 = vrot.slane %v2094, 2
    %v2096 = vadd.f32 %v2094, %v2095
    %v2097 = vrot.slane %v2096, 1
    %v2098 = vadd.f32 %v2096, %v2097
    %v2099 = vadd.f32 %v1963, %v1995
    %v2100 = vadd.f32 %v2099, %v2027
    %v2101 = vadd.f32 %v2100, %v2059
    %v2102 = vrot.slane %v2101, 4
    %v2103 = vadd.f32 %v2101, %v2102
    %v2104 = vrot.slane %v2103, 2
    %v2105 = vadd.f32 %v2103, %v2104
    %v2106 = vrot.slane %v2105, 1
    %v2107 = vadd.f32 %v2105, %v2106
    %v2108 = vadd.f32 %v1964, %v1996
    %v2109 = vadd.f32 %v2108, %v2028
    %v2110 = vadd.f32 %v2109, %v2060
    %v2111 = vrot.slane %v2110, 4
    %v2112 = vadd.f32 %v2110, %v2111
    %v2113 = vrot.slane %v2112, 2
    %v2114 = vadd.f32 %v2112, %v2113
    %v2115 = vrot.slane %v2114, 1
    %v2116 = vadd.f32 %v2114, %v2115
    %v2117 = vadd.f32 %v1965, %v1997
    %v2118 = vadd.f32 %v2117, %v2029
    %v2119 = vadd.f32 %v2118, %v2061
    %v2120 = vrot.slane %v2119, 4
    %v2121 = vadd.f32 %v2119, %v2120
    %v2122 = vrot.slane %v2121, 2
    %v2123 = vadd.f32 %v2121, %v2122
    %v2124 = vrot.slane %v2123, 1
    %v2125 = vadd.f32 %v2123, %v2124
    %v2126 = vadd.f32 %v1966, %v1998
    %v2127 = vadd.f32 %v2126, %v2030
    %v2128 = vadd.f32 %v2127, %v2062
    %v2129 = vrot.slane %v2128, 4
    %v2130 = vadd.f32 %v2128, %v2129
    %v2131 = vrot.slane %v2130, 2
    %v2132 = vadd.f32 %v2130, %v2131
    %v2133 = vrot.slane %v2132, 1
    %v2134 = vadd.f32 %v2132, %v2133
    %v2135 = vadd.f32 %v1967, %v1999
    %v2136 = vadd.f32 %v2135, %v2031
    %v2137 = vadd.f32 %v2136, %v2063
    %v2138 = vrot.slane %v2137, 4
    %v2139 = vadd.f32 %v2137, %v2138
    %v2140 = vrot.slane %v2139, 2
    %v2141 = vadd.f32 %v2139, %v2140
    %v2142 = vrot.slane %v2141, 1
    %v2143 = vadd.f32 %v2141, %v2142
    %v2144 = vadd.f32 %v1968, %v2000
    %v2145 = vadd.f32 %v2144, %v2032
    %v2146 = vadd.f32 %v2145, %v2064
    %v2147 = vrot.slane %v2146, 4
    %v2148 = vadd.f32 %v2146, %v2147
    %v2149 = vrot.slane %v2148, 2
    %v2150 = vadd.f32 %v2148, %v2149
    %v2151 = vrot.slane %v2150, 1
    %v2152 = vadd.f32 %v2150, %v2151
    %v2153 = vadd.f32 %v1969, %v2001
    %v2154 = vadd.f32 %v2153, %v2033
    %v2155 = vadd.f32 %v2154, %v2065
    %v2156 = vrot.slane %v2155, 4
    %v2157 = vadd.f32 %v2155, %v2156
    %v2158 = vrot.slane %v2157, 2
    %v2159 = vadd.f32 %v2157, %v2158
    %v2160 = vrot.slane %v2159, 1
    %v2161 = vadd.f32 %v2159, %v2160
    %v2162 = vadd.f32 %v1970, %v2002
    %v2163 = vadd.f32 %v2162, %v2034
    %v2164 = vadd.f32 %v2163, %v2066
    %v2165 = vrot.slane %v2164, 4
    %v2166 = vadd.f32 %v2164, %v2165
    %v2167 = vrot.slane %v2166, 2
    %v2168 = vadd.f32 %v2166, %v2167
    %v2169 = vrot.slane %v2168, 1
    %v2170 = vadd.f32 %v2168, %v2169
    %v2171 = vadd.f32 %v1971, %v2003
    %v2172 = vadd.f32 %v2171, %v2035
    %v2173 = vadd.f32 %v2172, %v2067
    %v2174 = vrot.slane %v2173, 4
    %v2175 = vadd.f32 %v2173, %v2174
    %v2176 = vrot.slane %v2175, 2
    %v2177 = vadd.f32 %v2175, %v2176
    %v2178 = vrot.slane %v2177, 1
    %v2179 = vadd.f32 %v2177, %v2178
    %v2180 = vadd.f32 %v1972, %v2004
    %v2181 = vadd.f32 %v2180, %v2036
    %v2182 = vadd.f32 %v2181, %v2068
    %v2183 = vrot.slane %v2182, 4
    %v2184 = vadd.f32 %v2182, %v2183
    %v2185 = vrot.slane %v2184, 2
    %v2186 = vadd.f32 %v2184, %v2185
    %v2187 = vrot.slane %v2186, 1
    %v2188 = vadd.f32 %v2186, %v2187
    %v2189 = vadd.f32 %v1973, %v2005
    %v2190 = vadd.f32 %v2189, %v2037
    %v2191 = vadd.f32 %v2190, %v2069
    %v2192 = vrot.slane %v2191, 4
    %v2193 = vadd.f32 %v2191, %v2192
    %v2194 = vrot.slane %v2193, 2
    %v2195 = vadd.f32 %v2193, %v2194
    %v2196 = vrot.slane %v2195, 1
    %v2197 = vadd.f32 %v2195, %v2196
    %v2198 = vadd.f32 %v1974, %v2006
    %v2199 = vadd.f32 %v2198, %v2038
    %v2200 = vadd.f32 %v2199, %v2070
    %v2201 = vrot.slane %v2200, 4
    %v2202 = vadd.f32 %v2200, %v2201
    %v2203 = vrot.slane %v2202, 2
    %v2204 = vadd.f32 %v2202, %v2203
    %v2205 = vrot.slane %v2204, 1
    %v2206 = vadd.f32 %v2204, %v2205
    %v2207 = vadd.f32 %v1975, %v2007
    %v2208 = vadd.f32 %v2207, %v2039
    %v2209 = vadd.f32 %v2208, %v2071
    %v2210 = vrot.slane %v2209, 4
    %v2211 = vadd.f32 %v2209, %v2210
    %v2212 = vrot.slane %v2211, 2
    %v2213 = vadd.f32 %v2211, %v2212
    %v2214 = vrot.slane %v2213, 1
    %v2215 = vadd.f32 %v2213, %v2214
    %v2216 = vadd.f32 %v1976, %v2008
    %v2217 = vadd.f32 %v2216, %v2040
    %v2218 = vadd.f32 %v2217, %v2072
    %v2219 = vrot.slane %v2218, 4
    %v2220 = vadd.f32 %v2218, %v2219
    %v2221 = vrot.slane %v2220, 2
    %v2222 = vadd.f32 %v2220, %v2221
    %v2223 = vrot.slane %v2222, 1
    %v2224 = vadd.f32 %v2222, %v2223
    %v2225 = vadd.f32 %v1977, %v2009
    %v2226 = vadd.f32 %v2225, %v2041
    %v2227 = vadd.f32 %v2226, %v2073
    %v2228 = vrot.slane %v2227, 4
    %v2229 = vadd.f32 %v2227, %v2228
    %v2230 = vrot.slane %v2229, 2
    %v2231 = vadd.f32 %v2229, %v2230
    %v2232 = vrot.slane %v2231, 1
    %v2233 = vadd.f32 %v2231, %v2232
    %v2234 = vadd.f32 %v1978, %v2010
    %v2235 = vadd.f32 %v2234, %v2042
    %v2236 = vadd.f32 %v2235, %v2074
    %v2237 = vrot.slane %v2236, 4
    %v2238 = vadd.f32 %v2236, %v2237
    %v2239 = vrot.slane %v2238, 2
    %v2240 = vadd.f32 %v2238, %v2239
    %v2241 = vrot.slane %v2240, 1
    %v2242 = vadd.f32 %v2240, %v2241
    %v2243 = vadd.f32 %v1979, %v2011
    %v2244 = vadd.f32 %v2243, %v2043
    %v2245 = vadd.f32 %v2244, %v2075
    %v2246 = vrot.slane %v2245, 4
    %v2247 = vadd.f32 %v2245, %v2246
    %v2248 = vrot.slane %v2247, 2
    %v2249 = vadd.f32 %v2247, %v2248
    %v2250 = vrot.slane %v2249, 1
    %v2251 = vadd.f32 %v2249, %v2250
    %v2252 = vadd.f32 %v1980, %v2012
    %v2253 = vadd.f32 %v2252, %v2044
    %v2254 = vadd.f32 %v2253, %v2076
    %v2255 = vrot.slane %v2254, 4
    %v2256 = vadd.f32 %v2254, %v2255
    %v2257 = vrot.slane %v2256, 2
    %v2258 = vadd.f32 %v2256, %v2257
    %v2259 = vrot.slane %v2258, 1
    %v2260 = vadd.f32 %v2258, %v2259
    %v2261 = vadd.f32 %v1981, %v2013
    %v2262 = vadd.f32 %v2261, %v2045
    %v2263 = vadd.f32 %v2262, %v2077
    %v2264 = vrot.slane %v2263, 4
    %v2265 = vadd.f32 %v2263, %v2264
    %v2266 = vrot.slane %v2265, 2
    %v2267 = vadd.f32 %v2265, %v2266
    %v2268 = vrot.slane %v2267, 1
    %v2269 = vadd.f32 %v2267, %v2268
    %v2270 = vadd.f32 %v1982, %v2014
    %v2271 = vadd.f32 %v2270, %v2046
    %v2272 = vadd.f32 %v2271, %v2078
    %v2273 = vrot.slane %v2272, 4
    %v2274 = vadd.f32 %v2272, %v2273
    %v2275 = vrot.slane %v2274, 2
    %v2276 = vadd.f32 %v2274, %v2275
    %v2277 = vrot.slane %v2276, 1
    %v2278 = vadd.f32 %v2276, %v2277
    %v2279 = vadd.f32 %v1983, %v2015
    %v2280 = vadd.f32 %v2279, %v2047
    %v2281 = vadd.f32 %v2280, %v2079
    %v2282 = vrot.slane %v2281, 4
    %v2283 = vadd.f32 %v2281, %v2282
    %v2284 = vrot.slane %v2283, 2
    %v2285 = vadd.f32 %v2283, %v2284
    %v2286 = vrot.slane %v2285, 1
    %v2287 = vadd.f32 %v2285, %v2286
    %v2288 = vadd.f32 %v1984, %v2016
    %v2289 = vadd.f32 %v2288, %v2048
    %v2290 = vadd.f32 %v2289, %v2080
    %v2291 = vrot.slane %v2290, 4
    %v2292 = vadd.f32 %v2290, %v2291
    %v2293 = vrot.slane %v2292, 2
    %v2294 = vadd.f32 %v2292, %v2293
    %v2295 = vrot.slane %v2294, 1
    %v2296 = vadd.f32 %v2294, %v2295
    %v2297 = vadd.f32 %v1985, %v2017
    %v2298 = vadd.f32 %v2297, %v2049
    %v2299 = vadd.f32 %v2298, %v2081
    %v2300 = vrot.slane %v2299, 4
    %v2301 = vadd.f32 %v2299, %v2300
    %v2302 = vrot.slane %v2301, 2
    %v2303 = vadd.f32 %v2301, %v2302
    %v2304 = vrot.slane %v2303, 1
    %v2305 = vadd.f32 %v2303, %v2304
    %v2306 = vadd.f32 %v1986, %v2018
    %v2307 = vadd.f32 %v2306, %v2050
    %v2308 = vadd.f32 %v2307, %v2082
    %v2309 = vrot.slane %v2308, 4
    %v2310 = vadd.f32 %v2308, %v2309
    %v2311 = vrot.slane %v2310, 2
    %v2312 = vadd.f32 %v2310, %v2311
    %v2313 = vrot.slane %v2312, 1
    %v2314 = vadd.f32 %v2312, %v2313
    %v2315 = vadd.f32 %v1987, %v2019
    %v2316 = vadd.f32 %v2315, %v2051
    %v2317 = vadd.f32 %v2316, %v2083
    %v2318 = vrot.slane %v2317, 4
    %v2319 = vadd.f32 %v2317, %v2318
    %v2320 = vrot.slane %v2319, 2
    %v2321 = vadd.f32 %v2319, %v2320
    %v2322 = vrot.slane %v2321, 1
    %v2323 = vadd.f32 %v2321, %v2322
    %v2324 = vadd.f32 %v1988, %v2020
    %v2325 = vadd.f32 %v2324, %v2052
    %v2326 = vadd.f32 %v2325, %v2084
    %v2327 = vrot.slane %v2326, 4
    %v2328 = vadd.f32 %v2326, %v2327
    %v2329 = vrot.slane %v2328, 2
    %v2330 = vadd.f32 %v2328, %v2329
    %v2331 = vrot.slane %v2330, 1
    %v2332 = vadd.f32 %v2330, %v2331
    %v2333 = vadd.f32 %v1989, %v2021
    %v2334 = vadd.f32 %v2333, %v2053
    %v2335 = vadd.f32 %v2334, %v2085
    %v2336 = vrot.slane %v2335, 4
    %v2337 = vadd.f32 %v2335, %v2336
    %v2338 = vrot.slane %v2337, 2
    %v2339 = vadd.f32 %v2337, %v2338
    %v2340 = vrot.slane %v2339, 1
    %v2341 = vadd.f32 %v2339, %v2340
    %v2342 = vadd.f32 %v1990, %v2022
    %v2343 = vadd.f32 %v2342, %v2054
    %v2344 = vadd.f32 %v2343, %v2086
    %v2345 = vrot.slane %v2344, 4
    %v2346 = vadd.f32 %v2344, %v2345
    %v2347 = vrot.slane %v2346, 2
    %v2348 = vadd.f32 %v2346, %v2347
    %v2349 = vrot.slane %v2348, 1
    %v2350 = vadd.f32 %v2348, %v2349
    %v2351 = vadd.f32 %v1991, %v2023
    %v2352 = vadd.f32 %v2351, %v2055
    %v2353 = vadd.f32 %v2352, %v2087
    %v2354 = vrot.slane %v2353, 4
    %v2355 = vadd.f32 %v2353, %v2354
    %v2356 = vrot.slane %v2355, 2
    %v2357 = vadd.f32 %v2355, %v2356
    %v2358 = vrot.slane %v2357, 1
    %v2359 = vadd.f32 %v2357, %v2358
    %v2360 = vadd.f32 %v1992, %v2024
    %v2361 = vadd.f32 %v2360, %v2056
    %v2362 = vadd.f32 %v2361, %v2088
    %v2363 = vrot.slane %v2362, 4
    %v2364 = vadd.f32 %v2362, %v2363
    %v2365 = vrot.slane %v2364, 2
    %v2366 = vadd.f32 %v2364, %v2365
    %v2367 = vrot.slane %v2366, 1
    %v2368 = vadd.f32 %v2366, %v2367
    %v2369 = vadd.f32 %v1993, %v2025
    %v2370 = vadd.f32 %v2369, %v2057
    %v2371 = vadd.f32 %v2370, %v2089
    %v2372 = vrot.slane %v2371, 4
    %v2373 = vadd.f32 %v2371, %v2372
    %v2374 = vrot.slane %v2373, 2
    %v2375 = vadd.f32 %v2373, %v2374
    %v2376 = vrot.slane %v2375, 1
    %v2377 = vadd.f32 %v2375, %v2376
    %v2378 = vmul.f32 %v2098, %v1801
    %v2379 = vmul.f32 %v2107, %v1801
    %v2380 = vmul.f32 %v2116, %v1801
    %v2381 = vmul.f32 %v2125, %v1801
    %v2382 = vmul.f32 %v2134, %v1801
    %v2383 = vmul.f32 %v2143, %v1801
    %v2384 = vmul.f32 %v2152, %v1801
    %v2385 = vmul.f32 %v2161, %v1801
    %v2386 = vmul.f32 %v2170, %v1801
    %v2387 = vmul.f32 %v2179, %v1801
    %v2388 = vmul.f32 %v2188, %v1801
    %v2389 = vmul.f32 %v2197, %v1801
    %v2390 = vmul.f32 %v2206, %v1801
    %v2391 = vmul.f32 %v2215, %v1801
    %v2392 = vmul.f32 %v2224, %v1801
    %v2393 = vmul.f32 %v2233, %v1801
    %v2394 = vmul.f32 %v2242, %v1801
    %v2395 = vmul.f32 %v2251, %v1801
    %v2396 = vmul.f32 %v2260, %v1801
    %v2397 = vmul.f32 %v2269, %v1801
    %v2398 = vmul.f32 %v2278, %v1801
    %v2399 = vmul.f32 %v2287, %v1801
    %v2400 = vmul.f32 %v2296, %v1801
    %v2401 = vmul.f32 %v2305, %v1801
    %v2402 = vmul.f32 %v2314, %v1801
    %v2403 = vmul.f32 %v2323, %v1801
    %v2404 = vmul.f32 %v2332, %v1801
    %v2405 = vmul.f32 %v2341, %v1801
    %v2406 = vmul.f32 %v2350, %v1801
    %v2407 = vmul.f32 %v2359, %v1801
    %v2408 = vmul.f32 %v2368, %v1801
    %v2409 = vmul.f32 %v2377, %v1801
    %v2410 = vadd.f32 %v2378, 1e-05
    %v2411 = vadd.f32 %v2379, 1e-05
    %v2412 = vadd.f32 %v2380, 1e-05
    %v2413 = vadd.f32 %v2381, 1e-05
    %v2414 = vadd.f32 %v2382, 1e-05
    %v2415 = vadd.f32 %v2383, 1e-05
    %v2416 = vadd.f32 %v2384, 1e-05
    %v2417 = vadd.f32 %v2385, 1e-05
    %v2418 = vadd.f32 %v2386, 1e-05
    %v2419 = vadd.f32 %v2387, 1e-05
    %v2420 = vadd.f32 %v2388, 1e-05
    %v2421 = vadd.f32 %v2389, 1e-05
    %v2422 = vadd.f32 %v2390, 1e-05
    %v2423 = vadd.f32 %v2391, 1e-05
    %v2424 = vadd.f32 %v2392, 1e-05
    %v2425 = vadd.f32 %v2393, 1e-05
    %v2426 = vadd.f32 %v2394, 1e-05
    %v2427 = vadd.f32 %v2395, 1e-05
    %v2428 = vadd.f32 %v2396, 1e-05
    %v2429 = vadd.f32 %v2397, 1e-05
    %v2430 = vadd.f32 %v2398, 1e-05
    %v2431 = vadd.f32 %v2399, 1e-05
    %v2432 = vadd.f32 %v2400, 1e-05
    %v2433 = vadd.f32 %v2401, 1e-05
    %v2434 = vadd.f32 %v2402, 1e-05
    %v2435 = vadd.f32 %v2403, 1e-05
    %v2436 = vadd.f32 %v2404, 1e-05
    %v2437 = vadd.f32 %v2405, 1e-05
    %v2438 = vadd.f32 %v2406, 1e-05
    %v2439 = vadd.f32 %v2407, 1e-05
    %v2440 = vadd.f32 %v2408, 1e-05
    %v2441 = vadd.f32 %v2409, 1e-05
    %v2442 = vrsqrt.pop %v2410
    %v2443 = vrsqrt.pop %v2411
    %v2444 = vrsqrt.pop %v2412
    %v2445 = vrsqrt.pop %v2413
    %v2446 = vrsqrt.pop %v2414
    %v2447 = vrsqrt.pop %v2415
    %v2448 = vrsqrt.pop %v2416
    %v2449 = vrsqrt.pop %v2417
    %v2450 = vrsqrt.pop %v2418
    %v2451 = vrsqrt.pop %v2419
    %v2452 = vrsqrt.pop %v2420
    %v2453 = vrsqrt.pop %v2421
    %v2454 = vrsqrt.pop %v2422
    %v2455 = vrsqrt.pop %v2423
    %v2456 = vrsqrt.pop %v2424
    %v2457 = vrsqrt.pop %v2425
    %v2458 = vrsqrt.pop %v2426
    %v2459 = vrsqrt.pop %v2427
    %v2460 = vrsqrt.pop %v2428
    %v2461 = vrsqrt.pop %v2429
    %v2462 = vrsqrt.pop %v2430
    %v2463 = vrsqrt.pop %v2431
    %v2464 = vrsqrt.pop %v2432
    %v2465 = vrsqrt.pop %v2433
    %v2466 = vrsqrt.pop %v2434
    %v2467 = vrsqrt.pop %v2435
    %v2468 = vrsqrt.pop %v2436
    %v2469 = vrsqrt.pop %v2437
    %v2470 = vrsqrt.pop %v2438
    %v2471 = vrsqrt.pop %v2439
    %v2472 = vrsqrt.pop %v2440
    %v2473 = vrsqrt.pop %v2441
    %v2474 = vmul.f32 %v1834, %v2442
    %v2475 = vmul.f32 %v1835, %v2443
    %v2476 = vmul.f32 %v1836, %v2444
    %v2477 = vmul.f32 %v1837, %v2445
    %v2478 = vmul.f32 %v1838, %v2446
    %v2479 = vmul.f32 %v1839, %v2447
    %v2480 = vmul.f32 %v1840, %v2448
    %v2481 = vmul.f32 %v1841, %v2449
    %v2482 = vmul.f32 %v1842, %v2450
    %v2483 = vmul.f32 %v1843, %v2451
    %v2484 = vmul.f32 %v1844, %v2452
    %v2485 = vmul.f32 %v1845, %v2453
    %v2486 = vmul.f32 %v1846, %v2454
    %v2487 = vmul.f32 %v1847, %v2455
    %v2488 = vmul.f32 %v1848, %v2456
    %v2489 = vmul.f32 %v1849, %v2457
    %v2490 = vmul.f32 %v1850, %v2458
    %v2491 = vmul.f32 %v1851, %v2459
    %v2492 = vmul.f32 %v1852, %v2460
    %v2493 = vmul.f32 %v1853, %v2461
    %v2494 = vmul.f32 %v1854, %v2462
    %v2495 = vmul.f32 %v1855, %v2463
    %v2496 = vmul.f32 %v1856, %v2464
    %v2497 = vmul.f32 %v1857, %v2465
    %v2498 = vmul.f32 %v1858, %v2466
    %v2499 = vmul.f32 %v1859, %v2467
    %v2500 = vmul.f32 %v1860, %v2468
    %v2501 = vmul.f32 %v1861, %v2469
    %v2502 = vmul.f32 %v1862, %v2470
    %v2503 = vmul.f32 %v1863, %v2471
    %v2504 = vmul.f32 %v1864, %v2472
    %v2505 = vmul.f32 %v1865, %v2473
    %v2506 = vmul.f32 %v1866, %v2442
    %v2507 = vmul.f32 %v1867, %v2443
    %v2508 = vmul.f32 %v1868, %v2444
    %v2509 = vmul.f32 %v1869, %v2445
    %v2510 = vmul.f32 %v1870, %v2446
    %v2511 = vmul.f32 %v1871, %v2447
    %v2512 = vmul.f32 %v1872, %v2448
    %v2513 = vmul.f32 %v1873, %v2449
    %v2514 = vmul.f32 %v1874, %v2450
    %v2515 = vmul.f32 %v1875, %v2451
    %v2516 = vmul.f32 %v1876, %v2452
    %v2517 = vmul.f32 %v1877, %v2453
    %v2518 = vmul.f32 %v1878, %v2454
    %v2519 = vmul.f32 %v1879, %v2455
    %v2520 = vmul.f32 %v1880, %v2456
    %v2521 = vmul.f32 %v1881, %v2457
    %v2522 = vmul.f32 %v1882, %v2458
    %v2523 = vmul.f32 %v1883, %v2459
    %v2524 = vmul.f32 %v1884, %v2460
    %v2525 = vmul.f32 %v1885, %v2461
    %v2526 = vmul.f32 %v1886, %v2462
    %v2527 = vmul.f32 %v1887, %v2463
    %v2528 = vmul.f32 %v1888, %v2464
    %v2529 = vmul.f32 %v1889, %v2465
    %v2530 = vmul.f32 %v1890, %v2466
    %v2531 = vmul.f32 %v1891, %v2467
    %v2532 = vmul.f32 %v1892, %v2468
    %v2533 = vmul.f32 %v1893, %v2469
    %v2534 = vmul.f32 %v1894, %v2470
    %v2535 = vmul.f32 %v1895, %v2471
    %v2536 = vmul.f32 %v1896, %v2472
    %v2537 = vmul.f32 %v1897, %v2473
    %v2538 = vmul.f32 %v1898, %v2442
    %v2539 = vmul.f32 %v1899, %v2443
    %v2540 = vmul.f32 %v1900, %v2444
    %v2541 = vmul.f32 %v1901, %v2445
    %v2542 = vmul.f32 %v1902, %v2446
    %v2543 = vmul.f32 %v1903, %v2447
    %v2544 = vmul.f32 %v1904, %v2448
    %v2545 = vmul.f32 %v1905, %v2449
    %v2546 = vmul.f32 %v1906, %v2450
    %v2547 = vmul.f32 %v1907, %v2451
    %v2548 = vmul.f32 %v1908, %v2452
    %v2549 = vmul.f32 %v1909, %v2453
    %v2550 = vmul.f32 %v1910, %v2454
    %v2551 = vmul.f32 %v1911, %v2455
    %v2552 = vmul.f32 %v1912, %v2456
    %v2553 = vmul.f32 %v1913, %v2457
    %v2554 = vmul.f32 %v1914, %v2458
    %v2555 = vmul.f32 %v1915, %v2459
    %v2556 = vmul.f32 %v1916, %v2460
    %v2557 = vmul.f32 %v1917, %v2461
    %v2558 = vmul.f32 %v1918, %v2462
    %v2559 = vmul.f32 %v1919, %v2463
    %v2560 = vmul.f32 %v1920, %v2464
    %v2561 = vmul.f32 %v1921, %v2465
    %v2562 = vmul.f32 %v1922, %v2466
    %v2563 = vmul.f32 %v1923, %v2467
    %v2564 = vmul.f32 %v1924, %v2468
    %v2565 = vmul.f32 %v1925, %v2469
    %v2566 = vmul.f32 %v1926, %v2470
    %v2567 = vmul.f32 %v1927, %v2471
    %v2568 = vmul.f32 %v1928, %v2472
    %v2569 = vmul.f32 %v1929, %v2473
    %v2570 = vmul.f32 %v1930, %v2442
    %v2571 = vmul.f32 %v1931, %v2443
    %v2572 = vmul.f32 %v1932, %v2444
    %v2573 = vmul.f32 %v1933, %v2445
    %v2574 = vmul.f32 %v1934, %v2446
    %v2575 = vmul.f32 %v1935, %v2447
    %v2576 = vmul.f32 %v1936, %v2448
    %v2577 = vmul.f32 %v1937, %v2449
    %v2578 = vmul.f32 %v1938, %v2450
    %v2579 = vmul.f32 %v1939, %v2451
    %v2580 = vmul.f32 %v1940, %v2452
    %v2581 = vmul.f32 %v1941, %v2453
    %v2582 = vmul.f32 %v1942, %v2454
    %v2583 = vmul.f32 %v1943, %v2455
    %v2584 = vmul.f32 %v1944, %v2456
    %v2585 = vmul.f32 %v1945, %v2457
    %v2586 = vmul.f32 %v1946, %v2458
    %v2587 = vmul.f32 %v1947, %v2459
    %v2588 = vmul.f32 %v1948, %v2460
    %v2589 = vmul.f32 %v1949, %v2461
    %v2590 = vmul.f32 %v1950, %v2462
    %v2591 = vmul.f32 %v1951, %v2463
    %v2592 = vmul.f32 %v1952, %v2464
    %v2593 = vmul.f32 %v1953, %v2465
    %v2594 = vmul.f32 %v1954, %v2466
    %v2595 = vmul.f32 %v1955, %v2467
    %v2596 = vmul.f32 %v1956, %v2468
    %v2597 = vmul.f32 %v1957, %v2469
    %v2598 = vmul.f32 %v1958, %v2470
    %v2599 = vmul.f32 %v1959, %v2471
    %v2600 = vmul.f32 %v1960, %v2472
    %v2601 = vmul.f32 %v1961, %v2473
    %v2602 = vld [vmem:[%s3] sm:$0xff]
    %v2603 = vld [vmem:[%s3 + $0x8] sm:$0xff]
    %v2604 = vld [vmem:[%s3 + $0x10] sm:$0xff]
    %v2605 = vld [vmem:[%s3 + $0x18] sm:$0xff]
    %v2610 = vlaneseq
    %v2611 = vshrl.u32 %v2610, 7
    %v2612 = vsub.s32 0, %v2611
    %v2613 = vrot.slane %v2602, %v2612
    %v2614 = vlaneseq
    %v2615 = vshrl.u32 %v2614, 7
    %v2616 = vsub.s32 1, %v2615
    %v2617 = vrot.slane %v2602, %v2616
    %v2618 = vlaneseq
    %v2619 = vshrl.u32 %v2618, 7
    %v2620 = vsub.s32 2, %v2619
    %v2621 = vrot.slane %v2602, %v2620
    %v2622 = vlaneseq
    %v2623 = vshrl.u32 %v2622, 7
    %v2624 = vsub.s32 3, %v2623
    %v2625 = vrot.slane %v2602, %v2624
    %v2626 = vlaneseq
    %v2627 = vshrl.u32 %v2626, 7
    %v2628 = vsub.s32 4, %v2627
    %v2629 = vrot.slane %v2602, %v2628
    %v2630 = vlaneseq
    %v2631 = vshrl.u32 %v2630, 7
    %v2632 = vsub.s32 5, %v2631
    %v2633 = vrot.slane %v2602, %v2632
    %v2634 = vlaneseq
    %v2635 = vshrl.u32 %v2634, 7
    %v2636 = vsub.s32 6, %v2635
    %v2637 = vrot.slane %v2602, %v2636
    %v2638 = vlaneseq
    %v2639 = vshrl.u32 %v2638, 7
    %v2640 = vsub.s32 7, %v2639
    %v2641 = vrot.slane %v2602, %v2640
    %v2642 = vlaneseq
    %v2643 = vshrl.u32 %v2642, 7
    %v2644 = vsub.s32 0, %v2643
    %v2645 = vrot.slane %v2603, %v2644
    %v2646 = vlaneseq
    %v2647 = vshrl.u32 %v2646, 7
    %v2648 = vsub.s32 1, %v2647
    %v2649 = vrot.slane %v2603, %v2648
    %v2650 = vlaneseq
    %v2651 = vshrl.u32 %v2650, 7
    %v2652 = vsub.s32 2, %v2651
    %v2653 = vrot.slane %v2603, %v2652
    %v2654 = vlaneseq
    %v2655 = vshrl.u32 %v2654, 7
    %v2656 = vsub.s32 3, %v2655
    %v2657 = vrot.slane %v2603, %v2656
    %v2658 = vlaneseq
    %v2659 = vshrl.u32 %v2658, 7
    %v2660 = vsub.s32 4, %v2659
    %v2661 = vrot.slane %v2603, %v2660
    %v2662 = vlaneseq
    %v2663 = vshrl.u32 %v2662, 7
    %v2664 = vsub.s32 5, %v2663
    %v2665 = vrot.slane %v2603, %v2664
    %v2666 = vlaneseq
    %v2667 = vshrl.u32 %v2666, 7
    %v2668 = vsub.s32 6, %v2667
    %v2669 = vrot.slane %v2603, %v2668
    %v2670 = vlaneseq
    %v2671 = vshrl.u32 %v2670, 7
    %v2672 = vsub.s32 7, %v2671
    %v2673 = vrot.slane %v2603, %v2672
    %v2674 = vlaneseq
    %v2675 = vshrl.u32 %v2674, 7
    %v2676 = vsub.s32 0, %v2675
    %v2677 = vrot.slane %v2604, %v2676
    %v2678 = vlaneseq
    %v2679 = vshrl.u32 %v2678, 7
    %v2680 = vsub.s32 1, %v2679
    %v2681 = vrot.slane %v2604, %v2680
    %v2682 = vlaneseq
    %v2683 = vshrl.u32 %v2682, 7
    %v2684 = vsub.s32 2, %v2683
    %v2685 = vrot.slane %v2604, %v2684
    %v2686 = vlaneseq
    %v2687 = vshrl.u32 %v2686, 7
    %v2688 = vsub.s32 3, %v2687
    %v2689 = vrot.slane %v2604, %v2688
    %v2690 = vlaneseq
    %v2691 = vshrl.u32 %v2690, 7
    %v2692 = vsub.s32 4, %v2691
    %v2693 = vrot.slane %v2604, %v2692
    %v2694 = vlaneseq
    %v2695 = vshrl.u32 %v2694, 7
    %v2696 = vsub.s32 5, %v2695
    %v2697 = vrot.slane %v2604, %v2696
    %v2698 = vlaneseq
    %v2699 = vshrl.u32 %v2698, 7
    %v2700 = vsub.s32 6, %v2699
    %v2701 = vrot.slane %v2604, %v2700
    %v2702 = vlaneseq
    %v2703 = vshrl.u32 %v2702, 7
    %v2704 = vsub.s32 7, %v2703
    %v2705 = vrot.slane %v2604, %v2704
    %v2706 = vlaneseq
    %v2707 = vshrl.u32 %v2706, 7
    %v2708 = vsub.s32 0, %v2707
    %v2709 = vrot.slane %v2605, %v2708
    %v2710 = vlaneseq
    %v2711 = vshrl.u32 %v2710, 7
    %v2712 = vsub.s32 1, %v2711
    %v2713 = vrot.slane %v2605, %v2712
    %v2714 = vlaneseq
    %v2715 = vshrl.u32 %v2714, 7
    %v2716 = vsub.s32 2, %v2715
    %v2717 = vrot.slane %v2605, %v2716
    %v2718 = vlaneseq
    %v2719 = vshrl.u32 %v2718, 7
    %v2720 = vsub.s32 3, %v2719
    %v2721 = vrot.slane %v2605, %v2720
    %v2722 = vlaneseq
    %v2723 = vshrl.u32 %v2722, 7
    %v2724 = vsub.s32 4, %v2723
    %v2725 = vrot.slane %v2605, %v2724
    %v2726 = vlaneseq
    %v2727 = vshrl.u32 %v2726, 7
    %v2728 = vsub.s32 5, %v2727
    %v2729 = vrot.slane %v2605, %v2728
    %v2730 = vlaneseq
    %v2731 = vshrl.u32 %v2730, 7
    %v2732 = vsub.s32 6, %v2731
    %v2733 = vrot.slane %v2605, %v2732
    %v2734 = vlaneseq
    %v2735 = vshrl.u32 %v2734, 7
    %v2736 = vsub.s32 7, %v2735
    %v2737 = vrot.slane %v2605, %v2736
    %v2770 = vmul.f32 %v2474, %v2613
    %v2771 = vmul.f32 %v2475, %v2617
    %v2772 = vmul.f32 %v2476, %v2621
    %v2773 = vmul.f32 %v2477, %v2625
    %v2774 = vmul.f32 %v2478, %v2629
    %v2775 = vmul.f32 %v2479, %v2633
    %v2776 = vmul.f32 %v2480, %v2637
    %v2777 = vmul.f32 %v2481, %v2641
    %v2778 = vmul.f32 %v2482, %v2645
    %v2779 = vmul.f32 %v2483, %v2649
    %v2780 = vmul.f32 %v2484, %v2653
    %v2781 = vmul.f32 %v2485, %v2657
    %v2782 = vmul.f32 %v2486, %v2661
    %v2783 = vmul.f32 %v2487, %v2665
    %v2784 = vmul.f32 %v2488, %v2669
    %v2785 = vmul.f32 %v2489, %v2673
    %v2786 = vmul.f32 %v2490, %v2677
    %v2787 = vmul.f32 %v2491, %v2681
    %v2788 = vmul.f32 %v2492, %v2685
    %v2789 = vmul.f32 %v2493, %v2689
    %v2790 = vmul.f32 %v2494, %v2693
    %v2791 = vmul.f32 %v2495, %v2697
    %v2792 = vmul.f32 %v2496, %v2701
    %v2793 = vmul.f32 %v2497, %v2705
    %v2794 = vmul.f32 %v2498, %v2709
    %v2795 = vmul.f32 %v2499, %v2713
    %v2796 = vmul.f32 %v2500, %v2717
    %v2797 = vmul.f32 %v2501, %v2721
    %v2798 = vmul.f32 %v2502, %v2725
    %v2799 = vmul.f32 %v2503, %v2729
    %v2800 = vmul.f32 %v2504, %v2733
    %v2801 = vmul.f32 %v2505, %v2737
    %v2802 = vmul.f32 %v2506, %v2613
    %v2803 = vmul.f32 %v2507, %v2617
    %v2804 = vmul.f32 %v2508, %v2621
    %v2805 = vmul.f32 %v2509, %v2625
    %v2806 = vmul.f32 %v2510, %v2629
    %v2807 = vmul.f32 %v2511, %v2633
    %v2808 = vmul.f32 %v2512, %v2637
    %v2809 = vmul.f32 %v2513, %v2641
    %v2810 = vmul.f32 %v2514, %v2645
    %v2811 = vmul.f32 %v2515, %v2649
    %v2812 = vmul.f32 %v2516, %v2653
    %v2813 = vmul.f32 %v2517, %v2657
    %v2814 = vmul.f32 %v2518, %v2661
    %v2815 = vmul.f32 %v2519, %v2665
    %v2816 = vmul.f32 %v2520, %v2669
    %v2817 = vmul.f32 %v2521, %v2673
    %v2818 = vmul.f32 %v2522, %v2677
    %v2819 = vmul.f32 %v2523, %v2681
    %v2820 = vmul.f32 %v2524, %v2685
    %v2821 = vmul.f32 %v2525, %v2689
    %v2822 = vmul.f32 %v2526, %v2693
    %v2823 = vmul.f32 %v2527, %v2697
    %v2824 = vmul.f32 %v2528, %v2701
    %v2825 = vmul.f32 %v2529, %v2705
    %v2826 = vmul.f32 %v2530, %v2709
    %v2827 = vmul.f32 %v2531, %v2713
    %v2828 = vmul.f32 %v2532, %v2717
    %v2829 = vmul.f32 %v2533, %v2721
    %v2830 = vmul.f32 %v2534, %v2725
    %v2831 = vmul.f32 %v2535, %v2729
    %v2832 = vmul.f32 %v2536, %v2733
    %v2833 = vmul.f32 %v2537, %v2737
    %v2834 = vmul.f32 %v2538, %v2613
    %v2835 = vmul.f32 %v2539, %v2617
    %v2836 = vmul.f32 %v2540, %v2621
    %v2837 = vmul.f32 %v2541, %v2625
    %v2838 = vmul.f32 %v2542, %v2629
    %v2839 = vmul.f32 %v2543, %v2633
    %v2840 = vmul.f32 %v2544, %v2637
    %v2841 = vmul.f32 %v2545, %v2641
    %v2842 = vmul.f32 %v2546, %v2645
    %v2843 = vmul.f32 %v2547, %v2649
    %v2844 = vmul.f32 %v2548, %v2653
    %v2845 = vmul.f32 %v2549, %v2657
    %v2846 = vmul.f32 %v2550, %v2661
    %v2847 = vmul.f32 %v2551, %v2665
    %v2848 = vmul.f32 %v2552, %v2669
    %v2849 = vmul.f32 %v2553, %v2673
    %v2850 = vmul.f32 %v2554, %v2677
    %v2851 = vmul.f32 %v2555, %v2681
    %v2852 = vmul.f32 %v2556, %v2685
    %v2853 = vmul.f32 %v2557, %v2689
    %v2854 = vmul.f32 %v2558, %v2693
    %v2855 = vmul.f32 %v2559, %v2697
    %v2856 = vmul.f32 %v2560, %v2701
    %v2857 = vmul.f32 %v2561, %v2705
    %v2858 = vmul.f32 %v2562, %v2709
    %v2859 = vmul.f32 %v2563, %v2713
    %v2860 = vmul.f32 %v2564, %v2717
    %v2861 = vmul.f32 %v2565, %v2721
    %v2862 = vmul.f32 %v2566, %v2725
    %v2863 = vmul.f32 %v2567, %v2729
    %v2864 = vmul.f32 %v2568, %v2733
    %v2865 = vmul.f32 %v2569, %v2737
    %v2866 = vmul.f32 %v2570, %v2613
    %v2867 = vmul.f32 %v2571, %v2617
    %v2868 = vmul.f32 %v2572, %v2621
    %v2869 = vmul.f32 %v2573, %v2625
    %v2870 = vmul.f32 %v2574, %v2629
    %v2871 = vmul.f32 %v2575, %v2633
    %v2872 = vmul.f32 %v2576, %v2637
    %v2873 = vmul.f32 %v2577, %v2641
    %v2874 = vmul.f32 %v2578, %v2645
    %v2875 = vmul.f32 %v2579, %v2649
    %v2876 = vmul.f32 %v2580, %v2653
    %v2877 = vmul.f32 %v2581, %v2657
    %v2878 = vmul.f32 %v2582, %v2661
    %v2879 = vmul.f32 %v2583, %v2665
    %v2880 = vmul.f32 %v2584, %v2669
    %v2881 = vmul.f32 %v2585, %v2673
    %v2882 = vmul.f32 %v2586, %v2677
    %v2883 = vmul.f32 %v2587, %v2681
    %v2884 = vmul.f32 %v2588, %v2685
    %v2885 = vmul.f32 %v2589, %v2689
    %v2886 = vmul.f32 %v2590, %v2693
    %v2887 = vmul.f32 %v2591, %v2697
    %v2888 = vmul.f32 %v2592, %v2701
    %v2889 = vmul.f32 %v2593, %v2705
    %v2890 = vmul.f32 %v2594, %v2709
    %v2891 = vmul.f32 %v2595, %v2713
    %v2892 = vmul.f32 %v2596, %v2717
    %v2893 = vmul.f32 %v2597, %v2721
    %v2894 = vmul.f32 %v2598, %v2725
    %v2895 = vmul.f32 %v2599, %v2729
    %v2896 = vmul.f32 %v2600, %v2733
    %v2897 = vmul.f32 %v2601, %v2737
    %v2898 = vld [vmem:[%s4] sm:$0xff]
    %v2899 = vld [vmem:[%s4 + $0x8] sm:$0xff]
    %v2900 = vld [vmem:[%s4 + $0x10] sm:$0xff]
    %v2901 = vld [vmem:[%s4 + $0x18] sm:$0xff]
    %v2906 = vlaneseq
    %v2907 = vshrl.u32 %v2906, 7
    %v2908 = vsub.s32 0, %v2907
    %v2909 = vrot.slane %v2898, %v2908
    %v2910 = vlaneseq
    %v2911 = vshrl.u32 %v2910, 7
    %v2912 = vsub.s32 1, %v2911
    %v2913 = vrot.slane %v2898, %v2912
    %v2914 = vlaneseq
    %v2915 = vshrl.u32 %v2914, 7
    %v2916 = vsub.s32 2, %v2915
    %v2917 = vrot.slane %v2898, %v2916
    %v2918 = vlaneseq
    %v2919 = vshrl.u32 %v2918, 7
    %v2920 = vsub.s32 3, %v2919
    %v2921 = vrot.slane %v2898, %v2920
    %v2922 = vlaneseq
    %v2923 = vshrl.u32 %v2922, 7
    %v2924 = vsub.s32 4, %v2923
    %v2925 = vrot.slane %v2898, %v2924
    %v2926 = vlaneseq
    %v2927 = vshrl.u32 %v2926, 7
    %v2928 = vsub.s32 5, %v2927
    %v2929 = vrot.slane %v2898, %v2928
    %v2930 = vlaneseq
    %v2931 = vshrl.u32 %v2930, 7
    %v2932 = vsub.s32 6, %v2931
    %v2933 = vrot.slane %v2898, %v2932
    %v2934 = vlaneseq
    %v2935 = vshrl.u32 %v2934, 7
    %v2936 = vsub.s32 7, %v2935
    %v2937 = vrot.slane %v2898, %v2936
    %v2938 = vlaneseq
    %v2939 = vshrl.u32 %v2938, 7
    %v2940 = vsub.s32 0, %v2939
    %v2941 = vrot.slane %v2899, %v2940
    %v2942 = vlaneseq
    %v2943 = vshrl.u32 %v2942, 7
    %v2944 = vsub.s32 1, %v2943
    %v2945 = vrot.slane %v2899, %v2944
    %v2946 = vlaneseq
    %v2947 = vshrl.u32 %v2946, 7
    %v2948 = vsub.s32 2, %v2947
    %v2949 = vrot.slane %v2899, %v2948
    %v2950 = vlaneseq
    %v2951 = vshrl.u32 %v2950, 7
    %v2952 = vsub.s32 3, %v2951
    %v2953 = vrot.slane %v2899, %v2952
    %v2954 = vlaneseq
    %v2955 = vshrl.u32 %v2954, 7
    %v2956 = vsub.s32 4, %v2955
    %v2957 = vrot.slane %v2899, %v2956
    %v2958 = vlaneseq
    %v2959 = vshrl.u32 %v2958, 7
    %v2960 = vsub.s32 5, %v2959
    %v2961 = vrot.slane %v2899, %v2960
    %v2962 = vlaneseq
    %v2963 = vshrl.u32 %v2962, 7
    %v2964 = vsub.s32 6, %v2963
    %v2965 = vrot.slane %v2899, %v2964
    %v2966 = vlaneseq
    %v2967 = vshrl.u32 %v2966, 7
    %v2968 = vsub.s32 7, %v2967
    %v2969 = vrot.slane %v2899, %v2968
    %v2970 = vlaneseq
    %v2971 = vshrl.u32 %v2970, 7
    %v2972 = vsub.s32 0, %v2971
    %v2973 = vrot.slane %v2900, %v2972
    %v2974 = vlaneseq
    %v2975 = vshrl.u32 %v2974, 7
    %v2976 = vsub.s32 1, %v2975
    %v2977 = vrot.slane %v2900, %v2976
    %v2978 = vlaneseq
    %v2979 = vshrl.u32 %v2978, 7
    %v2980 = vsub.s32 2, %v2979
    %v2981 = vrot.slane %v2900, %v2980
    %v2982 = vlaneseq
    %v2983 = vshrl.u32 %v2982, 7
    %v2984 = vsub.s32 3, %v2983
    %v2985 = vrot.slane %v2900, %v2984
    %v2986 = vlaneseq
    %v2987 = vshrl.u32 %v2986, 7
    %v2988 = vsub.s32 4, %v2987
    %v2989 = vrot.slane %v2900, %v2988
    %v2990 = vlaneseq
    %v2991 = vshrl.u32 %v2990, 7
    %v2992 = vsub.s32 5, %v2991
    %v2993 = vrot.slane %v2900, %v2992
    %v2994 = vlaneseq
    %v2995 = vshrl.u32 %v2994, 7
    %v2996 = vsub.s32 6, %v2995
    %v2997 = vrot.slane %v2900, %v2996
    %v2998 = vlaneseq
    %v2999 = vshrl.u32 %v2998, 7
    %v3000 = vsub.s32 7, %v2999
    %v3001 = vrot.slane %v2900, %v3000
    %v3002 = vlaneseq
    %v3003 = vshrl.u32 %v3002, 7
    %v3004 = vsub.s32 0, %v3003
    %v3005 = vrot.slane %v2901, %v3004
    %v3006 = vlaneseq
    %v3007 = vshrl.u32 %v3006, 7
    %v3008 = vsub.s32 1, %v3007
    %v3009 = vrot.slane %v2901, %v3008
    %v3010 = vlaneseq
    %v3011 = vshrl.u32 %v3010, 7
    %v3012 = vsub.s32 2, %v3011
    %v3013 = vrot.slane %v2901, %v3012
    %v3014 = vlaneseq
    %v3015 = vshrl.u32 %v3014, 7
    %v3016 = vsub.s32 3, %v3015
    %v3017 = vrot.slane %v2901, %v3016
    %v3018 = vlaneseq
    %v3019 = vshrl.u32 %v3018, 7
    %v3020 = vsub.s32 4, %v3019
    %v3021 = vrot.slane %v2901, %v3020
    %v3022 = vlaneseq
    %v3023 = vshrl.u32 %v3022, 7
    %v3024 = vsub.s32 5, %v3023
    %v3025 = vrot.slane %v2901, %v3024
    %v3026 = vlaneseq
    %v3027 = vshrl.u32 %v3026, 7
    %v3028 = vsub.s32 6, %v3027
    %v3029 = vrot.slane %v2901, %v3028
    %v3030 = vlaneseq
    %v3031 = vshrl.u32 %v3030, 7
    %v3032 = vsub.s32 7, %v3031
    %v3033 = vrot.slane %v2901, %v3032
    %v3066 = vadd.f32 %v2770, %v2909
    %v3067 = vadd.f32 %v2771, %v2913
    %v3068 = vadd.f32 %v2772, %v2917
    %v3069 = vadd.f32 %v2773, %v2921
    %v3070 = vadd.f32 %v2774, %v2925
    %v3071 = vadd.f32 %v2775, %v2929
    %v3072 = vadd.f32 %v2776, %v2933
    %v3073 = vadd.f32 %v2777, %v2937
    %v3074 = vadd.f32 %v2778, %v2941
    %v3075 = vadd.f32 %v2779, %v2945
    %v3076 = vadd.f32 %v2780, %v2949
    %v3077 = vadd.f32 %v2781, %v2953
    %v3078 = vadd.f32 %v2782, %v2957
    %v3079 = vadd.f32 %v2783, %v2961
    %v3080 = vadd.f32 %v2784, %v2965
    %v3081 = vadd.f32 %v2785, %v2969
    %v3082 = vadd.f32 %v2786, %v2973
    %v3083 = vadd.f32 %v2787, %v2977
    %v3084 = vadd.f32 %v2788, %v2981
    %v3085 = vadd.f32 %v2789, %v2985
    %v3086 = vadd.f32 %v2790, %v2989
    %v3087 = vadd.f32 %v2791, %v2993
    %v3088 = vadd.f32 %v2792, %v2997
    %v3089 = vadd.f32 %v2793, %v3001
    %v3090 = vadd.f32 %v2794, %v3005
    %v3091 = vadd.f32 %v2795, %v3009
    %v3092 = vadd.f32 %v2796, %v3013
    %v3093 = vadd.f32 %v2797, %v3017
    %v3094 = vadd.f32 %v2798, %v3021
    %v3095 = vadd.f32 %v2799, %v3025
    %v3096 = vadd.f32 %v2800, %v3029
    %v3097 = vadd.f32 %v2801, %v3033
    %v3098 = vadd.f32 %v2802, %v2909
    %v3099 = vadd.f32 %v2803, %v2913
    %v3100 = vadd.f32 %v2804, %v2917
    %v3101 = vadd.f32 %v2805, %v2921
    %v3102 = vadd.f32 %v2806, %v2925
    %v3103 = vadd.f32 %v2807, %v2929
    %v3104 = vadd.f32 %v2808, %v2933
    %v3105 = vadd.f32 %v2809, %v2937
    %v3106 = vadd.f32 %v2810, %v2941
    %v3107 = vadd.f32 %v2811, %v2945
    %v3108 = vadd.f32 %v2812, %v2949
    %v3109 = vadd.f32 %v2813, %v2953
    %v3110 = vadd.f32 %v2814, %v2957
    %v3111 = vadd.f32 %v2815, %v2961
    %v3112 = vadd.f32 %v2816, %v2965
    %v3113 = vadd.f32 %v2817, %v2969
    %v3114 = vadd.f32 %v2818, %v2973
    %v3115 = vadd.f32 %v2819, %v2977
    %v3116 = vadd.f32 %v2820, %v2981
    %v3117 = vadd.f32 %v2821, %v2985
    %v3118 = vadd.f32 %v2822, %v2989
    %v3119 = vadd.f32 %v2823, %v2993
    %v3120 = vadd.f32 %v2824, %v2997
    %v3121 = vadd.f32 %v2825, %v3001
    %v3122 = vadd.f32 %v2826, %v3005
    %v3123 = vadd.f32 %v2827, %v3009
    %v3124 = vadd.f32 %v2828, %v3013
    %v3125 = vadd.f32 %v2829, %v3017
    %v3126 = vadd.f32 %v2830, %v3021
    %v3127 = vadd.f32 %v2831, %v3025
    %v3128 = vadd.f32 %v2832, %v3029
    %v3129 = vadd.f32 %v2833, %v3033
    %v3130 = vadd.f32 %v2834, %v2909
    %v3131 = vadd.f32 %v2835, %v2913
    %v3132 = vadd.f32 %v2836, %v2917
    %v3133 = vadd.f32 %v2837, %v2921
    %v3134 = vadd.f32 %v2838, %v2925
    %v3135 = vadd.f32 %v2839, %v2929
    %v3136 = vadd.f32 %v2840, %v2933
    %v3137 = vadd.f32 %v2841, %v2937
    %v3138 = vadd.f32 %v2842, %v2941
    %v3139 = vadd.f32 %v2843, %v2945
    %v3140 = vadd.f32 %v2844, %v2949
    %v3141 = vadd.f32 %v2845, %v2953
    %v3142 = vadd.f32 %v2846, %v2957
    %v3143 = vadd.f32 %v2847, %v2961
    %v3144 = vadd.f32 %v2848, %v2965
    %v3145 = vadd.f32 %v2849, %v2969
    %v3146 = vadd.f32 %v2850, %v2973
    %v3147 = vadd.f32 %v2851, %v2977
    %v3148 = vadd.f32 %v2852, %v2981
    %v3149 = vadd.f32 %v2853, %v2985
    %v3150 = vadd.f32 %v2854, %v2989
    %v3151 = vadd.f32 %v2855, %v2993
    %v3152 = vadd.f32 %v2856, %v2997
    %v3153 = vadd.f32 %v2857, %v3001
    %v3154 = vadd.f32 %v2858, %v3005
    %v3155 = vadd.f32 %v2859, %v3009
    %v3156 = vadd.f32 %v2860, %v3013
    %v3157 = vadd.f32 %v2861, %v3017
    %v3158 = vadd.f32 %v2862, %v3021
    %v3159 = vadd.f32 %v2863, %v3025
    %v3160 = vadd.f32 %v2864, %v3029
    %v3161 = vadd.f32 %v2865, %v3033
    %v3162 = vadd.f32 %v2866, %v2909
    %v3163 = vadd.f32 %v2867, %v2913
    %v3164 = vadd.f32 %v2868, %v2917
    %v3165 = vadd.f32 %v2869, %v2921
    %v3166 = vadd.f32 %v2870, %v2925
    %v3167 = vadd.f32 %v2871, %v2929
    %v3168 = vadd.f32 %v2872, %v2933
    %v3169 = vadd.f32 %v2873, %v2937
    %v3170 = vadd.f32 %v2874, %v2941
    %v3171 = vadd.f32 %v2875, %v2945
    %v3172 = vadd.f32 %v2876, %v2949
    %v3173 = vadd.f32 %v2877, %v2953
    %v3174 = vadd.f32 %v2878, %v2957
    %v3175 = vadd.f32 %v2879, %v2961
    %v3176 = vadd.f32 %v2880, %v2965
    %v3177 = vadd.f32 %v2881, %v2969
    %v3178 = vadd.f32 %v2882, %v2973
    %v3179 = vadd.f32 %v2883, %v2977
    %v3180 = vadd.f32 %v2884, %v2981
    %v3181 = vadd.f32 %v2885, %v2985
    %v3182 = vadd.f32 %v2886, %v2989
    %v3183 = vadd.f32 %v2887, %v2993
    %v3184 = vadd.f32 %v2888, %v2997
    %v3185 = vadd.f32 %v2889, %v3001
    %v3186 = vadd.f32 %v2890, %v3005
    %v3187 = vadd.f32 %v2891, %v3009
    %v3188 = vadd.f32 %v2892, %v3013
    %v3189 = vadd.f32 %v2893, %v3017
    %v3190 = vadd.f32 %v2894, %v3021
    %v3191 = vadd.f32 %v2895, %v3025
    %v3192 = vadd.f32 %v2896, %v3029
    %v3193 = vadd.f32 %v2897, %v3033
    %v3194 = vmax.f32 %v3066, 0.0
    %v3195 = vmax.f32 %v3067, 0.0
    %v3196 = vmax.f32 %v3068, 0.0
    %v3197 = vmax.f32 %v3069, 0.0
    %v3198 = vmax.f32 %v3070, 0.0
    %v3199 = vmax.f32 %v3071, 0.0
    %v3200 = vmax.f32 %v3072, 0.0
    %v3201 = vmax.f32 %v3073, 0.0
    %v3202 = vmax.f32 %v3074, 0.0
    %v3203 = vmax.f32 %v3075, 0.0
    %v3204 = vmax.f32 %v3076, 0.0
    %v3205 = vmax.f32 %v3077, 0.0
    %v3206 = vmax.f32 %v3078, 0.0
    %v3207 = vmax.f32 %v3079, 0.0
    %v3208 = vmax.f32 %v3080, 0.0
    %v3209 = vmax.f32 %v3081, 0.0
    %v3210 = vmax.f32 %v3082, 0.0
    %v3211 = vmax.f32 %v3083, 0.0
    %v3212 = vmax.f32 %v3084, 0.0
    %v3213 = vmax.f32 %v3085, 0.0
    %v3214 = vmax.f32 %v3086, 0.0
    %v3215 = vmax.f32 %v3087, 0.0
    %v3216 = vmax.f32 %v3088, 0.0
    %v3217 = vmax.f32 %v3089, 0.0
    %v3218 = vmax.f32 %v3090, 0.0
    %v3219 = vmax.f32 %v3091, 0.0
    %v3220 = vmax.f32 %v3092, 0.0
    %v3221 = vmax.f32 %v3093, 0.0
    %v3222 = vmax.f32 %v3094, 0.0
    %v3223 = vmax.f32 %v3095, 0.0
    %v3224 = vmax.f32 %v3096, 0.0
    %v3225 = vmax.f32 %v3097, 0.0
    %v3226 = vmax.f32 %v3098, 0.0
    %v3227 = vmax.f32 %v3099, 0.0
    %v3228 = vmax.f32 %v3100, 0.0
    %v3229 = vmax.f32 %v3101, 0.0
    %v3230 = vmax.f32 %v3102, 0.0
    %v3231 = vmax.f32 %v3103, 0.0
    %v3232 = vmax.f32 %v3104, 0.0
    %v3233 = vmax.f32 %v3105, 0.0
    %v3234 = vmax.f32 %v3106, 0.0
    %v3235 = vmax.f32 %v3107, 0.0
    %v3236 = vmax.f32 %v3108, 0.0
    %v3237 = vmax.f32 %v3109, 0.0
    %v3238 = vmax.f32 %v3110, 0.0
    %v3239 = vmax.f32 %v3111, 0.0
    %v3240 = vmax.f32 %v3112, 0.0
    %v3241 = vmax.f32 %v3113, 0.0
    %v3242 = vmax.f32 %v3114, 0.0
    %v3243 = vmax.f32 %v3115, 0.0
    %v3244 = vmax.f32 %v3116, 0.0
    %v3245 = vmax.f32 %v3117, 0.0
    %v3246 = vmax.f32 %v3118, 0.0
    %v3247 = vmax.f32 %v3119, 0.0
    %v3248 = vmax.f32 %v3120, 0.0
    %v3249 = vmax.f32 %v3121, 0.0
    %v3250 = vmax.f32 %v3122, 0.0
    %v3251 = vmax.f32 %v3123, 0.0
    %v3252 = vmax.f32 %v3124, 0.0
    %v3253 = vmax.f32 %v3125, 0.0
    %v3254 = vmax.f32 %v3126, 0.0
    %v3255 = vmax.f32 %v3127, 0.0
    %v3256 = vmax.f32 %v3128, 0.0
    %v3257 = vmax.f32 %v3129, 0.0
    %v3258 = vmax.f32 %v3130, 0.0
    %v3259 = vmax.f32 %v3131, 0.0
    %v3260 = vmax.f32 %v3132, 0.0
    %v3261 = vmax.f32 %v3133, 0.0
    %v3262 = vmax.f32 %v3134, 0.0
    %v3263 = vmax.f32 %v3135, 0.0
    %v3264 = vmax.f32 %v3136, 0.0
    %v3265 = vmax.f32 %v3137, 0.0
    %v3266 = vmax.f32 %v3138, 0.0
    %v3267 = vmax.f32 %v3139, 0.0
    %v3268 = vmax.f32 %v3140, 0.0
    %v3269 = vmax.f32 %v3141, 0.0
    %v3270 = vmax.f32 %v3142, 0.0
    %v3271 = vmax.f32 %v3143, 0.0
    %v3272 = vmax.f32 %v3144, 0.0
    %v3273 = vmax.f32 %v3145, 0.0
    %v3274 = vmax.f32 %v3146, 0.0
    %v3275 = vmax.f32 %v3147, 0.0
    %v3276 = vmax.f32 %v3148, 0.0
    %v3277 = vmax.f32 %v3149, 0.0
    %v3278 = vmax.f32 %v3150, 0.0
    %v3279 = vmax.f32 %v3151, 0.0
    %v3280 = vmax.f32 %v3152, 0.0
    %v3281 = vmax.f32 %v3153, 0.0
    %v3282 = vmax.f32 %v3154, 0.0
    %v3283 = vmax.f32 %v3155, 0.0
    %v3284 = vmax.f32 %v3156, 0.0
    %v3285 = vmax.f32 %v3157, 0.0
    %v3286 = vmax.f32 %v3158, 0.0
    %v3287 = vmax.f32 %v3159, 0.0
    %v3288 = vmax.f32 %v3160, 0.0
    %v3289 = vmax.f32 %v3161, 0.0
    %v3290 = vmax.f32 %v3162, 0.0
    %v3291 = vmax.f32 %v3163, 0.0
    %v3292 = vmax.f32 %v3164, 0.0
    %v3293 = vmax.f32 %v3165, 0.0
    %v3294 = vmax.f32 %v3166, 0.0
    %v3295 = vmax.f32 %v3167, 0.0
    %v3296 = vmax.f32 %v3168, 0.0
    %v3297 = vmax.f32 %v3169, 0.0
    %v3298 = vmax.f32 %v3170, 0.0
    %v3299 = vmax.f32 %v3171, 0.0
    %v3300 = vmax.f32 %v3172, 0.0
    %v3301 = vmax.f32 %v3173, 0.0
    %v3302 = vmax.f32 %v3174, 0.0
    %v3303 = vmax.f32 %v3175, 0.0
    %v3304 = vmax.f32 %v3176, 0.0
    %v3305 = vmax.f32 %v3177, 0.0
    %v3306 = vmax.f32 %v3178, 0.0
    %v3307 = vmax.f32 %v3179, 0.0
    %v3308 = vmax.f32 %v3180, 0.0
    %v3309 = vmax.f32 %v3181, 0.0
    %v3310 = vmax.f32 %v3182, 0.0
    %v3311 = vmax.f32 %v3183, 0.0
    %v3312 = vmax.f32 %v3184, 0.0
    %v3313 = vmax.f32 %v3185, 0.0
    %v3314 = vmax.f32 %v3186, 0.0
    %v3315 = vmax.f32 %v3187, 0.0
    %v3316 = vmax.f32 %v3188, 0.0
    %v3317 = vmax.f32 %v3189, 0.0
    %v3318 = vmax.f32 %v3190, 0.0
    %v3319 = vmax.f32 %v3191, 0.0
    %v3320 = vmax.f32 %v3192, 0.0
    %v3321 = vmax.f32 %v3193, 0.0
    %v3322 = vld [vmem:[#allocation3] sm:$0xff]
    %v3323 = vld [vmem:[#allocation3 + $0x8] sm:$0xff]
    %v3324 = vld [vmem:[#allocation3 + $0x10] sm:$0xff]
    %v3325 = vld [vmem:[#allocation3 + $0x18] sm:$0xff]
    %v3326 = vpack.c.bf16 %v3226, %v3194
    %v3327 = vpack.c.bf16 %v3227, %v3195
    %v3328 = vpack.c.bf16 %v3228, %v3196
    %v3329 = vpack.c.bf16 %v3229, %v3197
    %v3330 = vpack.c.bf16 %v3230, %v3198
    %v3331 = vpack.c.bf16 %v3231, %v3199
    %v3332 = vpack.c.bf16 %v3232, %v3200
    %v3333 = vpack.c.bf16 %v3233, %v3201
    %v3334 = vpack.c.bf16 %v3234, %v3202
    %v3335 = vpack.c.bf16 %v3235, %v3203
    %v3336 = vpack.c.bf16 %v3236, %v3204
    %v3337 = vpack.c.bf16 %v3237, %v3205
    %v3338 = vpack.c.bf16 %v3238, %v3206
    %v3339 = vpack.c.bf16 %v3239, %v3207
    %v3340 = vpack.c.bf16 %v3240, %v3208
    %v3341 = vpack.c.bf16 %v3241, %v3209
    %v3342 = vpack.c.bf16 %v3242, %v3210
    %v3343 = vpack.c.bf16 %v3243, %v3211
    %v3344 = vpack.c.bf16 %v3244, %v3212
    %v3345 = vpack.c.bf16 %v3245, %v3213
    %v3346 = vpack.c.bf16 %v3246, %v3214
    %v3347 = vpack.c.bf16 %v3247, %v3215
    %v3348 = vpack.c.bf16 %v3248, %v3216
    %v3349 = vpack.c.bf16 %v3249, %v3217
    %v3350 = vpack.c.bf16 %v3250, %v3218
    %v3351 = vpack.c.bf16 %v3251, %v3219
    %v3352 = vpack.c.bf16 %v3252, %v3220
    %v3353 = vpack.c.bf16 %v3253, %v3221
    %v3354 = vpack.c.bf16 %v3254, %v3222
    %v3355 = vpack.c.bf16 %v3255, %v3223
    %v3356 = vpack.c.bf16 %v3256, %v3224
    %v3357 = vpack.c.bf16 %v3257, %v3225
    %v3358 = vpack.c.bf16 %v3290, %v3258
    %v3359 = vpack.c.bf16 %v3291, %v3259
    %v3360 = vpack.c.bf16 %v3292, %v3260
    %v3361 = vpack.c.bf16 %v3293, %v3261
    %v3362 = vpack.c.bf16 %v3294, %v3262
    %v3363 = vpack.c.bf16 %v3295, %v3263
    %v3364 = vpack.c.bf16 %v3296, %v3264
    %v3365 = vpack.c.bf16 %v3297, %v3265
    %v3366 = vpack.c.bf16 %v3298, %v3266
    %v3367 = vpack.c.bf16 %v3299, %v3267
    %v3368 = vpack.c.bf16 %v3300, %v3268
    %v3369 = vpack.c.bf16 %v3301, %v3269
    %v3370 = vpack.c.bf16 %v3302, %v3270
    %v3371 = vpack.c.bf16 %v3303, %v3271
    %v3372 = vpack.c.bf16 %v3304, %v3272
    %v3373 = vpack.c.bf16 %v3305, %v3273
    %v3374 = vpack.c.bf16 %v3306, %v3274
    %v3375 = vpack.c.bf16 %v3307, %v3275
    %v3376 = vpack.c.bf16 %v3308, %v3276
    %v3377 = vpack.c.bf16 %v3309, %v3277
    %v3378 = vpack.c.bf16 %v3310, %v3278
    %v3379 = vpack.c.bf16 %v3311, %v3279
    %v3380 = vpack.c.bf16 %v3312, %v3280
    %v3381 = vpack.c.bf16 %v3313, %v3281
    %v3382 = vpack.c.bf16 %v3314, %v3282
    %v3383 = vpack.c.bf16 %v3315, %v3283
    %v3384 = vpack.c.bf16 %v3316, %v3284
    %v3385 = vpack.c.bf16 %v3317, %v3285
    %v3386 = vpack.c.bf16 %v3318, %v3286
    %v3387 = vpack.c.bf16 %v3319, %v3287
    %v3388 = vpack.c.bf16 %v3320, %v3288
    %v3389 = vpack.c.bf16 %v3321, %v3289
    %v3390 = vld [vmem:[#allocation7] sm:$0xf]
    %v3391 = vld [vmem:[#allocation7 + $0x4] sm:$0xf]
    %v3392 = vld [vmem:[#allocation7 + $0x8] sm:$0xf]
    %v3393 = vld [vmem:[#allocation7 + $0xc] sm:$0xf]
    %v3394 = vld [vmem:[#allocation7 + $0x10] sm:$0xf]
    %v3395 = vld [vmem:[#allocation7 + $0x14] sm:$0xf]
    %v3396 = vld [vmem:[#allocation7 + $0x18] sm:$0xf]
    %v3397 = vld [vmem:[#allocation7 + $0x1c] sm:$0xf]
    %v3398 = vld [vmem:[#allocation7 + $0x20] sm:$0xf]
    %v3399 = vld [vmem:[#allocation7 + $0x24] sm:$0xf]
    %v3400 = vld [vmem:[#allocation7 + $0x28] sm:$0xf]
    %v3401 = vld [vmem:[#allocation7 + $0x2c] sm:$0xf]
    %v3402 = vld [vmem:[#allocation7 + $0x30] sm:$0xf]
    %v3403 = vld [vmem:[#allocation7 + $0x34] sm:$0xf]
    %v3404 = vld [vmem:[#allocation7 + $0x38] sm:$0xf]
    %v3405 = vld [vmem:[#allocation7 + $0x3c] sm:$0xf]
    %v3406 = vld [vmem:[#allocation7 + $0x40] sm:$0xf]
    %v3407 = vld [vmem:[#allocation7 + $0x44] sm:$0xf]
    %v3408 = vld [vmem:[#allocation7 + $0x48] sm:$0xf]
    %v3409 = vld [vmem:[#allocation7 + $0x4c] sm:$0xf]
    %v3410 = vld [vmem:[#allocation7 + $0x50] sm:$0xf]
    %v3411 = vld [vmem:[#allocation7 + $0x54] sm:$0xf]
    %v3412 = vld [vmem:[#allocation7 + $0x58] sm:$0xf]
    %v3413 = vld [vmem:[#allocation7 + $0x5c] sm:$0xf]
    %v3414 = vld [vmem:[#allocation7 + $0x60] sm:$0xf]
    %v3415 = vld [vmem:[#allocation7 + $0x64] sm:$0xf]
    %v3416 = vld [vmem:[#allocation7 + $0x68] sm:$0xf]
    %v3417 = vld [vmem:[#allocation7 + $0x6c] sm:$0xf]
    %v3418 = vld [vmem:[#allocation7 + $0x70] sm:$0xf]
    %v3419 = vld [vmem:[#allocation7 + $0x74] sm:$0xf]
    %v3420 = vld [vmem:[#allocation7 + $0x78] sm:$0xf]
    %v3421 = vld [vmem:[#allocation7 + $0x7c] sm:$0xf]
    %v3422 = vld [vmem:[#allocation7 + $0x80] sm:$0xf]
    %v3423 = vld [vmem:[#allocation7 + $0x84] sm:$0xf]
    %v3424 = vld [vmem:[#allocation7 + $0x88] sm:$0xf]
    %v3425 = vld [vmem:[#allocation7 + $0x8c] sm:$0xf]
    %v3426 = vld [vmem:[#allocation7 + $0x90] sm:$0xf]
    %v3427 = vld [vmem:[#allocation7 + $0x94] sm:$0xf]
    %v3428 = vld [vmem:[#allocation7 + $0x98] sm:$0xf]
    %v3429 = vld [vmem:[#allocation7 + $0x9c] sm:$0xf]
    %v3430 = vld [vmem:[#allocation7 + $0xa0] sm:$0xf]
    %v3431 = vld [vmem:[#allocation7 + $0xa4] sm:$0xf]
    %v3432 = vld [vmem:[#allocation7 + $0xa8] sm:$0xf]
    %v3433 = vld [vmem:[#allocation7 + $0xac] sm:$0xf]
    %v3434 = vld [vmem:[#allocation7 + $0xb0] sm:$0xf]
    %v3435 = vld [vmem:[#allocation7 + $0xb4] sm:$0xf]
    %v3436 = vld [vmem:[#allocation7 + $0xb8] sm:$0xf]
    %v3437 = vld [vmem:[#allocation7 + $0xbc] sm:$0xf]
    %v3438 = vld [vmem:[#allocation7 + $0xc0] sm:$0xf]
    %v3439 = vld [vmem:[#allocation7 + $0xc4] sm:$0xf]
    %v3440 = vld [vmem:[#allocation7 + $0xc8] sm:$0xf]
    %v3441 = vld [vmem:[#allocation7 + $0xcc] sm:$0xf]
    %v3442 = vld [vmem:[#allocation7 + $0xd0] sm:$0xf]
    %v3443 = vld [vmem:[#allocation7 + $0xd4] sm:$0xf]
    %v3444 = vld [vmem:[#allocation7 + $0xd8] sm:$0xf]
    %v3445 = vld [vmem:[#allocation7 + $0xdc] sm:$0xf]
    %v3446 = vld [vmem:[#allocation7 + $0xe0] sm:$0xf]
    %v3447 = vld [vmem:[#allocation7 + $0xe4] sm:$0xf]
    %v3448 = vld [vmem:[#allocation7 + $0xe8] sm:$0xf]
    %v3449 = vld [vmem:[#allocation7 + $0xec] sm:$0xf]
    %v3450 = vld [vmem:[#allocation7 + $0xf0] sm:$0xf]
    %v3451 = vld [vmem:[#allocation7 + $0xf4] sm:$0xf]
    %v3452 = vld [vmem:[#allocation7 + $0xf8] sm:$0xf]
    %v3453 = vld [vmem:[#allocation7 + $0xfc] sm:$0xf]
    %v3454 = vld [vmem:[#allocation7 + $0x100] sm:$0xf]
    %v3455 = vld [vmem:[#allocation7 + $0x104] sm:$0xf]
    %v3456 = vld [vmem:[#allocation7 + $0x108] sm:$0xf]
    %v3457 = vld [vmem:[#allocation7 + $0x10c] sm:$0xf]
    %v3458 = vld [vmem:[#allocation7 + $0x110] sm:$0xf]
    %v3459 = vld [vmem:[#allocation7 + $0x114] sm:$0xf]
    %v3460 = vld [vmem:[#allocation7 + $0x118] sm:$0xf]
    %v3461 = vld [vmem:[#allocation7 + $0x11c] sm:$0xf]
    %v3462 = vld [vmem:[#allocation7 + $0x120] sm:$0xf]
    %v3463 = vld [vmem:[#allocation7 + $0x124] sm:$0xf]
    %v3464 = vld [vmem:[#allocation7 + $0x128] sm:$0xf]
    %v3465 = vld [vmem:[#allocation7 + $0x12c] sm:$0xf]
    %v3466 = vld [vmem:[#allocation7 + $0x130] sm:$0xf]
    %v3467 = vld [vmem:[#allocation7 + $0x134] sm:$0xf]
    %v3468 = vld [vmem:[#allocation7 + $0x138] sm:$0xf]
    %v3469 = vld [vmem:[#allocation7 + $0x13c] sm:$0xf]
    %v3470 = vld [vmem:[#allocation7 + $0x140] sm:$0xf]
    %v3471 = vld [vmem:[#allocation7 + $0x144] sm:$0xf]
    %v3472 = vld [vmem:[#allocation7 + $0x148] sm:$0xf]
    %v3473 = vld [vmem:[#allocation7 + $0x14c] sm:$0xf]
    %v3474 = vld [vmem:[#allocation7 + $0x150] sm:$0xf]
    %v3475 = vld [vmem:[#allocation7 + $0x154] sm:$0xf]
    %v3476 = vld [vmem:[#allocation7 + $0x158] sm:$0xf]
    %v3477 = vld [vmem:[#allocation7 + $0x15c] sm:$0xf]
    %v3478 = vld [vmem:[#allocation7 + $0x160] sm:$0xf]
    %v3479 = vld [vmem:[#allocation7 + $0x164] sm:$0xf]
    %v3480 = vld [vmem:[#allocation7 + $0x168] sm:$0xf]
    %v3481 = vld [vmem:[#allocation7 + $0x16c] sm:$0xf]
    %v3482 = vld [vmem:[#allocation7 + $0x170] sm:$0xf]
    %v3483 = vld [vmem:[#allocation7 + $0x174] sm:$0xf]
    %v3484 = vld [vmem:[#allocation7 + $0x178] sm:$0xf]
    %v3485 = vld [vmem:[#allocation7 + $0x17c] sm:$0xf]
    %v3486 = vld [vmem:[#allocation7 + $0x180] sm:$0xf]
    %v3487 = vld [vmem:[#allocation7 + $0x184] sm:$0xf]
    %v3488 = vld [vmem:[#allocation7 + $0x188] sm:$0xf]
    %v3489 = vld [vmem:[#allocation7 + $0x18c] sm:$0xf]
    %v3490 = vld [vmem:[#allocation7 + $0x190] sm:$0xf]
    %v3491 = vld [vmem:[#allocation7 + $0x194] sm:$0xf]
    %v3492 = vld [vmem:[#allocation7 + $0x198] sm:$0xf]
    %v3493 = vld [vmem:[#allocation7 + $0x19c] sm:$0xf]
    %v3494 = vld [vmem:[#allocation7 + $0x1a0] sm:$0xf]
    %v3495 = vld [vmem:[#allocation7 + $0x1a4] sm:$0xf]
    %v3496 = vld [vmem:[#allocation7 + $0x1a8] sm:$0xf]
    %v3497 = vld [vmem:[#allocation7 + $0x1ac] sm:$0xf]
    %v3498 = vld [vmem:[#allocation7 + $0x1b0] sm:$0xf]
    %v3499 = vld [vmem:[#allocation7 + $0x1b4] sm:$0xf]
    %v3500 = vld [vmem:[#allocation7 + $0x1b8] sm:$0xf]
    %v3501 = vld [vmem:[#allocation7 + $0x1bc] sm:$0xf]
    %v3502 = vld [vmem:[#allocation7 + $0x1c0] sm:$0xf]
    %v3503 = vld [vmem:[#allocation7 + $0x1c4] sm:$0xf]
    %v3504 = vld [vmem:[#allocation7 + $0x1c8] sm:$0xf]
    %v3505 = vld [vmem:[#allocation7 + $0x1cc] sm:$0xf]
    %v3506 = vld [vmem:[#allocation7 + $0x1d0] sm:$0xf]
    %v3507 = vld [vmem:[#allocation7 + $0x1d4] sm:$0xf]
    %v3508 = vld [vmem:[#allocation7 + $0x1d8] sm:$0xf]
    %v3509 = vld [vmem:[#allocation7 + $0x1dc] sm:$0xf]
    %v3510 = vld [vmem:[#allocation7 + $0x1e0] sm:$0xf]
    %v3511 = vld [vmem:[#allocation7 + $0x1e4] sm:$0xf]
    %v3512 = vld [vmem:[#allocation7 + $0x1e8] sm:$0xf]
    %v3513 = vld [vmem:[#allocation7 + $0x1ec] sm:$0xf]
    %v3514 = vld [vmem:[#allocation7 + $0x1f0] sm:$0xf]
    %v3515 = vld [vmem:[#allocation7 + $0x1f4] sm:$0xf]
    %v3516 = vld [vmem:[#allocation7 + $0x1f8] sm:$0xf]
    %v3517 = vld [vmem:[#allocation7 + $0x1fc] sm:$0xf]
    %v3518 = vld [vmem:[#allocation7 + $0x200] sm:$0xf]
    %v3519 = vld [vmem:[#allocation7 + $0x204] sm:$0xf]
    %v3520 = vld [vmem:[#allocation7 + $0x208] sm:$0xf]
    %v3521 = vld [vmem:[#allocation7 + $0x20c] sm:$0xf]
    %v3522 = vld [vmem:[#allocation7 + $0x210] sm:$0xf]
    %v3523 = vld [vmem:[#allocation7 + $0x214] sm:$0xf]
    %v3524 = vld [vmem:[#allocation7 + $0x218] sm:$0xf]
    %v3525 = vld [vmem:[#allocation7 + $0x21c] sm:$0xf]
    %v3526 = vld [vmem:[#allocation7 + $0x220] sm:$0xf]
    %v3527 = vld [vmem:[#allocation7 + $0x224] sm:$0xf]
    %v3528 = vld [vmem:[#allocation7 + $0x228] sm:$0xf]
    %v3529 = vld [vmem:[#allocation7 + $0x22c] sm:$0xf]
    %v3530 = vld [vmem:[#allocation7 + $0x230] sm:$0xf]
    %v3531 = vld [vmem:[#allocation7 + $0x234] sm:$0xf]
    %v3532 = vld [vmem:[#allocation7 + $0x238] sm:$0xf]
    %v3533 = vld [vmem:[#allocation7 + $0x23c] sm:$0xf]
    %v3534 = vld [vmem:[#allocation7 + $0x240] sm:$0xf]
    %v3535 = vld [vmem:[#allocation7 + $0x244] sm:$0xf]
    %v3536 = vld [vmem:[#allocation7 + $0x248] sm:$0xf]
    %v3537 = vld [vmem:[#allocation7 + $0x24c] sm:$0xf]
    %v3538 = vld [vmem:[#allocation7 + $0x250] sm:$0xf]
    %v3539 = vld [vmem:[#allocation7 + $0x254] sm:$0xf]
    %v3540 = vld [vmem:[#allocation7 + $0x258] sm:$0xf]
    %v3541 = vld [vmem:[#allocation7 + $0x25c] sm:$0xf]
    %v3542 = vld [vmem:[#allocation7 + $0x260] sm:$0xf]
    %v3543 = vld [vmem:[#allocation7 + $0x264] sm:$0xf]
    %v3544 = vld [vmem:[#allocation7 + $0x268] sm:$0xf]
    %v3545 = vld [vmem:[#allocation7 + $0x26c] sm:$0xf]
    %v3546 = vld [vmem:[#allocation7 + $0x270] sm:$0xf]
    %v3547 = vld [vmem:[#allocation7 + $0x274] sm:$0xf]
    %v3548 = vld [vmem:[#allocation7 + $0x278] sm:$0xf]
    %v3549 = vld [vmem:[#allocation7 + $0x27c] sm:$0xf]
    %v3550 = vld [vmem:[#allocation7 + $0x280] sm:$0xf]
    %v3551 = vld [vmem:[#allocation7 + $0x284] sm:$0xf]
    %v3552 = vld [vmem:[#allocation7 + $0x288] sm:$0xf]
    %v3553 = vld [vmem:[#allocation7 + $0x28c] sm:$0xf]
    %v3554 = vld [vmem:[#allocation7 + $0x290] sm:$0xf]
    %v3555 = vld [vmem:[#allocation7 + $0x294] sm:$0xf]
    %v3556 = vld [vmem:[#allocation7 + $0x298] sm:$0xf]
    %v3557 = vld [vmem:[#allocation7 + $0x29c] sm:$0xf]
    %v3558 = vld [vmem:[#allocation7 + $0x2a0] sm:$0xf]
    %v3559 = vld [vmem:[#allocation7 + $0x2a4] sm:$0xf]
    %v3560 = vld [vmem:[#allocation7 + $0x2a8] sm:$0xf]
    %v3561 = vld [vmem:[#allocation7 + $0x2ac] sm:$0xf]
    %v3562 = vld [vmem:[#allocation7 + $0x2b0] sm:$0xf]
    %v3563 = vld [vmem:[#allocation7 + $0x2b4] sm:$0xf]
    %v3564 = vld [vmem:[#allocation7 + $0x2b8] sm:$0xf]
    %v3565 = vld [vmem:[#allocation7 + $0x2bc] sm:$0xf]
    %v3566 = vld [vmem:[#allocation7 + $0x2c0] sm:$0xf]
    %v3567 = vld [vmem:[#allocation7 + $0x2c4] sm:$0xf]
    %v3568 = vld [vmem:[#allocation7 + $0x2c8] sm:$0xf]
    %v3569 = vld [vmem:[#allocation7 + $0x2cc] sm:$0xf]
    %v3570 = vld [vmem:[#allocation7 + $0x2d0] sm:$0xf]
    %v3571 = vld [vmem:[#allocation7 + $0x2d4] sm:$0xf]
    %v3572 = vld [vmem:[#allocation7 + $0x2d8] sm:$0xf]
    %v3573 = vld [vmem:[#allocation7 + $0x2dc] sm:$0xf]
    %v3574 = vld [vmem:[#allocation7 + $0x2e0] sm:$0xf]
    %v3575 = vld [vmem:[#allocation7 + $0x2e4] sm:$0xf]
    %v3576 = vld [vmem:[#allocation7 + $0x2e8] sm:$0xf]
    %v3577 = vld [vmem:[#allocation7 + $0x2ec] sm:$0xf]
    %v3578 = vld [vmem:[#allocation7 + $0x2f0] sm:$0xf]
    %v3579 = vld [vmem:[#allocation7 + $0x2f4] sm:$0xf]
    %v3580 = vld [vmem:[#allocation7 + $0x2f8] sm:$0xf]
    %v3581 = vld [vmem:[#allocation7 + $0x2fc] sm:$0xf]
    %v3582 = vld [vmem:[#allocation7 + $0x300] sm:$0xf]
    %v3583 = vld [vmem:[#allocation7 + $0x304] sm:$0xf]
    %v3584 = vld [vmem:[#allocation7 + $0x308] sm:$0xf]
    %v3585 = vld [vmem:[#allocation7 + $0x30c] sm:$0xf]
    %v3586 = vld [vmem:[#allocation7 + $0x310] sm:$0xf]
    %v3587 = vld [vmem:[#allocation7 + $0x314] sm:$0xf]
    %v3588 = vld [vmem:[#allocation7 + $0x318] sm:$0xf]
    %v3589 = vld [vmem:[#allocation7 + $0x31c] sm:$0xf]
    %v3590 = vld [vmem:[#allocation7 + $0x320] sm:$0xf]
    %v3591 = vld [vmem:[#allocation7 + $0x324] sm:$0xf]
    %v3592 = vld [vmem:[#allocation7 + $0x328] sm:$0xf]
    %v3593 = vld [vmem:[#allocation7 + $0x32c] sm:$0xf]
    %v3594 = vld [vmem:[#allocation7 + $0x330] sm:$0xf]
    %v3595 = vld [vmem:[#allocation7 + $0x334] sm:$0xf]
    %v3596 = vld [vmem:[#allocation7 + $0x338] sm:$0xf]
    %v3597 = vld [vmem:[#allocation7 + $0x33c] sm:$0xf]
    %v3598 = vld [vmem:[#allocation7 + $0x340] sm:$0xf]
    %v3599 = vld [vmem:[#allocation7 + $0x344] sm:$0xf]
    %v3600 = vld [vmem:[#allocation7 + $0x348] sm:$0xf]
    %v3601 = vld [vmem:[#allocation7 + $0x34c] sm:$0xf]
    %v3602 = vld [vmem:[#allocation7 + $0x350] sm:$0xf]
    %v3603 = vld [vmem:[#allocation7 + $0x354] sm:$0xf]
    %v3604 = vld [vmem:[#allocation7 + $0x358] sm:$0xf]
    %v3605 = vld [vmem:[#allocation7 + $0x35c] sm:$0xf]
    %v3606 = vld [vmem:[#allocation7 + $0x360] sm:$0xf]
    %v3607 = vld [vmem:[#allocation7 + $0x364] sm:$0xf]
    %v3608 = vld [vmem:[#allocation7 + $0x368] sm:$0xf]
    %v3609 = vld [vmem:[#allocation7 + $0x36c] sm:$0xf]
    %v3610 = vld [vmem:[#allocation7 + $0x370] sm:$0xf]
    %v3611 = vld [vmem:[#allocation7 + $0x374] sm:$0xf]
    %v3612 = vld [vmem:[#allocation7 + $0x378] sm:$0xf]
    %v3613 = vld [vmem:[#allocation7 + $0x37c] sm:$0xf]
    %v3614 = vld [vmem:[#allocation7 + $0x380] sm:$0xf]
    %v3615 = vld [vmem:[#allocation7 + $0x384] sm:$0xf]
    %v3616 = vld [vmem:[#allocation7 + $0x388] sm:$0xf]
    %v3617 = vld [vmem:[#allocation7 + $0x38c] sm:$0xf]
    %v3618 = vld [vmem:[#allocation7 + $0x390] sm:$0xf]
    %v3619 = vld [vmem:[#allocation7 + $0x394] sm:$0xf]
    %v3620 = vld [vmem:[#allocation7 + $0x398] sm:$0xf]
    %v3621 = vld [vmem:[#allocation7 + $0x39c] sm:$0xf]
    %v3622 = vld [vmem:[#allocation7 + $0x3a0] sm:$0xf]
    %v3623 = vld [vmem:[#allocation7 + $0x3a4] sm:$0xf]
    %v3624 = vld [vmem:[#allocation7 + $0x3a8] sm:$0xf]
    %v3625 = vld [vmem:[#allocation7 + $0x3ac] sm:$0xf]
    %v3626 = vld [vmem:[#allocation7 + $0x3b0] sm:$0xf]
    %v3627 = vld [vmem:[#allocation7 + $0x3b4] sm:$0xf]
    %v3628 = vld [vmem:[#allocation7 + $0x3b8] sm:$0xf]
    %v3629 = vld [vmem:[#allocation7 + $0x3bc] sm:$0xf]
    %v3630 = vld [vmem:[#allocation7 + $0x3c0] sm:$0xf]
    %v3631 = vld [vmem:[#allocation7 + $0x3c4] sm:$0xf]
    %v3632 = vld [vmem:[#allocation7 + $0x3c8] sm:$0xf]
    %v3633 = vld [vmem:[#allocation7 + $0x3cc] sm:$0xf]
    %v3634 = vld [vmem:[#allocation7 + $0x3d0] sm:$0xf]
    %v3635 = vld [vmem:[#allocation7 + $0x3d4] sm:$0xf]
    %v3636 = vld [vmem:[#allocation7 + $0x3d8] sm:$0xf]
    %v3637 = vld [vmem:[#allocation7 + $0x3dc] sm:$0xf]
    %v3638 = vld [vmem:[#allocation7 + $0x3e0] sm:$0xf]
    %v3639 = vld [vmem:[#allocation7 + $0x3e4] sm:$0xf]
    %v3640 = vld [vmem:[#allocation7 + $0x3e8] sm:$0xf]
    %v3641 = vld [vmem:[#allocation7 + $0x3ec] sm:$0xf]
    %v3642 = vld [vmem:[#allocation7 + $0x3f0] sm:$0xf]
    %v3643 = vld [vmem:[#allocation7 + $0x3f4] sm:$0xf]
    %v3644 = vld [vmem:[#allocation7 + $0x3f8] sm:$0xf]
    %v3645 = vld [vmem:[#allocation7 + $0x3fc] sm:$0xf]
    %v3646 = vld [vmem:[#allocation7 + $0x400] sm:$0xf]
    %v3647 = vld [vmem:[#allocation7 + $0x404] sm:$0xf]
    %v3648 = vld [vmem:[#allocation7 + $0x408] sm:$0xf]
    %v3649 = vld [vmem:[#allocation7 + $0x40c] sm:$0xf]
    %v3650 = vld [vmem:[#allocation7 + $0x410] sm:$0xf]
    %v3651 = vld [vmem:[#allocation7 + $0x414] sm:$0xf]
    %v3652 = vld [vmem:[#allocation7 + $0x418] sm:$0xf]
    %v3653 = vld [vmem:[#allocation7 + $0x41c] sm:$0xf]
    %v3654 = vld [vmem:[#allocation7 + $0x420] sm:$0xf]
    %v3655 = vld [vmem:[#allocation7 + $0x424] sm:$0xf]
    %v3656 = vld [vmem:[#allocation7 + $0x428] sm:$0xf]
    %v3657 = vld [vmem:[#allocation7 + $0x42c] sm:$0xf]
    %v3658 = vld [vmem:[#allocation7 + $0x430] sm:$0xf]
    %v3659 = vld [vmem:[#allocation7 + $0x434] sm:$0xf]
    %v3660 = vld [vmem:[#allocation7 + $0x438] sm:$0xf]
    %v3661 = vld [vmem:[#allocation7 + $0x43c] sm:$0xf]
    %v3662 = vld [vmem:[#allocation7 + $0x440] sm:$0xf]
    %v3663 = vld [vmem:[#allocation7 + $0x444] sm:$0xf]
    %v3664 = vld [vmem:[#allocation7 + $0x448] sm:$0xf]
    %v3665 = vld [vmem:[#allocation7 + $0x44c] sm:$0xf]
    %v3666 = vld [vmem:[#allocation7 + $0x450] sm:$0xf]
    %v3667 = vld [vmem:[#allocation7 + $0x454] sm:$0xf]
    %v3668 = vld [vmem:[#allocation7 + $0x458] sm:$0xf]
    %v3669 = vld [vmem:[#allocation7 + $0x45c] sm:$0xf]
    %v3670 = vld [vmem:[#allocation7 + $0x460] sm:$0xf]
    %v3671 = vld [vmem:[#allocation7 + $0x464] sm:$0xf]
    %v3672 = vld [vmem:[#allocation7 + $0x468] sm:$0xf]
    %v3673 = vld [vmem:[#allocation7 + $0x46c] sm:$0xf]
    %v3674 = vld [vmem:[#allocation7 + $0x470] sm:$0xf]
    %v3675 = vld [vmem:[#allocation7 + $0x474] sm:$0xf]
    %v3676 = vld [vmem:[#allocation7 + $0x478] sm:$0xf]
    %v3677 = vld [vmem:[#allocation7 + $0x47c] sm:$0xf]
    %v3678 = vld [vmem:[#allocation7 + $0x480] sm:$0xf]
    %v3679 = vld [vmem:[#allocation7 + $0x484] sm:$0xf]
    %v3680 = vld [vmem:[#allocation7 + $0x488] sm:$0xf]
    %v3681 = vld [vmem:[#allocation7 + $0x48c] sm:$0xf]
    %v3682 = vld [vmem:[#allocation7 + $0x490] sm:$0xf]
    %v3683 = vld [vmem:[#allocation7 + $0x494] sm:$0xf]
    %v3684 = vld [vmem:[#allocation7 + $0x498] sm:$0xf]
    %v3685 = vld [vmem:[#allocation7 + $0x49c] sm:$0xf]
    %v3686 = vld [vmem:[#allocation7 + $0x4a0] sm:$0xf]
    %v3687 = vld [vmem:[#allocation7 + $0x4a4] sm:$0xf]
    %v3688 = vld [vmem:[#allocation7 + $0x4a8] sm:$0xf]
    %v3689 = vld [vmem:[#allocation7 + $0x4ac] sm:$0xf]
    %v3690 = vld [vmem:[#allocation7 + $0x4b0] sm:$0xf]
    %v3691 = vld [vmem:[#allocation7 + $0x4b4] sm:$0xf]
    %v3692 = vld [vmem:[#allocation7 + $0x4b8] sm:$0xf]
    %v3693 = vld [vmem:[#allocation7 + $0x4bc] sm:$0xf]
    %v3694 = vld [vmem:[#allocation7 + $0x4c0] sm:$0xf]
    %v3695 = vld [vmem:[#allocation7 + $0x4c4] sm:$0xf]
    %v3696 = vld [vmem:[#allocation7 + $0x4c8] sm:$0xf]
    %v3697 = vld [vmem:[#allocation7 + $0x4cc] sm:$0xf]
    %v3698 = vld [vmem:[#allocation7 + $0x4d0] sm:$0xf]
    %v3699 = vld [vmem:[#allocation7 + $0x4d4] sm:$0xf]
    %v3700 = vld [vmem:[#allocation7 + $0x4d8] sm:$0xf]
    %v3701 = vld [vmem:[#allocation7 + $0x4dc] sm:$0xf]
    %v3702 = vld [vmem:[#allocation7 + $0x4e0] sm:$0xf]
    %v3703 = vld [vmem:[#allocation7 + $0x4e4] sm:$0xf]
    %v3704 = vld [vmem:[#allocation7 + $0x4e8] sm:$0xf]
    %v3705 = vld [vmem:[#allocation7 + $0x4ec] sm:$0xf]
    %v3706 = vld [vmem:[#allocation7 + $0x4f0] sm:$0xf]
    %v3707 = vld [vmem:[#allocation7 + $0x4f4] sm:$0xf]
    %v3708 = vld [vmem:[#allocation7 + $0x4f8] sm:$0xf]
    %v3709 = vld [vmem:[#allocation7 + $0x4fc] sm:$0xf]
    %v3710 = vld [vmem:[#allocation7 + $0x500] sm:$0xf]
    %v3711 = vld [vmem:[#allocation7 + $0x504] sm:$0xf]
    %v3712 = vld [vmem:[#allocation7 + $0x508] sm:$0xf]
    %v3713 = vld [vmem:[#allocation7 + $0x50c] sm:$0xf]
    %v3714 = vld [vmem:[#allocation7 + $0x510] sm:$0xf]
    %v3715 = vld [vmem:[#allocation7 + $0x514] sm:$0xf]
    %v3716 = vld [vmem:[#allocation7 + $0x518] sm:$0xf]
    %v3717 = vld [vmem:[#allocation7 + $0x51c] sm:$0xf]
    %v3718 = vld [vmem:[#allocation7 + $0x520] sm:$0xf]
    %v3719 = vld [vmem:[#allocation7 + $0x524] sm:$0xf]
    %v3720 = vld [vmem:[#allocation7 + $0x528] sm:$0xf]
    %v3721 = vld [vmem:[#allocation7 + $0x52c] sm:$0xf]
    %v3722 = vld [vmem:[#allocation7 + $0x530] sm:$0xf]
    %v3723 = vld [vmem:[#allocation7 + $0x534] sm:$0xf]
    %v3724 = vld [vmem:[#allocation7 + $0x538] sm:$0xf]
    %v3725 = vld [vmem:[#allocation7 + $0x53c] sm:$0xf]
    %v3726 = vld [vmem:[#allocation7 + $0x540] sm:$0xf]
    %v3727 = vld [vmem:[#allocation7 + $0x544] sm:$0xf]
    %v3728 = vld [vmem:[#allocation7 + $0x548] sm:$0xf]
    %v3729 = vld [vmem:[#allocation7 + $0x54c] sm:$0xf]
    %v3730 = vld [vmem:[#allocation7 + $0x550] sm:$0xf]
    %v3731 = vld [vmem:[#allocation7 + $0x554] sm:$0xf]
    %v3732 = vld [vmem:[#allocation7 + $0x558] sm:$0xf]
    %v3733 = vld [vmem:[#allocation7 + $0x55c] sm:$0xf]
    %v3734 = vld [vmem:[#allocation7 + $0x560] sm:$0xf]
    %v3735 = vld [vmem:[#allocation7 + $0x564] sm:$0xf]
    %v3736 = vld [vmem:[#allocation7 + $0x568] sm:$0xf]
    %v3737 = vld [vmem:[#allocation7 + $0x56c] sm:$0xf]
    %v3738 = vld [vmem:[#allocation7 + $0x570] sm:$0xf]
    %v3739 = vld [vmem:[#allocation7 + $0x574] sm:$0xf]
    %v3740 = vld [vmem:[#allocation7 + $0x578] sm:$0xf]
    %v3741 = vld [vmem:[#allocation7 + $0x57c] sm:$0xf]
    %v3742 = vld [vmem:[#allocation7 + $0x580] sm:$0xf]
    %v3743 = vld [vmem:[#allocation7 + $0x584] sm:$0xf]
    %v3744 = vld [vmem:[#allocation7 + $0x588] sm:$0xf]
    %v3745 = vld [vmem:[#allocation7 + $0x58c] sm:$0xf]
    %v3746 = vld [vmem:[#allocation7 + $0x590] sm:$0xf]
    %v3747 = vld [vmem:[#allocation7 + $0x594] sm:$0xf]
    %v3748 = vld [vmem:[#allocation7 + $0x598] sm:$0xf]
    %v3749 = vld [vmem:[#allocation7 + $0x59c] sm:$0xf]
    %v3750 = vld [vmem:[#allocation7 + $0x5a0] sm:$0xf]
    %v3751 = vld [vmem:[#allocation7 + $0x5a4] sm:$0xf]
    %v3752 = vld [vmem:[#allocation7 + $0x5a8] sm:$0xf]
    %v3753 = vld [vmem:[#allocation7 + $0x5ac] sm:$0xf]
    %v3754 = vld [vmem:[#allocation7 + $0x5b0] sm:$0xf]
    %v3755 = vld [vmem:[#allocation7 + $0x5b4] sm:$0xf]
    %v3756 = vld [vmem:[#allocation7 + $0x5b8] sm:$0xf]
    %v3757 = vld [vmem:[#allocation7 + $0x5bc] sm:$0xf]
    %v3758 = vld [vmem:[#allocation7 + $0x5c0] sm:$0xf]
    %v3759 = vld [vmem:[#allocation7 + $0x5c4] sm:$0xf]
    %v3760 = vld [vmem:[#allocation7 + $0x5c8] sm:$0xf]
    %v3761 = vld [vmem:[#allocation7 + $0x5cc] sm:$0xf]
    %v3762 = vld [vmem:[#allocation7 + $0x5d0] sm:$0xf]
    %v3763 = vld [vmem:[#allocation7 + $0x5d4] sm:$0xf]
    %v3764 = vld [vmem:[#allocation7 + $0x5d8] sm:$0xf]
    %v3765 = vld [vmem:[#allocation7 + $0x5dc] sm:$0xf]
    %v3766 = vld [vmem:[#allocation7 + $0x5e0] sm:$0xf]
    %v3767 = vld [vmem:[#allocation7 + $0x5e4] sm:$0xf]
    %v3768 = vld [vmem:[#allocation7 + $0x5e8] sm:$0xf]
    %v3769 = vld [vmem:[#allocation7 + $0x5ec] sm:$0xf]
    %v3770 = vld [vmem:[#allocation7 + $0x5f0] sm:$0xf]
    %v3771 = vld [vmem:[#allocation7 + $0x5f4] sm:$0xf]
    %v3772 = vld [vmem:[#allocation7 + $0x5f8] sm:$0xf]
    %v3773 = vld [vmem:[#allocation7 + $0x5fc] sm:$0xf]
    %v3774 = vld [vmem:[#allocation7 + $0x600] sm:$0xf]
    %v3775 = vld [vmem:[#allocation7 + $0x604] sm:$0xf]
    %v3776 = vld [vmem:[#allocation7 + $0x608] sm:$0xf]
    %v3777 = vld [vmem:[#allocation7 + $0x60c] sm:$0xf]
    %v3778 = vld [vmem:[#allocation7 + $0x610] sm:$0xf]
    %v3779 = vld [vmem:[#allocation7 + $0x614] sm:$0xf]
    %v3780 = vld [vmem:[#allocation7 + $0x618] sm:$0xf]
    %v3781 = vld [vmem:[#allocation7 + $0x61c] sm:$0xf]
    %v3782 = vld [vmem:[#allocation7 + $0x620] sm:$0xf]
    %v3783 = vld [vmem:[#allocation7 + $0x624] sm:$0xf]
    %v3784 = vld [vmem:[#allocation7 + $0x628] sm:$0xf]
    %v3785 = vld [vmem:[#allocation7 + $0x62c] sm:$0xf]
    %v3786 = vld [vmem:[#allocation7 + $0x630] sm:$0xf]
    %v3787 = vld [vmem:[#allocation7 + $0x634] sm:$0xf]
    %v3788 = vld [vmem:[#allocation7 + $0x638] sm:$0xf]
    %v3789 = vld [vmem:[#allocation7 + $0x63c] sm:$0xf]
    %v3790 = vld [vmem:[#allocation7 + $0x640] sm:$0xf]
    %v3791 = vld [vmem:[#allocation7 + $0x644] sm:$0xf]
    %v3792 = vld [vmem:[#allocation7 + $0x648] sm:$0xf]
    %v3793 = vld [vmem:[#allocation7 + $0x64c] sm:$0xf]
    %v3794 = vld [vmem:[#allocation7 + $0x650] sm:$0xf]
    %v3795 = vld [vmem:[#allocation7 + $0x654] sm:$0xf]
    %v3796 = vld [vmem:[#allocation7 + $0x658] sm:$0xf]
    %v3797 = vld [vmem:[#allocation7 + $0x65c] sm:$0xf]
    %v3798 = vld [vmem:[#allocation7 + $0x660] sm:$0xf]
    %v3799 = vld [vmem:[#allocation7 + $0x664] sm:$0xf]
    %v3800 = vld [vmem:[#allocation7 + $0x668] sm:$0xf]
    %v3801 = vld [vmem:[#allocation7 + $0x66c] sm:$0xf]
    %v3802 = vld [vmem:[#allocation7 + $0x670] sm:$0xf]
    %v3803 = vld [vmem:[#allocation7 + $0x674] sm:$0xf]
    %v3804 = vld [vmem:[#allocation7 + $0x678] sm:$0xf]
    %v3805 = vld [vmem:[#allocation7 + $0x67c] sm:$0xf]
    %v3806 = vld [vmem:[#allocation7 + $0x680] sm:$0xf]
    %v3807 = vld [vmem:[#allocation7 + $0x684] sm:$0xf]
    %v3808 = vld [vmem:[#allocation7 + $0x688] sm:$0xf]
    %v3809 = vld [vmem:[#allocation7 + $0x68c] sm:$0xf]
    %v3810 = vld [vmem:[#allocation7 + $0x690] sm:$0xf]
    %v3811 = vld [vmem:[#allocation7 + $0x694] sm:$0xf]
    %v3812 = vld [vmem:[#allocation7 + $0x698] sm:$0xf]
    %v3813 = vld [vmem:[#allocation7 + $0x69c] sm:$0xf]
    %v3814 = vld [vmem:[#allocation7 + $0x6a0] sm:$0xf]
    %v3815 = vld [vmem:[#allocation7 + $0x6a4] sm:$0xf]
    %v3816 = vld [vmem:[#allocation7 + $0x6a8] sm:$0xf]
    %v3817 = vld [vmem:[#allocation7 + $0x6ac] sm:$0xf]
    %v3818 = vld [vmem:[#allocation7 + $0x6b0] sm:$0xf]
    %v3819 = vld [vmem:[#allocation7 + $0x6b4] sm:$0xf]
    %v3820 = vld [vmem:[#allocation7 + $0x6b8] sm:$0xf]
    %v3821 = vld [vmem:[#allocation7 + $0x6bc] sm:$0xf]
    %v3822 = vld [vmem:[#allocation7 + $0x6c0] sm:$0xf]
    %v3823 = vld [vmem:[#allocation7 + $0x6c4] sm:$0xf]
    %v3824 = vld [vmem:[#allocation7 + $0x6c8] sm:$0xf]
    %v3825 = vld [vmem:[#allocation7 + $0x6cc] sm:$0xf]
    %v3826 = vld [vmem:[#allocation7 + $0x6d0] sm:$0xf]
    %v3827 = vld [vmem:[#allocation7 + $0x6d4] sm:$0xf]
    %v3828 = vld [vmem:[#allocation7 + $0x6d8] sm:$0xf]
    %v3829 = vld [vmem:[#allocation7 + $0x6dc] sm:$0xf]
    %v3830 = vld [vmem:[#allocation7 + $0x6e0] sm:$0xf]
    %v3831 = vld [vmem:[#allocation7 + $0x6e4] sm:$0xf]
    %v3832 = vld [vmem:[#allocation7 + $0x6e8] sm:$0xf]
    %v3833 = vld [vmem:[#allocation7 + $0x6ec] sm:$0xf]
    %v3834 = vld [vmem:[#allocation7 + $0x6f0] sm:$0xf]
    %v3835 = vld [vmem:[#allocation7 + $0x6f4] sm:$0xf]
    %v3836 = vld [vmem:[#allocation7 + $0x6f8] sm:$0xf]
    %v3837 = vld [vmem:[#allocation7 + $0x6fc] sm:$0xf]
    %v3838 = vld [vmem:[#allocation7 + $0x700] sm:$0xf]
    %v3839 = vld [vmem:[#allocation7 + $0x704] sm:$0xf]
    %v3840 = vld [vmem:[#allocation7 + $0x708] sm:$0xf]
    %v3841 = vld [vmem:[#allocation7 + $0x70c] sm:$0xf]
    %v3842 = vld [vmem:[#allocation7 + $0x710] sm:$0xf]
    %v3843 = vld [vmem:[#allocation7 + $0x714] sm:$0xf]
    %v3844 = vld [vmem:[#allocation7 + $0x718] sm:$0xf]
    %v3845 = vld [vmem:[#allocation7 + $0x71c] sm:$0xf]
    %v3846 = vld [vmem:[#allocation7 + $0x720] sm:$0xf]
    %v3847 = vld [vmem:[#allocation7 + $0x724] sm:$0xf]
    %v3848 = vld [vmem:[#allocation7 + $0x728] sm:$0xf]
    %v3849 = vld [vmem:[#allocation7 + $0x72c] sm:$0xf]
    %v3850 = vld [vmem:[#allocation7 + $0x730] sm:$0xf]
    %v3851 = vld [vmem:[#allocation7 + $0x734] sm:$0xf]
    %v3852 = vld [vmem:[#allocation7 + $0x738] sm:$0xf]
    %v3853 = vld [vmem:[#allocation7 + $0x73c] sm:$0xf]
    %v3854 = vld [vmem:[#allocation7 + $0x740] sm:$0xf]
    %v3855 = vld [vmem:[#allocation7 + $0x744] sm:$0xf]
    %v3856 = vld [vmem:[#allocation7 + $0x748] sm:$0xf]
    %v3857 = vld [vmem:[#allocation7 + $0x74c] sm:$0xf]
    %v3858 = vld [vmem:[#allocation7 + $0x750] sm:$0xf]
    %v3859 = vld [vmem:[#allocation7 + $0x754] sm:$0xf]
    %v3860 = vld [vmem:[#allocation7 + $0x758] sm:$0xf]
    %v3861 = vld [vmem:[#allocation7 + $0x75c] sm:$0xf]
    %v3862 = vld [vmem:[#allocation7 + $0x760] sm:$0xf]
    %v3863 = vld [vmem:[#allocation7 + $0x764] sm:$0xf]
    %v3864 = vld [vmem:[#allocation7 + $0x768] sm:$0xf]
    %v3865 = vld [vmem:[#allocation7 + $0x76c] sm:$0xf]
    %v3866 = vld [vmem:[#allocation7 + $0x770] sm:$0xf]
    %v3867 = vld [vmem:[#allocation7 + $0x774] sm:$0xf]
    %v3868 = vld [vmem:[#allocation7 + $0x778] sm:$0xf]
    %v3869 = vld [vmem:[#allocation7 + $0x77c] sm:$0xf]
    %v3870 = vld [vmem:[#allocation7 + $0x780] sm:$0xf]
    %v3871 = vld [vmem:[#allocation7 + $0x784] sm:$0xf]
    %v3872 = vld [vmem:[#allocation7 + $0x788] sm:$0xf]
    %v3873 = vld [vmem:[#allocation7 + $0x78c] sm:$0xf]
    %v3874 = vld [vmem:[#allocation7 + $0x790] sm:$0xf]
    %v3875 = vld [vmem:[#allocation7 + $0x794] sm:$0xf]
    %v3876 = vld [vmem:[#allocation7 + $0x798] sm:$0xf]
    %v3877 = vld [vmem:[#allocation7 + $0x79c] sm:$0xf]
    %v3878 = vld [vmem:[#allocation7 + $0x7a0] sm:$0xf]
    %v3879 = vld [vmem:[#allocation7 + $0x7a4] sm:$0xf]
    %v3880 = vld [vmem:[#allocation7 + $0x7a8] sm:$0xf]
    %v3881 = vld [vmem:[#allocation7 + $0x7ac] sm:$0xf]
    %v3882 = vld [vmem:[#allocation7 + $0x7b0] sm:$0xf]
    %v3883 = vld [vmem:[#allocation7 + $0x7b4] sm:$0xf]
    %v3884 = vld [vmem:[#allocation7 + $0x7b8] sm:$0xf]
    %v3885 = vld [vmem:[#allocation7 + $0x7bc] sm:$0xf]
    %v3886 = vld [vmem:[#allocation7 + $0x7c0] sm:$0xf]
    %v3887 = vld [vmem:[#allocation7 + $0x7c4] sm:$0xf]
    %v3888 = vld [vmem:[#allocation7 + $0x7c8] sm:$0xf]
    %v3889 = vld [vmem:[#allocation7 + $0x7cc] sm:$0xf]
    %v3890 = vld [vmem:[#allocation7 + $0x7d0] sm:$0xf]
    %v3891 = vld [vmem:[#allocation7 + $0x7d4] sm:$0xf]
    %v3892 = vld [vmem:[#allocation7 + $0x7d8] sm:$0xf]
    %v3893 = vld [vmem:[#allocation7 + $0x7dc] sm:$0xf]
    %v3894 = vld [vmem:[#allocation7 + $0x7e0] sm:$0xf]
    %v3895 = vld [vmem:[#allocation7 + $0x7e4] sm:$0xf]
    %v3896 = vld [vmem:[#allocation7 + $0x7e8] sm:$0xf]
    %v3897 = vld [vmem:[#allocation7 + $0x7ec] sm:$0xf]
    %v3898 = vld [vmem:[#allocation7 + $0x7f0] sm:$0xf]
    %v3899 = vld [vmem:[#allocation7 + $0x7f4] sm:$0xf]
    %v3900 = vld [vmem:[#allocation7 + $0x7f8] sm:$0xf]
    %v3901 = vld [vmem:[#allocation7 + $0x7fc] sm:$0xf]
    %v4414 = vunpack.c.l.b16 %v3390
    %v4415 = vunpack.c.l.b16 %v3391
    %v4416 = vunpack.c.l.b16 %v3392
    %v4417 = vunpack.c.l.b16 %v3393
    %v4418 = vunpack.c.l.b16 %v3394
    %v4419 = vunpack.c.l.b16 %v3395
    %v4420 = vunpack.c.l.b16 %v3396
    %v4421 = vunpack.c.l.b16 %v3397
    %v4422 = vunpack.c.l.b16 %v3398
    %v4423 = vunpack.c.l.b16 %v3399
    %v4424 = vunpack.c.l.b16 %v3400
    %v4425 = vunpack.c.l.b16 %v3401
    %v4426 = vunpack.c.l.b16 %v3402
    %v4427 = vunpack.c.l.b16 %v3403
    %v4428 = vunpack.c.l.b16 %v3404
    %v4429 = vunpack.c.l.b16 %v3405
    %v4430 = vunpack.c.l.b16 %v3406
    %v4431 = vunpack.c.l.b16 %v3407
    %v4432 = vunpack.c.l.b16 %v3408
    %v4433 = vunpack.c.l.b16 %v3409
    %v4434 = vunpack.c.l.b16 %v3410
    %v4435 = vunpack.c.l.b16 %v3411
    %v4436 = vunpack.c.l.b16 %v3412
    %v4437 = vunpack.c.l.b16 %v3413
    %v4438 = vunpack.c.l.b16 %v3414
    %v4439 = vunpack.c.l.b16 %v3415
    %v4440 = vunpack.c.l.b16 %v3416
    %v4441 = vunpack.c.l.b16 %v3417
    %v4442 = vunpack.c.l.b16 %v3418
    %v4443 = vunpack.c.l.b16 %v3419
    %v4444 = vunpack.c.l.b16 %v3420
    %v4445 = vunpack.c.l.b16 %v3421
    %v4446 = vunpack.c.l.b16 %v3422
    %v4447 = vunpack.c.l.b16 %v3423
    %v4448 = vunpack.c.l.b16 %v3424
    %v4449 = vunpack.c.l.b16 %v3425
    %v4450 = vunpack.c.l.b16 %v3426
    %v4451 = vunpack.c.l.b16 %v3427
    %v4452 = vunpack.c.l.b16 %v3428
    %v4453 = vunpack.c.l.b16 %v3429
    %v4454 = vunpack.c.l.b16 %v3430
    %v4455 = vunpack.c.l.b16 %v3431
    %v4456 = vunpack.c.l.b16 %v3432
    %v4457 = vunpack.c.l.b16 %v3433
    %v4458 = vunpack.c.l.b16 %v3434
    %v4459 = vunpack.c.l.b16 %v3435
    %v4460 = vunpack.c.l.b16 %v3436
    %v4461 = vunpack.c.l.b16 %v3437
    %v4462 = vunpack.c.l.b16 %v3438
    %v4463 = vunpack.c.l.b16 %v3439
    %v4464 = vunpack.c.l.b16 %v3440
    %v4465 = vunpack.c.l.b16 %v3441
    %v4466 = vunpack.c.l.b16 %v3442
    %v4467 = vunpack.c.l.b16 %v3443
    %v4468 = vunpack.c.l.b16 %v3444
    %v4469 = vunpack.c.l.b16 %v3445
    %v4470 = vunpack.c.l.b16 %v3446
    %v4471 = vunpack.c.l.b16 %v3447
    %v4472 = vunpack.c.l.b16 %v3448
    %v4473 = vunpack.c.l.b16 %v3449
    %v4474 = vunpack.c.l.b16 %v3450
    %v4475 = vunpack.c.l.b16 %v3451
    %v4476 = vunpack.c.l.b16 %v3452
    %v4477 = vunpack.c.l.b16 %v3453
    %v4478 = vunpack.c.l.b16 %v3454
    %v4479 = vunpack.c.l.b16 %v3455
    %v4480 = vunpack.c.l.b16 %v3456
    %v4481 = vunpack.c.l.b16 %v3457
    %v4482 = vunpack.c.l.b16 %v3458
    %v4483 = vunpack.c.l.b16 %v3459
    %v4484 = vunpack.c.l.b16 %v3460
    %v4485 = vunpack.c.l.b16 %v3461
    %v4486 = vunpack.c.l.b16 %v3462
    %v4487 = vunpack.c.l.b16 %v3463
    %v4488 = vunpack.c.l.b16 %v3464
    %v4489 = vunpack.c.l.b16 %v3465
    %v4490 = vunpack.c.l.b16 %v3466
    %v4491 = vunpack.c.l.b16 %v3467
    %v4492 = vunpack.c.l.b16 %v3468
    %v4493 = vunpack.c.l.b16 %v3469
    %v4494 = vunpack.c.l.b16 %v3470
    %v4495 = vunpack.c.l.b16 %v3471
    %v4496 = vunpack.c.l.b16 %v3472
    %v4497 = vunpack.c.l.b16 %v3473
    %v4498 = vunpack.c.l.b16 %v3474
    %v4499 = vunpack.c.l.b16 %v3475
    %v4500 = vunpack.c.l.b16 %v3476
    %v4501 = vunpack.c.l.b16 %v3477
    %v4502 = vunpack.c.l.b16 %v3478
    %v4503 = vunpack.c.l.b16 %v3479
    %v4504 = vunpack.c.l.b16 %v3480
    %v4505 = vunpack.c.l.b16 %v3481
    %v4506 = vunpack.c.l.b16 %v3482
    %v4507 = vunpack.c.l.b16 %v3483
    %v4508 = vunpack.c.l.b16 %v3484
    %v4509 = vunpack.c.l.b16 %v3485
    %v4510 = vunpack.c.l.b16 %v3486
    %v4511 = vunpack.c.l.b16 %v3487
    %v4512 = vunpack.c.l.b16 %v3488
    %v4513 = vunpack.c.l.b16 %v3489
    %v4514 = vunpack.c.l.b16 %v3490
    %v4515 = vunpack.c.l.b16 %v3491
    %v4516 = vunpack.c.l.b16 %v3492
    %v4517 = vunpack.c.l.b16 %v3493
    %v4518 = vunpack.c.l.b16 %v3494
    %v4519 = vunpack.c.l.b16 %v3495
    %v4520 = vunpack.c.l.b16 %v3496
    %v4521 = vunpack.c.l.b16 %v3497
    %v4522 = vunpack.c.l.b16 %v3498
    %v4523 = vunpack.c.l.b16 %v3499
    %v4524 = vunpack.c.l.b16 %v3500
    %v4525 = vunpack.c.l.b16 %v3501
    %v4526 = vunpack.c.l.b16 %v3502
    %v4527 = vunpack.c.l.b16 %v3503
    %v4528 = vunpack.c.l.b16 %v3504
    %v4529 = vunpack.c.l.b16 %v3505
    %v4530 = vunpack.c.l.b16 %v3506
    %v4531 = vunpack.c.l.b16 %v3507
    %v4532 = vunpack.c.l.b16 %v3508
    %v4533 = vunpack.c.l.b16 %v3509
    %v4534 = vunpack.c.l.b16 %v3510
    %v4535 = vunpack.c.l.b16 %v3511
    %v4536 = vunpack.c.l.b16 %v3512
    %v4537 = vunpack.c.l.b16 %v3513
    %v4538 = vunpack.c.l.b16 %v3514
    %v4539 = vunpack.c.l.b16 %v3515
    %v4540 = vunpack.c.l.b16 %v3516
    %v4541 = vunpack.c.l.b16 %v3517
    %v4542 = vunpack.c.l.b16 %v3518
    %v4543 = vunpack.c.l.b16 %v3519
    %v4544 = vunpack.c.l.b16 %v3520
    %v4545 = vunpack.c.l.b16 %v3521
    %v4546 = vunpack.c.l.b16 %v3522
    %v4547 = vunpack.c.l.b16 %v3523
    %v4548 = vunpack.c.l.b16 %v3524
    %v4549 = vunpack.c.l.b16 %v3525
    %v4550 = vunpack.c.l.b16 %v3526
    %v4551 = vunpack.c.l.b16 %v3527
    %v4552 = vunpack.c.l.b16 %v3528
    %v4553 = vunpack.c.l.b16 %v3529
    %v4554 = vunpack.c.l.b16 %v3530
    %v4555 = vunpack.c.l.b16 %v3531
    %v4556 = vunpack.c.l.b16 %v3532
    %v4557 = vunpack.c.l.b16 %v3533
    %v4558 = vunpack.c.l.b16 %v3534
    %v4559 = vunpack.c.l.b16 %v3535
    %v4560 = vunpack.c.l.b16 %v3536
    %v4561 = vunpack.c.l.b16 %v3537
    %v4562 = vunpack.c.l.b16 %v3538
    %v4563 = vunpack.c.l.b16 %v3539
    %v4564 = vunpack.c.l.b16 %v3540
    %v4565 = vunpack.c.l.b16 %v3541
    %v4566 = vunpack.c.l.b16 %v3542
    %v4567 = vunpack.c.l.b16 %v3543
    %v4568 = vunpack.c.l.b16 %v3544
    %v4569 = vunpack.c.l.b16 %v3545
    %v4570 = vunpack.c.l.b16 %v3546
    %v4571 = vunpack.c.l.b16 %v3547
    %v4572 = vunpack.c.l.b16 %v3548
    %v4573 = vunpack.c.l.b16 %v3549
    %v4574 = vunpack.c.l.b16 %v3550
    %v4575 = vunpack.c.l.b16 %v3551
    %v4576 = vunpack.c.l.b16 %v3552
    %v4577 = vunpack.c.l.b16 %v3553
    %v4578 = vunpack.c.l.b16 %v3554
    %v4579 = vunpack.c.l.b16 %v3555
    %v4580 = vunpack.c.l.b16 %v3556
    %v4581 = vunpack.c.l.b16 %v3557
    %v4582 = vunpack.c.l.b16 %v3558
    %v4583 = vunpack.c.l.b16 %v3559
    %v4584 = vunpack.c.l.b16 %v3560
    %v4585 = vunpack.c.l.b16 %v3561
    %v4586 = vunpack.c.l.b16 %v3562
    %v4587 = vunpack.c.l.b16 %v3563
    %v4588 = vunpack.c.l.b16 %v3564
    %v4589 = vunpack.c.l.b16 %v3565
    %v4590 = vunpack.c.l.b16 %v3566
    %v4591 = vunpack.c.l.b16 %v3567
    %v4592 = vunpack.c.l.b16 %v3568
    %v4593 = vunpack.c.l.b16 %v3569
    %v4594 = vunpack.c.l.b16 %v3570
    %v4595 = vunpack.c.l.b16 %v3571
    %v4596 = vunpack.c.l.b16 %v3572
    %v4597 = vunpack.c.l.b16 %v3573
    %v4598 = vunpack.c.l.b16 %v3574
    %v4599 = vunpack.c.l.b16 %v3575
    %v4600 = vunpack.c.l.b16 %v3576
    %v4601 = vunpack.c.l.b16 %v3577
    %v4602 = vunpack.c.l.b16 %v3578
    %v4603 = vunpack.c.l.b16 %v3579
    %v4604 = vunpack.c.l.b16 %v3580
    %v4605 = vunpack.c.l.b16 %v3581
    %v4606 = vunpack.c.l.b16 %v3582
    %v4607 = vunpack.c.l.b16 %v3583
    %v4608 = vunpack.c.l.b16 %v3584
    %v4609 = vunpack.c.l.b16 %v3585
    %v4610 = vunpack.c.l.b16 %v3586
    %v4611 = vunpack.c.l.b16 %v3587
    %v4612 = vunpack.c.l.b16 %v3588
    %v4613 = vunpack.c.l.b16 %v3589
    %v4614 = vunpack.c.l.b16 %v3590
    %v4615 = vunpack.c.l.b16 %v3591
    %v4616 = vunpack.c.l.b16 %v3592
    %v4617 = vunpack.c.l.b16 %v3593
    %v4618 = vunpack.c.l.b16 %v3594
    %v4619 = vunpack.c.l.b16 %v3595
    %v4620 = vunpack.c.l.b16 %v3596
    %v4621 = vunpack.c.l.b16 %v3597
    %v4622 = vunpack.c.l.b16 %v3598
    %v4623 = vunpack.c.l.b16 %v3599
    %v4624 = vunpack.c.l.b16 %v3600
    %v4625 = vunpack.c.l.b16 %v3601
    %v4626 = vunpack.c.l.b16 %v3602
    %v4627 = vunpack.c.l.b16 %v3603
    %v4628 = vunpack.c.l.b16 %v3604
    %v4629 = vunpack.c.l.b16 %v3605
    %v4630 = vunpack.c.l.b16 %v3606
    %v4631 = vunpack.c.l.b16 %v3607
    %v4632 = vunpack.c.l.b16 %v3608
    %v4633 = vunpack.c.l.b16 %v3609
    %v4634 = vunpack.c.l.b16 %v3610
    %v4635 = vunpack.c.l.b16 %v3611
    %v4636 = vunpack.c.l.b16 %v3612
    %v4637 = vunpack.c.l.b16 %v3613
    %v4638 = vunpack.c.l.b16 %v3614
    %v4639 = vunpack.c.l.b16 %v3615
    %v4640 = vunpack.c.l.b16 %v3616
    %v4641 = vunpack.c.l.b16 %v3617
    %v4642 = vunpack.c.l.b16 %v3618
    %v4643 = vunpack.c.l.b16 %v3619
    %v4644 = vunpack.c.l.b16 %v3620
    %v4645 = vunpack.c.l.b16 %v3621
    %v4646 = vunpack.c.l.b16 %v3622
    %v4647 = vunpack.c.l.b16 %v3623
    %v4648 = vunpack.c.l.b16 %v3624
    %v4649 = vunpack.c.l.b16 %v3625
    %v4650 = vunpack.c.l.b16 %v3626
    %v4651 = vunpack.c.l.b16 %v3627
    %v4652 = vunpack.c.l.b16 %v3628
    %v4653 = vunpack.c.l.b16 %v3629
    %v4654 = vunpack.c.l.b16 %v3630
    %v4655 = vunpack.c.l.b16 %v3631
    %v4656 = vunpack.c.l.b16 %v3632
    %v4657 = vunpack.c.l.b16 %v3633
    %v4658 = vunpack.c.l.b16 %v3634
    %v4659 = vunpack.c.l.b16 %v3635
    %v4660 = vunpack.c.l.b16 %v3636
    %v4661 = vunpack.c.l.b16 %v3637
    %v4662 = vunpack.c.l.b16 %v3638
    %v4663 = vunpack.c.l.b16 %v3639
    %v4664 = vunpack.c.l.b16 %v3640
    %v4665 = vunpack.c.l.b16 %v3641
    %v4666 = vunpack.c.l.b16 %v3642
    %v4667 = vunpack.c.l.b16 %v3643
    %v4668 = vunpack.c.l.b16 %v3644
    %v4669 = vunpack.c.l.b16 %v3645
    %v4670 = vunpack.c.l.b16 %v3646
    %v4671 = vunpack.c.l.b16 %v3647
    %v4672 = vunpack.c.l.b16 %v3648
    %v4673 = vunpack.c.l.b16 %v3649
    %v4674 = vunpack.c.l.b16 %v3650
    %v4675 = vunpack.c.l.b16 %v3651
    %v4676 = vunpack.c.l.b16 %v3652
    %v4677 = vunpack.c.l.b16 %v3653
    %v4678 = vunpack.c.l.b16 %v3654
    %v4679 = vunpack.c.l.b16 %v3655
    %v4680 = vunpack.c.l.b16 %v3656
    %v4681 = vunpack.c.l.b16 %v3657
    %v4682 = vunpack.c.l.b16 %v3658
    %v4683 = vunpack.c.l.b16 %v3659
    %v4684 = vunpack.c.l.b16 %v3660
    %v4685 = vunpack.c.l.b16 %v3661
    %v4686 = vunpack.c.l.b16 %v3662
    %v4687 = vunpack.c.l.b16 %v3663
    %v4688 = vunpack.c.l.b16 %v3664
    %v4689 = vunpack.c.l.b16 %v3665
    %v4690 = vunpack.c.l.b16 %v3666
    %v4691 = vunpack.c.l.b16 %v3667
    %v4692 = vunpack.c.l.b16 %v3668
    %v4693 = vunpack.c.l.b16 %v3669
    %v4694 = vunpack.c.l.b16 %v3670
    %v4695 = vunpack.c.l.b16 %v3671
    %v4696 = vunpack.c.l.b16 %v3672
    %v4697 = vunpack.c.l.b16 %v3673
    %v4698 = vunpack.c.l.b16 %v3674
    %v4699 = vunpack.c.l.b16 %v3675
    %v4700 = vunpack.c.l.b16 %v3676
    %v4701 = vunpack.c.l.b16 %v3677
    %v4702 = vunpack.c.l.b16 %v3678
    %v4703 = vunpack.c.l.b16 %v3679
    %v4704 = vunpack.c.l.b16 %v3680
    %v4705 = vunpack.c.l.b16 %v3681
    %v4706 = vunpack.c.l.b16 %v3682
    %v4707 = vunpack.c.l.b16 %v3683
    %v4708 = vunpack.c.l.b16 %v3684
    %v4709 = vunpack.c.l.b16 %v3685
    %v4710 = vunpack.c.l.b16 %v3686
    %v4711 = vunpack.c.l.b16 %v3687
    %v4712 = vunpack.c.l.b16 %v3688
    %v4713 = vunpack.c.l.b16 %v3689
    %v4714 = vunpack.c.l.b16 %v3690
    %v4715 = vunpack.c.l.b16 %v3691
    %v4716 = vunpack.c.l.b16 %v3692
    %v4717 = vunpack.c.l.b16 %v3693
    %v4718 = vunpack.c.l.b16 %v3694
    %v4719 = vunpack.c.l.b16 %v3695
    %v4720 = vunpack.c.l.b16 %v3696
    %v4721 = vunpack.c.l.b16 %v3697
    %v4722 = vunpack.c.l.b16 %v3698
    %v4723 = vunpack.c.l.b16 %v3699
    %v4724 = vunpack.c.l.b16 %v3700
    %v4725 = vunpack.c.l.b16 %v3701
    %v4726 = vunpack.c.l.b16 %v3702
    %v4727 = vunpack.c.l.b16 %v3703
    %v4728 = vunpack.c.l.b16 %v3704
    %v4729 = vunpack.c.l.b16 %v3705
    %v4730 = vunpack.c.l.b16 %v3706
    %v4731 = vunpack.c.l.b16 %v3707
    %v4732 = vunpack.c.l.b16 %v3708
    %v4733 = vunpack.c.l.b16 %v3709
    %v4734 = vunpack.c.l.b16 %v3710
    %v4735 = vunpack.c.l.b16 %v3711
    %v4736 = vunpack.c.l.b16 %v3712
    %v4737 = vunpack.c.l.b16 %v3713
    %v4738 = vunpack.c.l.b16 %v3714
    %v4739 = vunpack.c.l.b16 %v3715
    %v4740 = vunpack.c.l.b16 %v3716
    %v4741 = vunpack.c.l.b16 %v3717
    %v4742 = vunpack.c.l.b16 %v3718
    %v4743 = vunpack.c.l.b16 %v3719
    %v4744 = vunpack.c.l.b16 %v3720
    %v4745 = vunpack.c.l.b16 %v3721
    %v4746 = vunpack.c.l.b16 %v3722
    %v4747 = vunpack.c.l.b16 %v3723
    %v4748 = vunpack.c.l.b16 %v3724
    %v4749 = vunpack.c.l.b16 %v3725
    %v4750 = vunpack.c.l.b16 %v3726
    %v4751 = vunpack.c.l.b16 %v3727
    %v4752 = vunpack.c.l.b16 %v3728
    %v4753 = vunpack.c.l.b16 %v3729
    %v4754 = vunpack.c.l.b16 %v3730
    %v4755 = vunpack.c.l.b16 %v3731
    %v4756 = vunpack.c.l.b16 %v3732
    %v4757 = vunpack.c.l.b16 %v3733
    %v4758 = vunpack.c.l.b16 %v3734
    %v4759 = vunpack.c.l.b16 %v3735
    %v4760 = vunpack.c.l.b16 %v3736
    %v4761 = vunpack.c.l.b16 %v3737
    %v4762 = vunpack.c.l.b16 %v3738
    %v4763 = vunpack.c.l.b16 %v3739
    %v4764 = vunpack.c.l.b16 %v3740
    %v4765 = vunpack.c.l.b16 %v3741
    %v4766 = vunpack.c.l.b16 %v3742
    %v4767 = vunpack.c.l.b16 %v3743
    %v4768 = vunpack.c.l.b16 %v3744
    %v4769 = vunpack.c.l.b16 %v3745
    %v4770 = vunpack.c.l.b16 %v3746
    %v4771 = vunpack.c.l.b16 %v3747
    %v4772 = vunpack.c.l.b16 %v3748
    %v4773 = vunpack.c.l.b16 %v3749
    %v4774 = vunpack.c.l.b16 %v3750
    %v4775 = vunpack.c.l.b16 %v3751
    %v4776 = vunpack.c.l.b16 %v3752
    %v4777 = vunpack.c.l.b16 %v3753
    %v4778 = vunpack.c.l.b16 %v3754
    %v4779 = vunpack.c.l.b16 %v3755
    %v4780 = vunpack.c.l.b16 %v3756
    %v4781 = vunpack.c.l.b16 %v3757
    %v4782 = vunpack.c.l.b16 %v3758
    %v4783 = vunpack.c.l.b16 %v3759
    %v4784 = vunpack.c.l.b16 %v3760
    %v4785 = vunpack.c.l.b16 %v3761
    %v4786 = vunpack.c.l.b16 %v3762
    %v4787 = vunpack.c.l.b16 %v3763
    %v4788 = vunpack.c.l.b16 %v3764
    %v4789 = vunpack.c.l.b16 %v3765
    %v4790 = vunpack.c.l.b16 %v3766
    %v4791 = vunpack.c.l.b16 %v3767
    %v4792 = vunpack.c.l.b16 %v3768
    %v4793 = vunpack.c.l.b16 %v3769
    %v4794 = vunpack.c.l.b16 %v3770
    %v4795 = vunpack.c.l.b16 %v3771
    %v4796 = vunpack.c.l.b16 %v3772
    %v4797 = vunpack.c.l.b16 %v3773
    %v4798 = vunpack.c.l.b16 %v3774
    %v4799 = vunpack.c.l.b16 %v3775
    %v4800 = vunpack.c.l.b16 %v3776
    %v4801 = vunpack.c.l.b16 %v3777
    %v4802 = vunpack.c.l.b16 %v3778
    %v4803 = vunpack.c.l.b16 %v3779
    %v4804 = vunpack.c.l.b16 %v3780
    %v4805 = vunpack.c.l.b16 %v3781
    %v4806 = vunpack.c.l.b16 %v3782
    %v4807 = vunpack.c.l.b16 %v3783
    %v4808 = vunpack.c.l.b16 %v3784
    %v4809 = vunpack.c.l.b16 %v3785
    %v4810 = vunpack.c.l.b16 %v3786
    %v4811 = vunpack.c.l.b16 %v3787
    %v4812 = vunpack.c.l.b16 %v3788
    %v4813 = vunpack.c.l.b16 %v3789
    %v4814 = vunpack.c.l.b16 %v3790
    %v4815 = vunpack.c.l.b16 %v3791
    %v4816 = vunpack.c.l.b16 %v3792
    %v4817 = vunpack.c.l.b16 %v3793
    %v4818 = vunpack.c.l.b16 %v3794
    %v4819 = vunpack.c.l.b16 %v3795
    %v4820 = vunpack.c.l.b16 %v3796
    %v4821 = vunpack.c.l.b16 %v3797
    %v4822 = vunpack.c.l.b16 %v3798
    %v4823 = vunpack.c.l.b16 %v3799
    %v4824 = vunpack.c.l.b16 %v3800
    %v4825 = vunpack.c.l.b16 %v3801
    %v4826 = vunpack.c.l.b16 %v3802
    %v4827 = vunpack.c.l.b16 %v3803
    %v4828 = vunpack.c.l.b16 %v3804
    %v4829 = vunpack.c.l.b16 %v3805
    %v4830 = vunpack.c.l.b16 %v3806
    %v4831 = vunpack.c.l.b16 %v3807
    %v4832 = vunpack.c.l.b16 %v3808
    %v4833 = vunpack.c.l.b16 %v3809
    %v4834 = vunpack.c.l.b16 %v3810
    %v4835 = vunpack.c.l.b16 %v3811
    %v4836 = vunpack.c.l.b16 %v3812
    %v4837 = vunpack.c.l.b16 %v3813
    %v4838 = vunpack.c.l.b16 %v3814
    %v4839 = vunpack.c.l.b16 %v3815
    %v4840 = vunpack.c.l.b16 %v3816
    %v4841 = vunpack.c.l.b16 %v3817
    %v4842 = vunpack.c.l.b16 %v3818
    %v4843 = vunpack.c.l.b16 %v3819
    %v4844 = vunpack.c.l.b16 %v3820
    %v4845 = vunpack.c.l.b16 %v3821
    %v4846 = vunpack.c.l.b16 %v3822
    %v4847 = vunpack.c.l.b16 %v3823
    %v4848 = vunpack.c.l.b16 %v3824
    %v4849 = vunpack.c.l.b16 %v3825
    %v4850 = vunpack.c.l.b16 %v3826
    %v4851 = vunpack.c.l.b16 %v3827
    %v4852 = vunpack.c.l.b16 %v3828
    %v4853 = vunpack.c.l.b16 %v3829
    %v4854 = vunpack.c.l.b16 %v3830
    %v4855 = vunpack.c.l.b16 %v3831
    %v4856 = vunpack.c.l.b16 %v3832
    %v4857 = vunpack.c.l.b16 %v3833
    %v4858 = vunpack.c.l.b16 %v3834
    %v4859 = vunpack.c.l.b16 %v3835
    %v4860 = vunpack.c.l.b16 %v3836
    %v4861 = vunpack.c.l.b16 %v3837
    %v4862 = vunpack.c.l.b16 %v3838
    %v4863 = vunpack.c.l.b16 %v3839
    %v4864 = vunpack.c.l.b16 %v3840
    %v4865 = vunpack.c.l.b16 %v3841
    %v4866 = vunpack.c.l.b16 %v3842
    %v4867 = vunpack.c.l.b16 %v3843
    %v4868 = vunpack.c.l.b16 %v3844
    %v4869 = vunpack.c.l.b16 %v3845
    %v4870 = vunpack.c.l.b16 %v3846
    %v4871 = vunpack.c.l.b16 %v3847
    %v4872 = vunpack.c.l.b16 %v3848
    %v4873 = vunpack.c.l.b16 %v3849
    %v4874 = vunpack.c.l.b16 %v3850
    %v4875 = vunpack.c.l.b16 %v3851
    %v4876 = vunpack.c.l.b16 %v3852
    %v4877 = vunpack.c.l.b16 %v3853
    %v4878 = vunpack.c.l.b16 %v3854
    %v4879 = vunpack.c.l.b16 %v3855
    %v4880 = vunpack.c.l.b16 %v3856
    %v4881 = vunpack.c.l.b16 %v3857
    %v4882 = vunpack.c.l.b16 %v3858
    %v4883 = vunpack.c.l.b16 %v3859
    %v4884 = vunpack.c.l.b16 %v3860
    %v4885 = vunpack.c.l.b16 %v3861
    %v4886 = vunpack.c.l.b16 %v3862
    %v4887 = vunpack.c.l.b16 %v3863
    %v4888 = vunpack.c.l.b16 %v3864
    %v4889 = vunpack.c.l.b16 %v3865
    %v4890 = vunpack.c.l.b16 %v3866
    %v4891 = vunpack.c.l.b16 %v3867
    %v4892 = vunpack.c.l.b16 %v3868
    %v4893 = vunpack.c.l.b16 %v3869
    %v4894 = vunpack.c.l.b16 %v3870
    %v4895 = vunpack.c.l.b16 %v3871
    %v4896 = vunpack.c.l.b16 %v3872
    %v4897 = vunpack.c.l.b16 %v3873
    %v4898 = vunpack.c.l.b16 %v3874
    %v4899 = vunpack.c.l.b16 %v3875
    %v4900 = vunpack.c.l.b16 %v3876
    %v4901 = vunpack.c.l.b16 %v3877
    %v4902 = vunpack.c.l.b16 %v3878
    %v4903 = vunpack.c.l.b16 %v3879
    %v4904 = vunpack.c.l.b16 %v3880
    %v4905 = vunpack.c.l.b16 %v3881
    %v4906 = vunpack.c.l.b16 %v3882
    %v4907 = vunpack.c.l.b16 %v3883
    %v4908 = vunpack.c.l.b16 %v3884
    %v4909 = vunpack.c.l.b16 %v3885
    %v4910 = vunpack.c.l.b16 %v3886
    %v4911 = vunpack.c.l.b16 %v3887
    %v4912 = vunpack.c.l.b16 %v3888
    %v4913 = vunpack.c.l.b16 %v3889
    %v4914 = vunpack.c.l.b16 %v3890
    %v4915 = vunpack.c.l.b16 %v3891
    %v4916 = vunpack.c.l.b16 %v3892
    %v4917 = vunpack.c.l.b16 %v3893
    %v4918 = vunpack.c.l.b16 %v3894
    %v4919 = vunpack.c.l.b16 %v3895
    %v4920 = vunpack.c.l.b16 %v3896
    %v4921 = vunpack.c.l.b16 %v3897
    %v4922 = vunpack.c.l.b16 %v3898
    %v4923 = vunpack.c.l.b16 %v3899
    %v4924 = vunpack.c.l.b16 %v3900
    %v4925 = vunpack.c.l.b16 %v3901
    %v4926 = vpack.c.b16 %v4415, %v4414
    %v4927 = vpack.c.b16 %v4417, %v4416
    %v4928 = vpack.c.b16 %v4419, %v4418
    %v4929 = vpack.c.b16 %v4421, %v4420
    %v4930 = vpack.c.b16 %v4423, %v4422
    %v4931 = vpack.c.b16 %v4425, %v4424
    %v4932 = vpack.c.b16 %v4427, %v4426
    %v4933 = vpack.c.b16 %v4429, %v4428
    %v4934 = vpack.c.b16 %v4431, %v4430
    %v4935 = vpack.c.b16 %v4433, %v4432
    %v4936 = vpack.c.b16 %v4435, %v4434
    %v4937 = vpack.c.b16 %v4437, %v4436
    %v4938 = vpack.c.b16 %v4439, %v4438
    %v4939 = vpack.c.b16 %v4441, %v4440
    %v4940 = vpack.c.b16 %v4443, %v4442
    %v4941 = vpack.c.b16 %v4445, %v4444
    %v4942 = vpack.c.b16 %v4447, %v4446
    %v4943 = vpack.c.b16 %v4449, %v4448
    %v4944 = vpack.c.b16 %v4451, %v4450
    %v4945 = vpack.c.b16 %v4453, %v4452
    %v4946 = vpack.c.b16 %v4455, %v4454
    %v4947 = vpack.c.b16 %v4457, %v4456
    %v4948 = vpack.c.b16 %v4459, %v4458
    %v4949 = vpack.c.b16 %v4461, %v4460
    %v4950 = vpack.c.b16 %v4463, %v4462
    %v4951 = vpack.c.b16 %v4465, %v4464
    %v4952 = vpack.c.b16 %v4467, %v4466
    %v4953 = vpack.c.b16 %v4469, %v4468
    %v4954 = vpack.c.b16 %v4471, %v4470
    %v4955 = vpack.c.b16 %v4473, %v4472
    %v4956 = vpack.c.b16 %v4475, %v4474
    %v4957 = vpack.c.b16 %v4477, %v4476
    %v4958 = vpack.c.b16 %v4479, %v4478
    %v4959 = vpack.c.b16 %v4481, %v4480
    %v4960 = vpack.c.b16 %v4483, %v4482
    %v4961 = vpack.c.b16 %v4485, %v4484
    %v4962 = vpack.c.b16 %v4487, %v4486
    %v4963 = vpack.c.b16 %v4489, %v4488
    %v4964 = vpack.c.b16 %v4491, %v4490
    %v4965 = vpack.c.b16 %v4493, %v4492
    %v4966 = vpack.c.b16 %v4495, %v4494
    %v4967 = vpack.c.b16 %v4497, %v4496
    %v4968 = vpack.c.b16 %v4499, %v4498
    %v4969 = vpack.c.b16 %v4501, %v4500
    %v4970 = vpack.c.b16 %v4503, %v4502
    %v4971 = vpack.c.b16 %v4505, %v4504
    %v4972 = vpack.c.b16 %v4507, %v4506
    %v4973 = vpack.c.b16 %v4509, %v4508
    %v4974 = vpack.c.b16 %v4511, %v4510
    %v4975 = vpack.c.b16 %v4513, %v4512
    %v4976 = vpack.c.b16 %v4515, %v4514
    %v4977 = vpack.c.b16 %v4517, %v4516
    %v4978 = vpack.c.b16 %v4519, %v4518
    %v4979 = vpack.c.b16 %v4521, %v4520
    %v4980 = vpack.c.b16 %v4523, %v4522
    %v4981 = vpack.c.b16 %v4525, %v4524
    %v4982 = vpack.c.b16 %v4527, %v4526
    %v4983 = vpack.c.b16 %v4529, %v4528
    %v4984 = vpack.c.b16 %v4531, %v4530
    %v4985 = vpack.c.b16 %v4533, %v4532
    %v4986 = vpack.c.b16 %v4535, %v4534
    %v4987 = vpack.c.b16 %v4537, %v4536
    %v4988 = vpack.c.b16 %v4539, %v4538
    %v4989 = vpack.c.b16 %v4541, %v4540
    %v4990 = vpack.c.b16 %v4543, %v4542
    %v4991 = vpack.c.b16 %v4545, %v4544
    %v4992 = vpack.c.b16 %v4547, %v4546
    %v4993 = vpack.c.b16 %v4549, %v4548
    %v4994 = vpack.c.b16 %v4551, %v4550
    %v4995 = vpack.c.b16 %v4553, %v4552
    %v4996 = vpack.c.b16 %v4555, %v4554
    %v4997 = vpack.c.b16 %v4557, %v4556
    %v4998 = vpack.c.b16 %v4559, %v4558
    %v4999 = vpack.c.b16 %v4561, %v4560
    %v5000 = vpack.c.b16 %v4563, %v4562
    %v5001 = vpack.c.b16 %v4565, %v4564
    %v5002 = vpack.c.b16 %v4567, %v4566
    %v5003 = vpack.c.b16 %v4569, %v4568
    %v5004 = vpack.c.b16 %v4571, %v4570
    %v5005 = vpack.c.b16 %v4573, %v4572
    %v5006 = vpack.c.b16 %v4575, %v4574
    %v5007 = vpack.c.b16 %v4577, %v4576
    %v5008 = vpack.c.b16 %v4579, %v4578
    %v5009 = vpack.c.b16 %v4581, %v4580
    %v5010 = vpack.c.b16 %v4583, %v4582
    %v5011 = vpack.c.b16 %v4585, %v4584
    %v5012 = vpack.c.b16 %v4587, %v4586
    %v5013 = vpack.c.b16 %v4589, %v4588
    %v5014 = vpack.c.b16 %v4591, %v4590
    %v5015 = vpack.c.b16 %v4593, %v4592
    %v5016 = vpack.c.b16 %v4595, %v4594
    %v5017 = vpack.c.b16 %v4597, %v4596
    %v5018 = vpack.c.b16 %v4599, %v4598
    %v5019 = vpack.c.b16 %v4601, %v4600
    %v5020 = vpack.c.b16 %v4603, %v4602
    %v5021 = vpack.c.b16 %v4605, %v4604
    %v5022 = vpack.c.b16 %v4607, %v4606
    %v5023 = vpack.c.b16 %v4609, %v4608
    %v5024 = vpack.c.b16 %v4611, %v4610
    %v5025 = vpack.c.b16 %v4613, %v4612
    %v5026 = vpack.c.b16 %v4615, %v4614
    %v5027 = vpack.c.b16 %v4617, %v4616
    %v5028 = vpack.c.b16 %v4619, %v4618
    %v5029 = vpack.c.b16 %v4621, %v4620
    %v5030 = vpack.c.b16 %v4623, %v4622
    %v5031 = vpack.c.b16 %v4625, %v4624
    %v5032 = vpack.c.b16 %v4627, %v4626
    %v5033 = vpack.c.b16 %v4629, %v4628
    %v5034 = vpack.c.b16 %v4631, %v4630
    %v5035 = vpack.c.b16 %v4633, %v4632
    %v5036 = vpack.c.b16 %v4635, %v4634
    %v5037 = vpack.c.b16 %v4637, %v4636
    %v5038 = vpack.c.b16 %v4639, %v4638
    %v5039 = vpack.c.b16 %v4641, %v4640
    %v5040 = vpack.c.b16 %v4643, %v4642
    %v5041 = vpack.c.b16 %v4645, %v4644
    %v5042 = vpack.c.b16 %v4647, %v4646
    %v5043 = vpack.c.b16 %v4649, %v4648
    %v5044 = vpack.c.b16 %v4651, %v4650
    %v5045 = vpack.c.b16 %v4653, %v4652
    %v5046 = vpack.c.b16 %v4655, %v4654
    %v5047 = vpack.c.b16 %v4657, %v4656
    %v5048 = vpack.c.b16 %v4659, %v4658
    %v5049 = vpack.c.b16 %v4661, %v4660
    %v5050 = vpack.c.b16 %v4663, %v4662
    %v5051 = vpack.c.b16 %v4665, %v4664
    %v5052 = vpack.c.b16 %v4667, %v4666
    %v5053 = vpack.c.b16 %v4669, %v4668
    %v5054 = vpack.c.b16 %v4671, %v4670
    %v5055 = vpack.c.b16 %v4673, %v4672
    %v5056 = vpack.c.b16 %v4675, %v4674
    %v5057 = vpack.c.b16 %v4677, %v4676
    %v5058 = vpack.c.b16 %v4679, %v4678
    %v5059 = vpack.c.b16 %v4681, %v4680
    %v5060 = vpack.c.b16 %v4683, %v4682
    %v5061 = vpack.c.b16 %v4685, %v4684
    %v5062 = vpack.c.b16 %v4687, %v4686
    %v5063 = vpack.c.b16 %v4689, %v4688
    %v5064 = vpack.c.b16 %v4691, %v4690
    %v5065 = vpack.c.b16 %v4693, %v4692
    %v5066 = vpack.c.b16 %v4695, %v4694
    %v5067 = vpack.c.b16 %v4697, %v4696
    %v5068 = vpack.c.b16 %v4699, %v4698
    %v5069 = vpack.c.b16 %v4701, %v4700
    %v5070 = vpack.c.b16 %v4703, %v4702
    %v5071 = vpack.c.b16 %v4705, %v4704
    %v5072 = vpack.c.b16 %v4707, %v4706
    %v5073 = vpack.c.b16 %v4709, %v4708
    %v5074 = vpack.c.b16 %v4711, %v4710
    %v5075 = vpack.c.b16 %v4713, %v4712
    %v5076 = vpack.c.b16 %v4715, %v4714
    %v5077 = vpack.c.b16 %v4717, %v4716
    %v5078 = vpack.c.b16 %v4719, %v4718
    %v5079 = vpack.c.b16 %v4721, %v4720
    %v5080 = vpack.c.b16 %v4723, %v4722
    %v5081 = vpack.c.b16 %v4725, %v4724
    %v5082 = vpack.c.b16 %v4727, %v4726
    %v5083 = vpack.c.b16 %v4729, %v4728
    %v5084 = vpack.c.b16 %v4731, %v4730
    %v5085 = vpack.c.b16 %v4733, %v4732
    %v5086 = vpack.c.b16 %v4735, %v4734
    %v5087 = vpack.c.b16 %v4737, %v4736
    %v5088 = vpack.c.b16 %v4739, %v4738
    %v5089 = vpack.c.b16 %v4741, %v4740
    %v5090 = vpack.c.b16 %v4743, %v4742
    %v5091 = vpack.c.b16 %v4745, %v4744
    %v5092 = vpack.c.b16 %v4747, %v4746
    %v5093 = vpack.c.b16 %v4749, %v4748
    %v5094 = vpack.c.b16 %v4751, %v4750
    %v5095 = vpack.c.b16 %v4753, %v4752
    %v5096 = vpack.c.b16 %v4755, %v4754
    %v5097 = vpack.c.b16 %v4757, %v4756
    %v5098 = vpack.c.b16 %v4759, %v4758
    %v5099 = vpack.c.b16 %v4761, %v4760
    %v5100 = vpack.c.b16 %v4763, %v4762
    %v5101 = vpack.c.b16 %v4765, %v4764
    %v5102 = vpack.c.b16 %v4767, %v4766
    %v5103 = vpack.c.b16 %v4769, %v4768
    %v5104 = vpack.c.b16 %v4771, %v4770
    %v5105 = vpack.c.b16 %v4773, %v4772
    %v5106 = vpack.c.b16 %v4775, %v4774
    %v5107 = vpack.c.b16 %v4777, %v4776
    %v5108 = vpack.c.b16 %v4779, %v4778
    %v5109 = vpack.c.b16 %v4781, %v4780
    %v5110 = vpack.c.b16 %v4783, %v4782
    %v5111 = vpack.c.b16 %v4785, %v4784
    %v5112 = vpack.c.b16 %v4787, %v4786
    %v5113 = vpack.c.b16 %v4789, %v4788
    %v5114 = vpack.c.b16 %v4791, %v4790
    %v5115 = vpack.c.b16 %v4793, %v4792
    %v5116 = vpack.c.b16 %v4795, %v4794
    %v5117 = vpack.c.b16 %v4797, %v4796
    %v5118 = vpack.c.b16 %v4799, %v4798
    %v5119 = vpack.c.b16 %v4801, %v4800
    %v5120 = vpack.c.b16 %v4803, %v4802
    %v5121 = vpack.c.b16 %v4805, %v4804
    %v5122 = vpack.c.b16 %v4807, %v4806
    %v5123 = vpack.c.b16 %v4809, %v4808
    %v5124 = vpack.c.b16 %v4811, %v4810
    %v5125 = vpack.c.b16 %v4813, %v4812
    %v5126 = vpack.c.b16 %v4815, %v4814
    %v5127 = vpack.c.b16 %v4817, %v4816
    %v5128 = vpack.c.b16 %v4819, %v4818
    %v5129 = vpack.c.b16 %v4821, %v4820
    %v5130 = vpack.c.b16 %v4823, %v4822
    %v5131 = vpack.c.b16 %v4825, %v4824
    %v5132 = vpack.c.b16 %v4827, %v4826
    %v5133 = vpack.c.b16 %v4829, %v4828
    %v5134 = vpack.c.b16 %v4831, %v4830
    %v5135 = vpack.c.b16 %v4833, %v4832
    %v5136 = vpack.c.b16 %v4835, %v4834
    %v5137 = vpack.c.b16 %v4837, %v4836
    %v5138 = vpack.c.b16 %v4839, %v4838
    %v5139 = vpack.c.b16 %v4841, %v4840
    %v5140 = vpack.c.b16 %v4843, %v4842
    %v5141 = vpack.c.b16 %v4845, %v4844
    %v5142 = vpack.c.b16 %v4847, %v4846
    %v5143 = vpack.c.b16 %v4849, %v4848
    %v5144 = vpack.c.b16 %v4851, %v4850
    %v5145 = vpack.c.b16 %v4853, %v4852
    %v5146 = vpack.c.b16 %v4855, %v4854
    %v5147 = vpack.c.b16 %v4857, %v4856
    %v5148 = vpack.c.b16 %v4859, %v4858
    %v5149 = vpack.c.b16 %v4861, %v4860
    %v5150 = vpack.c.b16 %v4863, %v4862
    %v5151 = vpack.c.b16 %v4865, %v4864
    %v5152 = vpack.c.b16 %v4867, %v4866
    %v5153 = vpack.c.b16 %v4869, %v4868
    %v5154 = vpack.c.b16 %v4871, %v4870
    %v5155 = vpack.c.b16 %v4873, %v4872
    %v5156 = vpack.c.b16 %v4875, %v4874
    %v5157 = vpack.c.b16 %v4877, %v4876
    %v5158 = vpack.c.b16 %v4879, %v4878
    %v5159 = vpack.c.b16 %v4881, %v4880
    %v5160 = vpack.c.b16 %v4883, %v4882
    %v5161 = vpack.c.b16 %v4885, %v4884
    %v5162 = vpack.c.b16 %v4887, %v4886
    %v5163 = vpack.c.b16 %v4889, %v4888
    %v5164 = vpack.c.b16 %v4891, %v4890
    %v5165 = vpack.c.b16 %v4893, %v4892
    %v5166 = vpack.c.b16 %v4895, %v4894
    %v5167 = vpack.c.b16 %v4897, %v4896
    %v5168 = vpack.c.b16 %v4899, %v4898
    %v5169 = vpack.c.b16 %v4901, %v4900
    %v5170 = vpack.c.b16 %v4903, %v4902
    %v5171 = vpack.c.b16 %v4905, %v4904
    %v5172 = vpack.c.b16 %v4907, %v4906
    %v5173 = vpack.c.b16 %v4909, %v4908
    %v5174 = vpack.c.b16 %v4911, %v4910
    %v5175 = vpack.c.b16 %v4913, %v4912
    %v5176 = vpack.c.b16 %v4915, %v4914
    %v5177 = vpack.c.b16 %v4917, %v4916
    %v5178 = vpack.c.b16 %v4919, %v4918
    %v5179 = vpack.c.b16 %v4921, %v4920
    %v5180 = vpack.c.b16 %v4923, %v4922
    %v5181 = vpack.c.b16 %v4925, %v4924
    %5438 = vmatprep.subr.bf16.mxu0 0
    %5439 = vmatpush1.bf16.msra.mxu0 %v4926
    %5440 = vmatprep.subr.bf16.mxu0 0
    %5441 = vmatpush1.bf16.msra.mxu0 %v4927
    %5442 = vmatprep.subr.bf16.mxu0 0
    %5443 = vmatpush1.bf16.msra.mxu0 %v4928
    %5444 = vmatprep.subr.bf16.mxu0 0
    %5445 = vmatpush1.bf16.msra.mxu0 %v4929
    %5446 = vmatprep.subr.bf16.mxu0 0
    %5447 = vmatpush1.bf16.msra.mxu0 %v4930
    %5448 = vmatprep.subr.bf16.mxu0 0
    %5449 = vmatpush1.bf16.msra.mxu0 %v4931
    %5450 = vmatprep.subr.bf16.mxu0 0
    %5451 = vmatpush1.bf16.msra.mxu0 %v4932
    %5452 = vmatprep.subr.bf16.mxu0 0
    %5453 = vmatpush1.bf16.msra.mxu0 %v4933
    %5454 = vmatprep.subr.bf16.mxu0 0
    %5455 = vmatpush1.bf16.msra.mxu0 %v4934
    %5456 = vmatprep.subr.bf16.mxu0 0
    %5457 = vmatpush1.bf16.msra.mxu0 %v4935
    %5458 = vmatprep.subr.bf16.mxu0 0
    %5459 = vmatpush1.bf16.msra.mxu0 %v4936
    %5460 = vmatprep.subr.bf16.mxu0 0
    %5461 = vmatpush1.bf16.msra.mxu0 %v4937
    %5462 = vmatprep.subr.bf16.mxu0 0
    %5463 = vmatpush1.bf16.msra.mxu0 %v4938
    %5464 = vmatprep.subr.bf16.mxu0 0
    %5465 = vmatpush1.bf16.msra.mxu0 %v4939
    %5466 = vmatprep.subr.bf16.mxu0 0
    %5467 = vmatpush1.bf16.msra.mxu0 %v4940
    %5468 = vmatprep.subr.bf16.mxu0 0
    %5469 = vmatpush1.bf16.msra.mxu0 %v4941
    %5470 = vmatprep.mubr.bf16.mxu0 %v3327
    %5471 = vmatmul.mubr.bf16.gmra.mrb[0].mxu0 %v3326
    %v5472 = vpop.f32.mrb[0].mxu0
    %v5473 = vadd.f32 0.0, %v5472
    %v5474 = vpop.f32.mrb[0].mxu0
    %v5475 = vpop.f32.mrb[0].mxu0
    %v5476 = vadd.f32 0.0, %v5475
    %v5477 = vpop.f32.mrb[0].mxu0
    %5478 = vmatprep.mubr.bf16.mxu0 %v3359
    %5479 = vmatmul.mubr.bf16.gmra.mrb[0].mxu0 %v3358
    %v5480 = vpop.f32.mrb[0].mxu0
    %v5481 = vadd.f32 0.0, %v5480
    %v5482 = vpop.f32.mrb[0].mxu0
    %v5483 = vpop.f32.mrb[0].mxu0
    %v5484 = vadd.f32 0.0, %v5483
    %v5485 = vpop.f32.mrb[0].mxu0
    %5486 = vdwg.mxu0
    %5487 = vmatprep.subr.bf16.mxu0 0
    %5488 = vmatpush1.bf16.msra.mxu0 %v4942
    %5489 = vmatprep.subr.bf16.mxu0 0
    %5490 = vmatpush1.bf16.msra.mxu0 %v4943
    %5491 = vmatprep.subr.bf16.mxu0 0
    %5492 = vmatpush1.bf16.msra.mxu0 %v4944
    %5493 = vmatprep.subr.bf16.mxu0 0
    %5494 = vmatpush1.bf16.msra.mxu0 %v4945
    %5495 = vmatprep.subr.bf16.mxu0 0
    %5496 = vmatpush1.bf16.msra.mxu0 %v4946
    %5497 = vmatprep.subr.bf16.mxu0 0
    %5498 = vmatpush1.bf16.msra.mxu0 %v4947
    %5499 = vmatprep.subr.bf16.mxu0 0
    %5500 = vmatpush1.bf16.msra.mxu0 %v4948
    %5501 = vmatprep.subr.bf16.mxu0 0
    %5502 = vmatpush1.bf16.msra.mxu0 %v4949
    %5503 = vmatprep.subr.bf16.mxu0 0
    %5504 = vmatpush1.bf16.msra.mxu0 %v4950
    %5505 = vmatprep.subr.bf16.mxu0 0
    %5506 = vmatpush1.bf16.msra.mxu0 %v4951
    %5507 = vmatprep.subr.bf16.mxu0 0
    %5508 = vmatpush1.bf16.msra.mxu0 %v4952
    %5509 = vmatprep.subr.bf16.mxu0 0
    %5510 = vmatpush1.bf16.msra.mxu0 %v4953
    %5511 = vmatprep.subr.bf16.mxu0 0
    %5512 = vmatpush1.bf16.msra.mxu0 %v4954
    %5513 = vmatprep.subr.bf16.mxu0 0
    %5514 = vmatpush1.bf16.msra.mxu0 %v4955
    %5515 = vmatprep.subr.bf16.mxu0 0
    %5516 = vmatpush1.bf16.msra.mxu0 %v4956
    %5517 = vmatprep.subr.bf16.mxu0 0
    %5518 = vmatpush1.bf16.msra.mxu0 %v4957
    %5519 = vmatprep.mubr.bf16.mxu0 %v3329
    %5520 = vmatmul.mubr.bf16.gmra.mrb[0].mxu0 %v3328
    %v5521 = vpop.f32.mrb[0].mxu0
    %v5522 = vadd.f32 %v5473, %v5521
    %v5523 = vpop.f32.mrb[0].mxu0
    %v5524 = vpop.f32.mrb[0].mxu0
    %v5525 = vadd.f32 %v5476, %v5524
    %v5526 = vpop.f32.mrb[0].mxu0
    %5527 = vmatprep.mubr.bf16.mxu0 %v3361
    %5528 = vmatmul.mubr.bf16.gmra.mrb[0].mxu0 %v3360
    %v5529 = vpop.f32.mrb[0].mxu0
    %v5530 = vadd.f32 %v5481, %v5529
    %v5531 = vpop.f32.mrb[0].mxu0
    %v5532 = vpop.f32.mrb[0].mxu0
    %v5533 = vadd.f32 %v5484, %v5532
    %v5534 = vpop.f32.mrb[0].mxu0
    %5535 = vdwg.mxu0
    %5536 = vmatprep.subr.bf16.mxu0 0
    %5537 = vmatpush1.bf16.msra.mxu0 %v4958
    %5538 = vmatprep.subr.bf16.mxu0 0
    %5539 = vmatpush1.bf16.msra.mxu0 %v4959
    %5540 = vmatprep.subr.bf16.mxu0 0
    %5541 = vmatpush1.bf16.msra.mxu0 %v4960
    %5542 = vmatprep.subr.bf16.mxu0 0
    %5543 = vmatpush1.bf16.msra.mxu0 %v4961
    %5544 = vmatprep.subr.bf16.mxu0 0
    %5545 = vmatpush1.bf16.msra.mxu0 %v4962
    %5546 = vmatprep.subr.bf16.mxu0 0
    %5547 = vmatpush1.bf16.msra.mxu0 %v4963
    %5548 = vmatprep.subr.bf16.mxu0 0
    %5549 = vmatpush1.bf16.msra.mxu0 %v4964
    %5550 = vmatprep.subr.bf16.mxu0 0
    %5551 = vmatpush1.bf16.msra.mxu0 %v4965
    %5552 = vmatprep.subr.bf16.mxu0 0
    %5553 = vmatpush1.bf16.msra.mxu0 %v4966
    %5554 = vmatprep.subr.bf16.mxu0 0
    %5555 = vmatpush1.bf16.msra.mxu0 %v4967
    %5556 = vmatprep.subr.bf16.mxu0 0
    %5557 = vmatpush1.bf16.msra.mxu0 %v4968
    %5558 = vmatprep.subr.bf16.mxu0 0
    %5559 = vmatpush1.bf16.msra.mxu0 %v4969
    %5560 = vmatprep.subr.bf16.mxu0 0
    %5561 = vmatpush1.bf16.msra.mxu0 %v4970
    %5562 = vmatprep.subr.bf16.mxu0 0
    %5563 = vmatpush1.bf16.msra.mxu0 %v4971
    %5564 = vmatprep.subr.bf16.mxu0 0
    %5565 = vmatpush1.bf16.msra.mxu0 %v4972
    %5566 = vmatprep.subr.bf16.mxu0 0
    %5567 = vmatpush1.bf16.msra.mxu0 %v4973
    %5568 = vmatprep.mubr.bf16.mxu0 %v3331
    %5569 = vmatmul.mubr.bf16.gmra.mrb[0].mxu0 %v3330
    %v5570 = vpop.f32.mrb[0].mxu0
    %v5571 = vadd.f32 %v5522, %v5570
    %v5572 = vpop.f32.mrb[0].mxu0
    %v5573 = vpop.f32.mrb[0].mxu0
    %v5574 = vadd.f32 %v5525, %v5573
    %v5575 = vpop.f32.mrb[0].mxu0
    %5576 = vmatprep.mubr.bf16.mxu0 %v3363
    %5577 = vmatmul.mubr.bf16.gmra.mrb[0].mxu0 %v3362
    %v5578 = vpop.f32.mrb[0].mxu0
    %v5579 = vadd.f32 %v5530, %v5578
    %v5580 = vpop.f32.mrb[0].mxu0
    %v5581 = vpop.f32.mrb[0].mxu0
    %v5582 = vadd.f32 %v5533, %v5581
    %v5583 = vpop.f32.mrb[0].mxu0
    %5584 = vdwg.mxu0
    %5585 = vmatprep.subr.bf16.mxu0 0
    %5586 = vmatpush1.bf16.msra.mxu0 %v4974
    %5587 = vmatprep.subr.bf16.mxu0 0
    %5588 = vmatpush1.bf16.msra.mxu0 %v4975
    %5589 = vmatprep.subr.bf16.mxu0 0
    %5590 = vmatpush1.bf16.msra.mxu0 %v4976
    %5591 = vmatprep.subr.bf16.mxu0 0
    %5592 = vmatpush1.bf16.msra.mxu0 %v4977
    %5593 = vmatprep.subr.bf16.mxu0 0
    %5594 = vmatpush1.bf16.msra.mxu0 %v4978
    %5595 = vmatprep.subr.bf16.mxu0 0
    %5596 = vmatpush1.bf16.msra.mxu0 %v4979
    %5597 = vmatprep.subr.bf16.mxu0 0
    %5598 = vmatpush1.bf16.msra.mxu0 %v4980
    %5599 = vmatprep.subr.bf16.mxu0 0
    %5600 = vmatpush1.bf16.msra.mxu0 %v4981
    %5601 = vmatprep.subr.bf16.mxu0 0
    %5602 = vmatpush1.bf16.msra.mxu0 %v4982
    %5603 = vmatprep.subr.bf16.mxu0 0
    %5604 = vmatpush1.bf16.msra.mxu0 %v4983
    %5605 = vmatprep.subr.bf16.mxu0 0
    %5606 = vmatpush1.bf16.msra.mxu0 %v4984
    %5607 = vmatprep.subr.bf16.mxu0 0
    %5608 = vmatpush1.bf16.msra.mxu0 %v4985
    %5609 = vmatprep.subr.bf16.mxu0 0
    %5610 = vmatpush1.bf16.msra.mxu0 %v4986
    %5611 = vmatprep.subr.bf16.mxu0 0
    %5612 = vmatpush1.bf16.msra.mxu0 %v4987
    %5613 = vmatprep.subr.bf16.mxu0 0
    %5614 = vmatpush1.bf16.msra.mxu0 %v4988
    %5615 = vmatprep.subr.bf16.mxu0 0
    %5616 = vmatpush1.bf16.msra.mxu0 %v4989
    %5617 = vmatprep.mubr.bf16.mxu0 %v3333
    %5618 = vmatmul.mubr.bf16.gmra.mrb[0].mxu0 %v3332
    %v5619 = vpop.f32.mrb[0].mxu0
    %v5620 = vadd.f32 %v5571, %v5619
    %v5621 = vpop.f32.mrb[0].mxu0
    %v5622 = vpop.f32.mrb[0].mxu0
    %v5623 = vadd.f32 %v5574, %v5622
    %v5624 = vpop.f32.mrb[0].mxu0
    %5625 = vmatprep.mubr.bf16.mxu0 %v3365
    %5626 = vmatmul.mubr.bf16.gmra.mrb[0].mxu0 %v3364
    %v5627 = vpop.f32.mrb[0].mxu0
    %v5628 = vadd.f32 %v5579, %v5627
    %v5629 = vpop.f32.mrb[0].mxu0
    %v5630 = vpop.f32.mrb[0].mxu0
    %v5631 = vadd.f32 %v5582, %v5630
    %v5632 = vpop.f32.mrb[0].mxu0
    %5633 = vdwg.mxu0
    %5634 = vmatprep.subr.bf16.mxu0 0
    %5635 = vmatpush1.bf16.msra.mxu0 %v4990
    %5636 = vmatprep.subr.bf16.mxu0 0
    %5637 = vmatpush1.bf16.msra.mxu0 %v4991
    %5638 = vmatprep.subr.bf16.mxu0 0
    %5639 = vmatpush1.bf16.msra.mxu0 %v4992
    %5640 = vmatprep.subr.bf16.mxu0 0
    %5641 = vmatpush1.bf16.msra.mxu0 %v4993
    %5642 = vmatprep.subr.bf16.mxu0 0
    %5643 = vmatpush1.bf16.msra.mxu0 %v4994
    %5644 = vmatprep.subr.bf16.mxu0 0
    %5645 = vmatpush1.bf16.msra.mxu0 %v4995
    %5646 = vmatprep.subr.bf16.mxu0 0
    %5647 = vmatpush1.bf16.msra.mxu0 %v4996
    %5648 = vmatprep.subr.bf16.mxu0 0
    %5649 = vmatpush1.bf16.msra.mxu0 %v4997
    %5650 = vmatprep.subr.bf16.mxu0 0
    %5651 = vmatpush1.bf16.msra.mxu0 %v4998
    %5652 = vmatprep.subr.bf16.mxu0 0
    %5653 = vmatpush1.bf16.msra.mxu0 %v4999
    %5654 = vmatprep.subr.bf16.mxu0 0
    %5655 = vmatpush1.bf16.msra.mxu0 %v5000
    %5656 = vmatprep.subr.bf16.mxu0 0
    %5657 = vmatpush1.bf16.msra.mxu0 %v5001
    %5658 = vmatprep.subr.bf16.mxu0 0
    %5659 = vmatpush1.bf16.msra.mxu0 %v5002
    %5660 = vmatprep.subr.bf16.mxu0 0
    %5661 = vmatpush1.bf16.msra.mxu0 %v5003
    %5662 = vmatprep.subr.bf16.mxu0 0
    %5663 = vmatpush1.bf16.msra.mxu0 %v5004
    %5664 = vmatprep.subr.bf16.mxu0 0
    %5665 = vmatpush1.bf16.msra.mxu0 %v5005
    %5666 = vmatprep.mubr.bf16.mxu0 %v3335
    %5667 = vmatmul.mubr.bf16.gmra.mrb[0].mxu0 %v3334
    %v5668 = vpop.f32.mrb[0].mxu0
    %v5669 = vadd.f32 %v5620, %v5668
    %v5670 = vpop.f32.mrb[0].mxu0
    %v5671 = vpop.f32.mrb[0].mxu0
    %v5672 = vadd.f32 %v5623, %v5671
    %v5673 = vpop.f32.mrb[0].mxu0
    %5674 = vmatprep.mubr.bf16.mxu0 %v3367
    %5675 = vmatmul.mubr.bf16.gmra.mrb[0].mxu0 %v3366
    %v5676 = vpop.f32.mrb[0].mxu0
    %v5677 = vadd.f32 %v5628, %v5676
    %v5678 = vpop.f32.mrb[0].mxu0
    %v5679 = vpop.f32.mrb[0].mxu0
    %v5680 = vadd.f32 %v5631, %v5679
    %v5681 = vpop.f32.mrb[0].mxu0
    %5682 = vdwg.mxu0
    %5683 = vmatprep.subr.bf16.mxu0 0
    %5684 = vmatpush1.bf16.msra.mxu0 %v5006
    %5685 = vmatprep.subr.bf16.mxu0 0
    %5686 = vmatpush1.bf16.msra.mxu0 %v5007
    %5687 = vmatprep.subr.bf16.mxu0 0
    %5688 = vmatpush1.bf16.msra.mxu0 %v5008
    %5689 = vmatprep.subr.bf16.mxu0 0
    %5690 = vmatpush1.bf16.msra.mxu0 %v5009
    %5691 = vmatprep.subr.bf16.mxu0 0
    %5692 = vmatpush1.bf16.msra.mxu0 %v5010
    %5693 = vmatprep.subr.bf16.mxu0 0
    %5694 = vmatpush1.bf16.msra.mxu0 %v5011
    %5695 = vmatprep.subr.bf16.mxu0 0
    %5696 = vmatpush1.bf16.msra.mxu0 %v5012
    %5697 = vmatprep.subr.bf16.mxu0 0
    %5698 = vmatpush1.bf16.msra.mxu0 %v5013
    %5699 = vmatprep.subr.bf16.mxu0 0
    %5700 = vmatpush1.bf16.msra.mxu0 %v5014
    %5701 = vmatprep.subr.bf16.mxu0 0
    %5702 = vmatpush1.bf16.msra.mxu0 %v5015
    %5703 = vmatprep.subr.bf16.mxu0 0
    %5704 = vmatpush1.bf16.msra.mxu0 %v5016
    %5705 = vmatprep.subr.bf16.mxu0 0
    %5706 = vmatpush1.bf16.msra.mxu0 %v5017
    %5707 = vmatprep.subr.bf16.mxu0 0
    %5708 = vmatpush1.bf16.msra.mxu0 %v5018
    %5709 = vmatprep.subr.bf16.mxu0 0
    %5710 = vmatpush1.bf16.msra.mxu0 %v5019
    %5711 = vmatprep.subr.bf16.mxu0 0
    %5712 = vmatpush1.bf16.msra.mxu0 %v5020
    %5713 = vmatprep.subr.bf16.mxu0 0
    %5714 = vmatpush1.bf16.msra.mxu0 %v5021
    %5715 = vmatprep.mubr.bf16.mxu0 %v3337
    %5716 = vmatmul.mubr.bf16.gmra.mrb[0].mxu0 %v3336
    %v5717 = vpop.f32.mrb[0].mxu0
    %v5718 = vadd.f32 %v5669, %v5717
    %v5719 = vpop.f32.mrb[0].mxu0
    %v5720 = vpop.f32.mrb[0].mxu0
    %v5721 = vadd.f32 %v5672, %v5720
    %v5722 = vpop.f32.mrb[0].mxu0
    %5723 = vmatprep.mubr.bf16.mxu0 %v3369
    %5724 = vmatmul.mubr.bf16.gmra.mrb[0].mxu0 %v3368
    %v5725 = vpop.f32.mrb[0].mxu0
    %v5726 = vadd.f32 %v5677, %v5725
    %v5727 = vpop.f32.mrb[0].mxu0
    %v5728 = vpop.f32.mrb[0].mxu0
    %v5729 = vadd.f32 %v5680, %v5728
    %v5730 = vpop.f32.mrb[0].mxu0
    %5731 = vdwg.mxu0
    %5732 = vmatprep.subr.bf16.mxu0 0
    %5733 = vmatpush1.bf16.msra.mxu0 %v5022
    %5734 = vmatprep.subr.bf16.mxu0 0
    %5735 = vmatpush1.bf16.msra.mxu0 %v5023
    %5736 = vmatprep.subr.bf16.mxu0 0
    %5737 = vmatpush1.bf16.msra.mxu0 %v5024
    %5738 = vmatprep.subr.bf16.mxu0 0
    %5739 = vmatpush1.bf16.msra.mxu0 %v5025
    %5740 = vmatprep.subr.bf16.mxu0 0
    %5741 = vmatpush1.bf16.msra.mxu0 %v5026
    %5742 = vmatprep.subr.bf16.mxu0 0
    %5743 = vmatpush1.bf16.msra.mxu0 %v5027
    %5744 = vmatprep.subr.bf16.mxu0 0
    %5745 = vmatpush1.bf16.msra.mxu0 %v5028
    %5746 = vmatprep.subr.bf16.mxu0 0
    %5747 = vmatpush1.bf16.msra.mxu0 %v5029
    %5748 = vmatprep.subr.bf16.mxu0 0
    %5749 = vmatpush1.bf16.msra.mxu0 %v5030
    %5750 = vmatprep.subr.bf16.mxu0 0
    %5751 = vmatpush1.bf16.msra.mxu0 %v5031
    %5752 = vmatprep.subr.bf16.mxu0 0
    %5753 = vmatpush1.bf16.msra.mxu0 %v5032
    %5754 = vmatprep.subr.bf16.mxu0 0
    %5755 = vmatpush1.bf16.msra.mxu0 %v5033
    %5756 = vmatprep.subr.bf16.mxu0 0
    %5757 = vmatpush1.bf16.msra.mxu0 %v5034
    %5758 = vmatprep.subr.bf16.mxu0 0
    %5759 = vmatpush1.bf16.msra.mxu0 %v5035
    %5760 = vmatprep.subr.bf16.mxu0 0
    %5761 = vmatpush1.bf16.msra.mxu0 %v5036
    %5762 = vmatprep.subr.bf16.mxu0 0
    %5763 = vmatpush1.bf16.msra.mxu0 %v5037
    %5764 = vmatprep.mubr.bf16.mxu0 %v3339
    %5765 = vmatmul.mubr.bf16.gmra.mrb[0].mxu0 %v3338
    %v5766 = vpop.f32.mrb[0].mxu0
    %v5767 = vadd.f32 %v5718, %v5766
    %v5768 = vpop.f32.mrb[0].mxu0
    %v5769 = vpop.f32.mrb[0].mxu0
    %v5770 = vadd.f32 %v5721, %v5769
    %v5771 = vpop.f32.mrb[0].mxu0
    %5772 = vmatprep.mubr.bf16.mxu0 %v3371
    %5773 = vmatmul.mubr.bf16.gmra.mrb[0].mxu0 %v3370
    %v5774 = vpop.f32.mrb[0].mxu0
    %v5775 = vadd.f32 %v5726, %v5774
    %v5776 = vpop.f32.mrb[0].mxu0
    %v5777 = vpop.f32.mrb[0].mxu0
    %v5778 = vadd.f32 %v5729, %v5777
    %v5779 = vpop.f32.mrb[0].mxu0
    %5780 = vdwg.mxu0
    %5781 = vmatprep.subr.bf16.mxu0 0
    %5782 = vmatpush1.bf16.msra.mxu0 %v5038
    %5783 = vmatprep.subr.bf16.mxu0 0
    %5784 = vmatpush1.bf16.msra.mxu0 %v5039
    %5785 = vmatprep.subr.bf16.mxu0 0
    %5786 = vmatpush1.bf16.msra.mxu0 %v5040
    %5787 = vmatprep.subr.bf16.mxu0 0
    %5788 = vmatpush1.bf16.msra.mxu0 %v5041
    %5789 = vmatprep.subr.bf16.mxu0 0
    %5790 = vmatpush1.bf16.msra.mxu0 %v5042
    %5791 = vmatprep.subr.bf16.mxu0 0
    %5792 = vmatpush1.bf16.msra.mxu0 %v5043
    %5793 = vmatprep.subr.bf16.mxu0 0
    %5794 = vmatpush1.bf16.msra.mxu0 %v5044
    %5795 = vmatprep.subr.bf16.mxu0 0
    %5796 = vmatpush1.bf16.msra.mxu0 %v5045
    %5797 = vmatprep.subr.bf16.mxu0 0
    %5798 = vmatpush1.bf16.msra.mxu0 %v5046
    %5799 = vmatprep.subr.bf16.mxu0 0
    %5800 = vmatpush1.bf16.msra.mxu0 %v5047
    %5801 = vmatprep.subr.bf16.mxu0 0
    %5802 = vmatpush1.bf16.msra.mxu0 %v5048
    %5803 = vmatprep.subr.bf16.mxu0 0
    %5804 = vmatpush1.bf16.msra.mxu0 %v5049
    %5805 = vmatprep.subr.bf16.mxu0 0
    %5806 = vmatpush1.bf16.msra.mxu0 %v5050
    %5807 = vmatprep.subr.bf16.mxu0 0
    %5808 = vmatpush1.bf16.msra.mxu0 %v5051
    %5809 = vmatprep.subr.bf16.mxu0 0
    %5810 = vmatpush1.bf16.msra.mxu0 %v5052
    %5811 = vmatprep.subr.bf16.mxu0 0
    %5812 = vmatpush1.bf16.msra.mxu0 %v5053
    %5813 = vmatprep.mubr.bf16.mxu0 %v3341
    %5814 = vmatmul.mubr.bf16.gmra.mrb[0].mxu0 %v3340
    %v5815 = vpop.f32.mrb[0].mxu0
    %v5816 = vadd.f32 %v5767, %v5815
    %v5817 = vpop.f32.mrb[0].mxu0
    %v5818 = vpop.f32.mrb[0].mxu0
    %v5819 = vadd.f32 %v5770, %v5818
    %v5820 = vpop.f32.mrb[0].mxu0
    %5821 = vmatprep.mubr.bf16.mxu0 %v3373
    %5822 = vmatmul.mubr.bf16.gmra.mrb[0].mxu0 %v3372
    %v5823 = vpop.f32.mrb[0].mxu0
    %v5824 = vadd.f32 %v5775, %v5823
    %v5825 = vpop.f32.mrb[0].mxu0
    %v5826 = vpop.f32.mrb[0].mxu0
    %v5827 = vadd.f32 %v5778, %v5826
    %v5828 = vpop.f32.mrb[0].mxu0
    %5829 = vdwg.mxu0
    %5830 = vmatprep.subr.bf16.mxu0 0
    %5831 = vmatpush1.bf16.msra.mxu0 %v5054
    %5832 = vmatprep.subr.bf16.mxu0 0
    %5833 = vmatpush1.bf16.msra.mxu0 %v5055
    %5834 = vmatprep.subr.bf16.mxu0 0
    %5835 = vmatpush1.bf16.msra.mxu0 %v5056
    %5836 = vmatprep.subr.bf16.mxu0 0
    %5837 = vmatpush1.bf16.msra.mxu0 %v5057
    %5838 = vmatprep.subr.bf16.mxu0 0
    %5839 = vmatpush1.bf16.msra.mxu0 %v5058
    %5840 = vmatprep.subr.bf16.mxu0 0
    %5841 = vmatpush1.bf16.msra.mxu0 %v5059
    %5842 = vmatprep.subr.bf16.mxu0 0
    %5843 = vmatpush1.bf16.msra.mxu0 %v5060
    %5844 = vmatprep.subr.bf16.mxu0 0
    %5845 = vmatpush1.bf16.msra.mxu0 %v5061
    %5846 = vmatprep.subr.bf16.mxu0 0
    %5847 = vmatpush1.bf16.msra.mxu0 %v5062
    %5848 = vmatprep.subr.bf16.mxu0 0
    %5849 = vmatpush1.bf16.msra.mxu0 %v5063
    %5850 = vmatprep.subr.bf16.mxu0 0
    %5851 = vmatpush1.bf16.msra.mxu0 %v5064
    %5852 = vmatprep.subr.bf16.mxu0 0
    %5853 = vmatpush1.bf16.msra.mxu0 %v5065
    %5854 = vmatprep.subr.bf16.mxu0 0
    %5855 = vmatpush1.bf16.msra.mxu0 %v5066
    %5856 = vmatprep.subr.bf16.mxu0 0
    %5857 = vmatpush1.bf16.msra.mxu0 %v5067
    %5858 = vmatprep.subr.bf16.mxu0 0
    %5859 = vmatpush1.bf16.msra.mxu0 %v5068
    %5860 = vmatprep.subr.bf16.mxu0 0
    %5861 = vmatpush1.bf16.msra.mxu0 %v5069
    %5862 = vmatprep.mubr.bf16.mxu0 %v3343
    %5863 = vmatmul.mubr.bf16.gmra.mrb[0].mxu0 %v3342
    %v5864 = vpop.f32.mrb[0].mxu0
    %v5865 = vadd.f32 %v5816, %v5864
    %v5866 = vpop.f32.mrb[0].mxu0
    %v5867 = vpop.f32.mrb[0].mxu0
    %v5868 = vadd.f32 %v5819, %v5867
    %v5869 = vpop.f32.mrb[0].mxu0
    %5870 = vmatprep.mubr.bf16.mxu0 %v3375
    %5871 = vmatmul.mubr.bf16.gmra.mrb[0].mxu0 %v3374
    %v5872 = vpop.f32.mrb[0].mxu0
    %v5873 = vadd.f32 %v5824, %v5872
    %v5874 = vpop.f32.mrb[0].mxu0
    %v5875 = vpop.f32.mrb[0].mxu0
    %v5876 = vadd.f32 %v5827, %v5875
    %v5877 = vpop.f32.mrb[0].mxu0
    %5878 = vdwg.mxu0
    %5879 = vmatprep.subr.bf16.mxu0 0
    %5880 = vmatpush1.bf16.msra.mxu0 %v5070
    %5881 = vmatprep.subr.bf16.mxu0 0
    %5882 = vmatpush1.bf16.msra.mxu0 %v5071
    %5883 = vmatprep.subr.bf16.mxu0 0
    %5884 = vmatpush1.bf16.msra.mxu0 %v5072
    %5885 = vmatprep.subr.bf16.mxu0 0
    %5886 = vmatpush1.bf16.msra.mxu0 %v5073
    %5887 = vmatprep.subr.bf16.mxu0 0
    %5888 = vmatpush1.bf16.msra.mxu0 %v5074
    %5889 = vmatprep.subr.bf16.mxu0 0
    %5890 = vmatpush1.bf16.msra.mxu0 %v5075
    %5891 = vmatprep.subr.bf16.mxu0 0
    %5892 = vmatpush1.bf16.msra.mxu0 %v5076
    %5893 = vmatprep.subr.bf16.mxu0 0
    %5894 = vmatpush1.bf16.msra.mxu0 %v5077
    %5895 = vmatprep.subr.bf16.mxu0 0
    %5896 = vmatpush1.bf16.msra.mxu0 %v5078
    %5897 = vmatprep.subr.bf16.mxu0 0
    %5898 = vmatpush1.bf16.msra.mxu0 %v5079
    %5899 = vmatprep.subr.bf16.mxu0 0
    %5900 = vmatpush1.bf16.msra.mxu0 %v5080
    %5901 = vmatprep.subr.bf16.mxu0 0
    %5902 = vmatpush1.bf16.msra.mxu0 %v5081
    %5903 = vmatprep.subr.bf16.mxu0 0
    %5904 = vmatpush1.bf16.msra.mxu0 %v5082
    %5905 = vmatprep.subr.bf16.mxu0 0
    %5906 = vmatpush1.bf16.msra.mxu0 %v5083
    %5907 = vmatprep.subr.bf16.mxu0 0
    %5908 = vmatpush1.bf16.msra.mxu0 %v5084
    %5909 = vmatprep.subr.bf16.mxu0 0
    %5910 = vmatpush1.bf16.msra.mxu0 %v5085
    %5911 = vmatprep.mubr.bf16.mxu0 %v3345
    %5912 = vmatmul.mubr.bf16.gmra.mrb[0].mxu0 %v3344
    %v5913 = vpop.f32.mrb[0].mxu0
    %v5914 = vadd.f32 %v5865, %v5913
    %v5915 = vpop.f32.mrb[0].mxu0
    %v5916 = vpop.f32.mrb[0].mxu0
    %v5917 = vadd.f32 %v5868, %v5916
    %v5918 = vpop.f32.mrb[0].mxu0
    %5919 = vmatprep.mubr.bf16.mxu0 %v3377
    %5920 = vmatmul.mubr.bf16.gmra.mrb[0].mxu0 %v3376
    %v5921 = vpop.f32.mrb[0].mxu0
    %v5922 = vadd.f32 %v5873, %v5921
    %v5923 = vpop.f32.mrb[0].mxu0
    %v5924 = vpop.f32.mrb[0].mxu0
    %v5925 = vadd.f32 %v5876, %v5924
    %v5926 = vpop.f32.mrb[0].mxu0
    %5927 = vdwg.mxu0
    %5928 = vmatprep.subr.bf16.mxu0 0
    %5929 = vmatpush1.bf16.msra.mxu0 %v5086
    %5930 = vmatprep.subr.bf16.mxu0 0
    %5931 = vmatpush1.bf16.msra.mxu0 %v5087
    %5932 = vmatprep.subr.bf16.mxu0 0
    %5933 = vmatpush1.bf16.msra.mxu0 %v5088
    %5934 = vmatprep.subr.bf16.mxu0 0
    %5935 = vmatpush1.bf16.msra.mxu0 %v5089
    %5936 = vmatprep.subr.bf16.mxu0 0
    %5937 = vmatpush1.bf16.msra.mxu0 %v5090
    %5938 = vmatprep.subr.bf16.mxu0 0
    %5939 = vmatpush1.bf16.msra.mxu0 %v5091
    %5940 = vmatprep.subr.bf16.mxu0 0
    %5941 = vmatpush1.bf16.msra.mxu0 %v5092
    %5942 = vmatprep.subr.bf16.mxu0 0
    %5943 = vmatpush1.bf16.msra.mxu0 %v5093
    %5944 = vmatprep.subr.bf16.mxu0 0
    %5945 = vmatpush1.bf16.msra.mxu0 %v5094
    %5946 = vmatprep.subr.bf16.mxu0 0
    %5947 = vmatpush1.bf16.msra.mxu0 %v5095
    %5948 = vmatprep.subr.bf16.mxu0 0
    %5949 = vmatpush1.bf16.msra.mxu0 %v5096
    %5950 = vmatprep.subr.bf16.mxu0 0
    %5951 = vmatpush1.bf16.msra.mxu0 %v5097
    %5952 = vmatprep.subr.bf16.mxu0 0
    %5953 = vmatpush1.bf16.msra.mxu0 %v5098
    %5954 = vmatprep.subr.bf16.mxu0 0
    %5955 = vmatpush1.bf16.msra.mxu0 %v5099
    %5956 = vmatprep.subr.bf16.mxu0 0
    %5957 = vmatpush1.bf16.msra.mxu0 %v5100
    %5958 = vmatprep.subr.bf16.mxu0 0
    %5959 = vmatpush1.bf16.msra.mxu0 %v5101
    %5960 = vmatprep.mubr.bf16.mxu0 %v3347
    %5961 = vmatmul.mubr.bf16.gmra.mrb[0].mxu0 %v3346
    %v5962 = vpop.f32.mrb[0].mxu0
    %v5963 = vadd.f32 %v5914, %v5962
    %v5964 = vpop.f32.mrb[0].mxu0
    %v5965 = vpop.f32.mrb[0].mxu0
    %v5966 = vadd.f32 %v5917, %v5965
    %v5967 = vpop.f32.mrb[0].mxu0
    %5968 = vmatprep.mubr.bf16.mxu0 %v3379
    %5969 = vmatmul.mubr.bf16.gmra.mrb[0].mxu0 %v3378
    %v5970 = vpop.f32.mrb[0].mxu0
    %v5971 = vadd.f32 %v5922, %v5970
    %v5972 = vpop.f32.mrb[0].mxu0
    %v5973 = vpop.f32.mrb[0].mxu0
    %v5974 = vadd.f32 %v5925, %v5973
    %v5975 = vpop.f32.mrb[0].mxu0
    %5976 = vdwg.mxu0
    %5977 = vmatprep.subr.bf16.mxu0 0
    %5978 = vmatpush1.bf16.msra.mxu0 %v5102
    %5979 = vmatprep.subr.bf16.mxu0 0
    %5980 = vmatpush1.bf16.msra.mxu0 %v5103
    %5981 = vmatprep.subr.bf16.mxu0 0
    %5982 = vmatpush1.bf16.msra.mxu0 %v5104
    %5983 = vmatprep.subr.bf16.mxu0 0
    %5984 = vmatpush1.bf16.msra.mxu0 %v5105
    %5985 = vmatprep.subr.bf16.mxu0 0
    %5986 = vmatpush1.bf16.msra.mxu0 %v5106
    %5987 = vmatprep.subr.bf16.mxu0 0
    %5988 = vmatpush1.bf16.msra.mxu0 %v5107
    %5989 = vmatprep.subr.bf16.mxu0 0
    %5990 = vmatpush1.bf16.msra.mxu0 %v5108
    %5991 = vmatprep.subr.bf16.mxu0 0
    %5992 = vmatpush1.bf16.msra.mxu0 %v5109
    %5993 = vmatprep.subr.bf16.mxu0 0
    %5994 = vmatpush1.bf16.msra.mxu0 %v5110
    %5995 = vmatprep.subr.bf16.mxu0 0
    %5996 = vmatpush1.bf16.msra.mxu0 %v5111
    %5997 = vmatprep.subr.bf16.mxu0 0
    %5998 = vmatpush1.bf16.msra.mxu0 %v5112
    %5999 = vmatprep.subr.bf16.mxu0 0
    %6000 = vmatpush1.bf16.msra.mxu0 %v5113
    %6001 = vmatprep.subr.bf16.mxu0 0
    %6002 = vmatpush1.bf16.msra.mxu0 %v5114
    %6003 = vmatprep.subr.bf16.mxu0 0
    %6004 = vmatpush1.bf16.msra.mxu0 %v5115
    %6005 = vmatprep.subr.bf16.mxu0 0
    %6006 = vmatpush1.bf16.msra.mxu0 %v5116
    %6007 = vmatprep.subr.bf16.mxu0 0
    %6008 = vmatpush1.bf16.msra.mxu0 %v5117
    %6009 = vmatprep.mubr.bf16.mxu0 %v3349
    %6010 = vmatmul.mubr.bf16.gmra.mrb[0].mxu0 %v3348
    %v6011 = vpop.f32.mrb[0].mxu0
    %v6012 = vadd.f32 %v5963, %v6011
    %v6013 = vpop.f32.mrb[0].mxu0
    %v6014 = vpop.f32.mrb[0].mxu0
    %v6015 = vadd.f32 %v5966, %v6014
    %v6016 = vpop.f32.mrb[0].mxu0
    %6017 = vmatprep.mubr.bf16.mxu0 %v3381
    %6018 = vmatmul.mubr.bf16.gmra.mrb[0].mxu0 %v3380
    %v6019 = vpop.f32.mrb[0].mxu0
    %v6020 = vadd.f32 %v5971, %v6019
    %v6021 = vpop.f32.mrb[0].mxu0
    %v6022 = vpop.f32.mrb[0].mxu0
    %v6023 = vadd.f32 %v5974, %v6022
    %v6024 = vpop.f32.mrb[0].mxu0
    %6025 = vdwg.mxu0
    %6026 = vmatprep.subr.bf16.mxu0 0
    %6027 = vmatpush1.bf16.msra.mxu0 %v5118
    %6028 = vmatprep.subr.bf16.mxu0 0
    %6029 = vmatpush1.bf16.msra.mxu0 %v5119
    %6030 = vmatprep.subr.bf16.mxu0 0
    %6031 = vmatpush1.bf16.msra.mxu0 %v5120
    %6032 = vmatprep.subr.bf16.mxu0 0
    %6033 = vmatpush1.bf16.msra.mxu0 %v5121
    %6034 = vmatprep.subr.bf16.mxu0 0
    %6035 = vmatpush1.bf16.msra.mxu0 %v5122
    %6036 = vmatprep.subr.bf16.mxu0 0
    %6037 = vmatpush1.bf16.msra.mxu0 %v5123
    %6038 = vmatprep.subr.bf16.mxu0 0
    %6039 = vmatpush1.bf16.msra.mxu0 %v5124
    %6040 = vmatprep.subr.bf16.mxu0 0
    %6041 = vmatpush1.bf16.msra.mxu0 %v5125
    %6042 = vmatprep.subr.bf16.mxu0 0
    %6043 = vmatpush1.bf16.msra.mxu0 %v5126
    %6044 = vmatprep.subr.bf16.mxu0 0
    %6045 = vmatpush1.bf16.msra.mxu0 %v5127
    %6046 = vmatprep.subr.bf16.mxu0 0
    %6047 = vmatpush1.bf16.msra.mxu0 %v5128
    %6048 = vmatprep.subr.bf16.mxu0 0
    %6049 = vmatpush1.bf16.msra.mxu0 %v5129
    %6050 = vmatprep.subr.bf16.mxu0 0
    %6051 = vmatpush1.bf16.msra.mxu0 %v5130
    %6052 = vmatprep.subr.bf16.mxu0 0
    %6053 = vmatpush1.bf16.msra.mxu0 %v5131
    %6054 = vmatprep.subr.bf16.mxu0 0
    %6055 = vmatpush1.bf16.msra.mxu0 %v5132
    %6056 = vmatprep.subr.bf16.mxu0 0
    %6057 = vmatpush1.bf16.msra.mxu0 %v5133
    %6058 = vmatprep.mubr.bf16.mxu0 %v3351
    %6059 = vmatmul.mubr.bf16.gmra.mrb[0].mxu0 %v3350
    %v6060 = vpop.f32.mrb[0].mxu0
    %v6061 = vadd.f32 %v6012, %v6060
    %v6062 = vpop.f32.mrb[0].mxu0
    %v6063 = vpop.f32.mrb[0].mxu0
    %v6064 = vadd.f32 %v6015, %v6063
    %v6065 = vpop.f32.mrb[0].mxu0
    %6066 = vmatprep.mubr.bf16.mxu0 %v3383
    %6067 = vmatmul.mubr.bf16.gmra.mrb[0].mxu0 %v3382
    %v6068 = vpop.f32.mrb[0].mxu0
    %v6069 = vadd.f32 %v6020, %v6068
    %v6070 = vpop.f32.mrb[0].mxu0
    %v6071 = vpop.f32.mrb[0].mxu0
    %v6072 = vadd.f32 %v6023, %v6071
    %v6073 = vpop.f32.mrb[0].mxu0
    %6074 = vdwg.mxu0
    %6075 = vmatprep.subr.bf16.mxu0 0
    %6076 = vmatpush1.bf16.msra.mxu0 %v5134
    %6077 = vmatprep.subr.bf16.mxu0 0
    %6078 = vmatpush1.bf16.msra.mxu0 %v5135
    %6079 = vmatprep.subr.bf16.mxu0 0
    %6080 = vmatpush1.bf16.msra.mxu0 %v5136
    %6081 = vmatprep.subr.bf16.mxu0 0
    %6082 = vmatpush1.bf16.msra.mxu0 %v5137
    %6083 = vmatprep.subr.bf16.mxu0 0
    %6084 = vmatpush1.bf16.msra.mxu0 %v5138
    %6085 = vmatprep.subr.bf16.mxu0 0
    %6086 = vmatpush1.bf16.msra.mxu0 %v5139
    %6087 = vmatprep.subr.bf16.mxu0 0
    %6088 = vmatpush1.bf16.msra.mxu0 %v5140
    %6089 = vmatprep.subr.bf16.mxu0 0
    %6090 = vmatpush1.bf16.msra.mxu0 %v5141
    %6091 = vmatprep.subr.bf16.mxu0 0
    %6092 = vmatpush1.bf16.msra.mxu0 %v5142
    %6093 = vmatprep.subr.bf16.mxu0 0
    %6094 = vmatpush1.bf16.msra.mxu0 %v5143
    %6095 = vmatprep.subr.bf16.mxu0 0
    %6096 = vmatpush1.bf16.msra.mxu0 %v5144
    %6097 = vmatprep.subr.bf16.mxu0 0
    %6098 = vmatpush1.bf16.msra.mxu0 %v5145
    %6099 = vmatprep.subr.bf16.mxu0 0
    %6100 = vmatpush1.bf16.msra.mxu0 %v5146
    %6101 = vmatprep.subr.bf16.mxu0 0
    %6102 = vmatpush1.bf16.msra.mxu0 %v5147
    %6103 = vmatprep.subr.bf16.mxu0 0
    %6104 = vmatpush1.bf16.msra.mxu0 %v5148
    %6105 = vmatprep.subr.bf16.mxu0 0
    %6106 = vmatpush1.bf16.msra.mxu0 %v5149
    %6107 = vmatprep.mubr.bf16.mxu0 %v3353
    %6108 = vmatmul.mubr.bf16.gmra.mrb[0].mxu0 %v3352
    %v6109 = vpop.f32.mrb[0].mxu0
    %v6110 = vadd.f32 %v6061, %v6109
    %v6111 = vpop.f32.mrb[0].mxu0
    %v6112 = vpop.f32.mrb[0].mxu0
    %v6113 = vadd.f32 %v6064, %v6112
    %v6114 = vpop.f32.mrb[0].mxu0
    %6115 = vmatprep.mubr.bf16.mxu0 %v3385
    %6116 = vmatmul.mubr.bf16.gmra.mrb[0].mxu0 %v3384
    %v6117 = vpop.f32.mrb[0].mxu0
    %v6118 = vadd.f32 %v6069, %v6117
    %v6119 = vpop.f32.mrb[0].mxu0
    %v6120 = vpop.f32.mrb[0].mxu0
    %v6121 = vadd.f32 %v6072, %v6120
    %v6122 = vpop.f32.mrb[0].mxu0
    %6123 = vdwg.mxu0
    %6124 = vmatprep.subr.bf16.mxu0 0
    %6125 = vmatpush1.bf16.msra.mxu0 %v5150
    %6126 = vmatprep.subr.bf16.mxu0 0
    %6127 = vmatpush1.bf16.msra.mxu0 %v5151
    %6128 = vmatprep.subr.bf16.mxu0 0
    %6129 = vmatpush1.bf16.msra.mxu0 %v5152
    %6130 = vmatprep.subr.bf16.mxu0 0
    %6131 = vmatpush1.bf16.msra.mxu0 %v5153
    %6132 = vmatprep.subr.bf16.mxu0 0
    %6133 = vmatpush1.bf16.msra.mxu0 %v5154
    %6134 = vmatprep.subr.bf16.mxu0 0
    %6135 = vmatpush1.bf16.msra.mxu0 %v5155
    %6136 = vmatprep.subr.bf16.mxu0 0
    %6137 = vmatpush1.bf16.msra.mxu0 %v5156
    %6138 = vmatprep.subr.bf16.mxu0 0
    %6139 = vmatpush1.bf16.msra.mxu0 %v5157
    %6140 = vmatprep.subr.bf16.mxu0 0
    %6141 = vmatpush1.bf16.msra.mxu0 %v5158
    %6142 = vmatprep.subr.bf16.mxu0 0
    %6143 = vmatpush1.bf16.msra.mxu0 %v5159
    %6144 = vmatprep.subr.bf16.mxu0 0
    %6145 = vmatpush1.bf16.msra.mxu0 %v5160
    %6146 = vmatprep.subr.bf16.mxu0 0
    %6147 = vmatpush1.bf16.msra.mxu0 %v5161
    %6148 = vmatprep.subr.bf16.mxu0 0
    %6149 = vmatpush1.bf16.msra.mxu0 %v5162
    %6150 = vmatprep.subr.bf16.mxu0 0
    %6151 = vmatpush1.bf16.msra.mxu0 %v5163
    %6152 = vmatprep.subr.bf16.mxu0 0
    %6153 = vmatpush1.bf16.msra.mxu0 %v5164
    %6154 = vmatprep.subr.bf16.mxu0 0
    %6155 = vmatpush1.bf16.msra.mxu0 %v5165
    %6156 = vmatprep.mubr.bf16.mxu0 %v3355
    %6157 = vmatmul.mubr.bf16.gmra.mrb[0].mxu0 %v3354
    %v6158 = vpop.f32.mrb[0].mxu0
    %v6159 = vadd.f32 %v6110, %v6158
    %v6160 = vpop.f32.mrb[0].mxu0
    %v6161 = vpop.f32.mrb[0].mxu0
    %v6162 = vadd.f32 %v6113, %v6161
    %v6163 = vpop.f32.mrb[0].mxu0
    %6164 = vmatprep.mubr.bf16.mxu0 %v3387
    %6165 = vmatmul.mubr.bf16.gmra.mrb[0].mxu0 %v3386
    %v6166 = vpop.f32.mrb[0].mxu0
    %v6167 = vadd.f32 %v6118, %v6166
    %v6168 = vpop.f32.mrb[0].mxu0
    %v6169 = vpop.f32.mrb[0].mxu0
    %v6170 = vadd.f32 %v6121, %v6169
    %v6171 = vpop.f32.mrb[0].mxu0
    %6172 = vdwg.mxu0
    %6173 = vmatprep.subr.bf16.mxu0 0
    %6174 = vmatpush1.bf16.msra.mxu0 %v5166
    %6175 = vmatprep.subr.bf16.mxu0 0
    %6176 = vmatpush1.bf16.msra.mxu0 %v5167
    %6177 = vmatprep.subr.bf16.mxu0 0
    %6178 = vmatpush1.bf16.msra.mxu0 %v5168
    %6179 = vmatprep.subr.bf16.mxu0 0
    %6180 = vmatpush1.bf16.msra.mxu0 %v5169
    %6181 = vmatprep.subr.bf16.mxu0 0
    %6182 = vmatpush1.bf16.msra.mxu0 %v5170
    %6183 = vmatprep.subr.bf16.mxu0 0
    %6184 = vmatpush1.bf16.msra.mxu0 %v5171
    %6185 = vmatprep.subr.bf16.mxu0 0
    %6186 = vmatpush1.bf16.msra.mxu0 %v5172
    %6187 = vmatprep.subr.bf16.mxu0 0
    %6188 = vmatpush1.bf16.msra.mxu0 %v5173
    %6189 = vmatprep.subr.bf16.mxu0 0
    %6190 = vmatpush1.bf16.msra.mxu0 %v5174
    %6191 = vmatprep.subr.bf16.mxu0 0
    %6192 = vmatpush1.bf16.msra.mxu0 %v5175
    %6193 = vmatprep.subr.bf16.mxu0 0
    %6194 = vmatpush1.bf16.msra.mxu0 %v5176
    %6195 = vmatprep.subr.bf16.mxu0 0
    %6196 = vmatpush1.bf16.msra.mxu0 %v5177
    %6197 = vmatprep.subr.bf16.mxu0 0
    %6198 = vmatpush1.bf16.msra.mxu0 %v5178
    %6199 = vmatprep.subr.bf16.mxu0 0
    %6200 = vmatpush1.bf16.msra.mxu0 %v5179
    %6201 = vmatprep.subr.bf16.mxu0 0
    %6202 = vmatpush1.bf16.msra.mxu0 %v5180
    %6203 = vmatprep.subr.bf16.mxu0 0
    %6204 = vmatpush1.bf16.msra.mxu0 %v5181
    %6205 = vmatprep.mubr.bf16.mxu0 %v3357
    %6206 = vmatmul.mubr.bf16.gmra.mrb[0].mxu0 %v3356
    %v6207 = vpop.f32.mrb[0].mxu0
    %v6208 = vadd.f32 %v6159, %v6207
    %v6209 = vpop.f32.mrb[0].mxu0
    %v6210 = vpop.f32.mrb[0].mxu0
    %v6211 = vadd.f32 %v6162, %v6210
    %v6212 = vpop.f32.mrb[0].mxu0
    %6213 = vmatprep.mubr.bf16.mxu0 %v3389
    %6214 = vmatmul.mubr.bf16.gmra.mrb[0].mxu0 %v3388
    %v6215 = vpop.f32.mrb[0].mxu0
    %v6216 = vadd.f32 %v6167, %v6215
    %v6217 = vpop.f32.mrb[0].mxu0
    %v6218 = vpop.f32.mrb[0].mxu0
    %v6219 = vadd.f32 %v6170, %v6218
    %v6220 = vpop.f32.mrb[0].mxu0
    %6221 = vdwg.mxu0
    %v6222 = vadd.f32 %v3322, %v6208
    %v6223 = vadd.f32 %v3323, %v6211
    %v6224 = vadd.f32 %v3324, %v6216
    %v6225 = vadd.f32 %v3325, %v6219
    %6226 = vst [vmem:[#allocation3] sm:$0xff] %v6222
    %6227 = vst [vmem:[#allocation3 + $0x8] sm:$0xff] %v6223
    %6228 = vst [vmem:[#allocation3 + $0x10] sm:$0xff] %v6224
    %6229 = vst [vmem:[#allocation3 + $0x18] sm:$0xff] %v6225
    // Predicated region
    $region42: #{features_model_forward.1} parent=1 // pred_check
      %p6230 = pneg %p56
    $region43: #{features_model_forward.1} parent=1 // pred_check_branch
      %6232 = sbr.rel (%p6230) target = $region45
    $region44: #{features_model_forward.1} parent=1 // pred_region
      %v6233 = vld [vmem:[#allocation3] sm:$0xff]
      %v6234 = vld [vmem:[#allocation3 + $0x8] sm:$0xff]
      %v6235 = vld [vmem:[#allocation3 + $0x10] sm:$0xff]
      %v6236 = vld [vmem:[#allocation3 + $0x18] sm:$0xff]
      %v6237 = vld [vmem:[%s6] sm:$0x1]
      %v6239 = vlaneseq
      %v6240 = vshrl.u32 %v6239, 7
      %v6241 = vsub.s32 0, %v6240
      %v6242 = vrot.slane %v6237, %v6241
      %v6244 = vadd.f32 %v6233, %v6242
      %v6245 = vadd.f32 %v6234, %v6242
      %v6246 = vadd.f32 %v6235, %v6242
      %v6247 = vadd.f32 %v6236, %v6242
      %6248 = vst [vmem:[#allocation9] sm:$0xff] %v6244
      %6249 = vst [vmem:[#allocation9 + $0x8] sm:$0xff] %v6245
      %6250 = vst [vmem:[#allocation9 + $0x10] sm:$0xff] %v6246
      %6251 = vst [vmem:[#allocation9 + $0x18] sm:$0xff] %v6247
    $region45: #{features_model_forward.1} parent=1 // pred_fallthru
      _
    // Predicated region
    $region46: #{features_model_forward.1} parent=1 // pred_check
      _
    $region47: #{features_model_forward.1} parent=1 // pred_check_branch
      %6253 = sbr.rel (0) target = $region49
    $region48: #{features_model_forward.1} parent=1 // pred_region
      %s6255 = ssub.s32 512, 512
      %6256 = vsyncadd [#allocation6], %s6255
      %s6257 = sshll.u32 [#allocation9], 4
      %s6258 = int_to_ptr.vmem [resolvable:$true] %s6257
      %6263 = dma.vmem_to_hbm [thread:$0]  %s6258, 512, %s7, [#allocation6], 128, 128, 8
    $region49: #{features_model_forward.1} parent=1 // pred_fallthru
      _
    // Predicated region
    $region50: #{features_model_forward.1} parent=1 // pred_check
      _
    $region51: #{features_model_forward.1} parent=1 // pred_check_branch
      %6265 = sbr.rel (0) target = $region53
    $region52: #{features_model_forward.1} parent=1 // pred_region
      %6266 = dma.done [#allocation6], 512
    $region53: #{features_model_forward.1} parent=1 // pred_fallthru
      _
    %6267 = vsyncpa [#allocation5], 1
    %6268 = vsyncpa [#allocation8], 1
    %6269 = vsyncpa [#allocation6], 1

</llo_original>
